<compile_context>
chip_gen: v5e
topology: v5e:2x2
jax: 0.10.0
libtpu: 0.0.40
codegen_flags: <defaults>
</compile_context>

<pallas_src>
import jax
import jax.numpy as jnp
from jax.experimental import pallas as pl
from jax.experimental.pallas import tpu as pltpu


# ----------------------------------------------------------------------------
# Generation-specific knobs
# ----------------------------------------------------------------------------
def _device_kind():
    try:
        return jax.devices()[0].device_kind.lower()
    except Exception:
        return ""


_KIND = _device_kind()
# v5e MXU is 4x 128x128: tn > 128 only inflates the f32 accumulator tile.
_TN_MAX = 128 if ("v5 lite" in _KIND or "v5e" in _KIND) else 256
# v7x has 64 MiB physical VMEM per TensorCore; v5e/v6e have 128 MiB.
_VMEM_LIMIT = (48 << 20) if "v7" in _KIND else (64 << 20)


def _pick_tn(cout, tn_max):
    """Output-channel tile: full Cout if it fits, else a 128-multiple divisor."""
    if cout <= tn_max:
        return cout
    t = (tn_max // 128) * 128
    while t >= 128:
        if cout % t == 0:
            return t
        t -= 128
    return cout


# ----------------------------------------------------------------------------
# Pallas kernel 1: fused multi-tap shift-matmul + folded-BN bias + ReLU
#   (used for all stride-1 3x3 convs and for the temporal (3,1,1) convs)
# ----------------------------------------------------------------------------
def _make_shift_conv_kernel(tap_offsets, m_rows, cin, mask_w):
    """For tap t the lhs is the length-`m_rows` slab of the flattened padded
    activation at static offset tap_offsets[t]; the rhs is weight rows
    [t*cin, (t+1)*cin).  When `mask_w` is set the taps are the 9 (kh, kw)
    offsets of a 3x3 stride-1 conv on rows of width `mask_w`, and the
    left/right taps zero the rows that wrapped across an image row."""
    n_taps = len(tap_offsets)

    def kernel(x_ref, w_ref, b_ref, o_ref):
        tn = o_ref.shape[-1]
        if mask_w is not None:
            col = jax.lax.broadcasted_iota(jnp.int32, (m_rows, 1), 0) % mask_w
            not_first = col != 0
            not_last = col != (mask_w - 1)
        acc = jnp.zeros((m_rows, tn), jnp.float32)
        for t in range(n_taps):
            slab = x_ref[0, pl.ds(tap_offsets[t], m_rows), :]
            if mask_w is not None:
                kw = t % 3
                if kw == 0:
                    slab = jnp.where(not_first, slab, 0)
                elif kw == 2:
                    slab = jnp.where(not_last, slab, 0)
            wt = w_ref[pl.ds(t * cin, cin), :]
            acc = acc + jnp.dot(slab, wt, preferred_element_type=jnp.float32)
        o_ref[0] = jnp.maximum(acc + b_ref[...], 0.0).astype(o_ref.dtype)

    return kernel


def _shift_conv(xf, w, bias, *, taps, m, cin, mask_w, tn_max):
    """xf: (N, L, Cin) bf16 padded+flattened activations; w: (T*Cin, Cout) bf16
    with BN scale folded in; bias: (Cout,) f32.  Returns (N, m, Cout) bf16."""
    N, L, C = xf.shape
    K, Cout = w.shape
    tn = _pick_tn(Cout, tn_max)
    bias2 = bias.reshape(1, Cout).astype(jnp.float32)
    kernel = _make_shift_conv_kernel(taps, m, cin, mask_w)

    cost = pl.CostEstimate(
        flops=2 * N * m * K * Cout,
        transcendentals=0,
        bytes_accessed=(N * L * C + K * Cout * (Cout // tn) + N * m * Cout) * 2,
    )

    return pl.pallas_call(
        kernel,
        out_shape=jax.ShapeDtypeStruct((N, m, Cout), jnp.bfloat16),
        grid_spec=pltpu.PrefetchScalarGridSpec(
            num_scalar_prefetch=0,
            # image axis innermost -> weight / bias blocks stay resident.
            grid=(Cout // tn, N),
            in_specs=[
                pl.BlockSpec((1, L, C), lambda j, n: (n, 0, 0)),
                pl.BlockSpec((K, tn), lambda j, n: (0, j)),
                pl.BlockSpec((1, tn), lambda j, n: (0, j)),
            ],
            out_specs=pl.BlockSpec((1, m, tn), lambda j, n: (n, 0, j)),
        ),
        compiler_params=pltpu.CompilerParams(
            dimension_semantics=("parallel", "parallel"),
            vmem_limit_bytes=_VMEM_LIMIT,
        ),
        cost_estimate=cost,
    )(xf, w, bias2)


# ----------------------------------------------------------------------------
# Pallas kernel 2: fused 3x3 stride-2 conv on a phase-split padded image
# ----------------------------------------------------------------------------
def _make_s2_conv_kernel(ho, wo, cin):
    def kernel(x_ref, w_ref, b_ref, o_ref):
        tn = o_ref.shape[-1]
        for r in range(ho):
            acc = jnp.zeros((wo, tn), jnp.float32)
            t = 0
            for kh in range(3):
                for kw in range(3):
                    row = ((kh % 2) * 2 + (kw % 2)) * (ho + 1) + r + kh // 2
                    slab = x_ref[0, row, pl.ds(kw // 2, wo), :]
                    wt = w_ref[pl.ds(t * cin, cin), :]
                    acc = acc + jnp.dot(slab, wt,
                                        preferred_element_type=jnp.float32)
                    t += 1
            o_ref[0, r] = jnp.maximum(acc + b_ref[...], 0.0).astype(o_ref.dtype)

    return kernel


def _s2_conv(xph, w, bias, *, ho, wo, cin, tn_max):
    """xph: (N, 4*(ho+1), wo+1, cin) phase-split padded image."""
    N = xph.shape[0]
    K, Cout = w.shape
    tn = _pick_tn(Cout, tn_max)
    bias2 = bias.reshape(1, Cout).astype(jnp.float32)
    kernel = _make_s2_conv_kernel(ho, wo, cin)

    return pl.pallas_call(
        kernel,
        out_shape=jax.ShapeDtypeStruct((N, ho, wo, Cout), jnp.bfloat16),
        grid_spec=pltpu.PrefetchScalarGridSpec(
            num_scalar_prefetch=0,
            grid=(Cout // tn, N),
            in_specs=[
                pl.BlockSpec((1, 4 * (ho + 1), wo + 1, cin),
                             lambda j, n: (n, 0, 0, 0)),
                pl.BlockSpec((K, tn), lambda j, n: (0, j)),
                pl.BlockSpec((1, tn), lambda j, n: (0, j)),
            ],
            out_specs=pl.BlockSpec((1, ho, wo, tn), lambda j, n: (n, 0, 0, j)),
        ),
        compiler_params=pltpu.CompilerParams(
            dimension_semantics=("parallel", "parallel"),
            vmem_limit_bytes=_VMEM_LIMIT,
        ),
    )(xph, w, bias2)


# ----------------------------------------------------------------------------
# Pallas kernel 3: max-reduction over the sequence (temporal) axis
# ----------------------------------------------------------------------------
def _tmax_kernel(x_ref, o_ref):
    @pl.when(pl.program_id(1) == 0)
    def _():
        o_ref[...] = x_ref[0]

    @pl.when(pl.program_id(1) > 0)
    def _():
        o_ref[...] = jnp.maximum(o_ref[...], x_ref[0])


def _tmax_call(xr):
    batch, seq, rows, lanes = xr.shape
    return pl.pallas_call(
        _tmax_kernel,
        out_shape=jax.ShapeDtypeStruct((batch, rows, lanes), xr.dtype),
        grid_spec=pltpu.PrefetchScalarGridSpec(
            num_scalar_prefetch=0,
            grid=(batch, seq),
            in_specs=[pl.BlockSpec((1, 1, rows, lanes),
                                   lambda b, s: (b, s, 0, 0))],
            out_specs=pl.BlockSpec((1, rows, lanes), lambda b, s: (b, 0, 0)),
        ),
        compiler_params=pltpu.CompilerParams(
            dimension_semantics=("parallel", "arbitrary"),
            vmem_limit_bytes=_VMEM_LIMIT,
        ),
    )(xr)


def temporal_max(x, batch, seq):
    """x: (batch*seq, H, W, C) -> max over seq -> (batch, H, W, C)."""
    BS, H, W, C = x.shape
    assert BS == batch * seq
    hwc = H * W * C
    if hwc % 128 == 0:
        xr = x.reshape(batch, seq, hwc // 128, 128)          # free reshape
        return _tmax_call(xr).reshape(batch, H, W, C)
    # Lane-dense fallback: pad channels to a multiple of 128 so stores are
    # never masked partial (vst.msk) stores.
    cp = ((C + 127) // 128) * 128
    xpd = jnp.pad(x, ((0, 0), (0, 0), (0, 0), (0, cp - C)))
    xr = xpd.reshape(batch, seq, H * W * cp // 128, 128)
    out = _tmax_call(xr).reshape(batch, H, W, cp)
    return out[..., :C]


# ----------------------------------------------------------------------------
# Conv wrappers (host-side prep is at most one ~1.1x padded copy per layer)
# ----------------------------------------------------------------------------
def conv3x3_bn_relu(x, w, bias, stride=1, *, tn_max=_TN_MAX):
    """x: (N, H, W, Cin) NHWC bf16; w: (9*Cin, Cout) bf16 with folded BN scale,
    rows ordered (kh, kw, cin)-major; pad=1, kernel 3x3."""
    N, H, W, C = x.shape
    Cout = w.shape[1]
    if stride == 1:
        xp = jnp.pad(x, ((0, 0), (1, 1), (0, 0), (0, 0)))       # pad H only
        xf = xp.reshape(N, (H + 2) * W, C)
        xf = jnp.pad(xf, ((0, 0), (1, 1), (0, 0)))               # flat guards
        taps = tuple(kh * W + kw for kh in range(3) for kw in range(3))
        y = _shift_conv(xf, w, bias, taps=taps, m=H * W, cin=C, mask_w=W,
                        tn_max=tn_max)
        return y.reshape(N, H, W, Cout)

    assert stride == 2 and H % 2 == 0 and W % 2 == 0
    Ho, Wo = H // 2, W // 2
    xp = jnp.pad(x, ((0, 0), (1, 1), (1, 1), (0, 0)))
    # phase split: ph[n, p, q, a, b, c] = x_pad[n, 2a+p, 2b+q, c]
    xph = xp.reshape(N, Ho + 1, 2, Wo + 1, 2, C).transpose(0, 2, 4, 1, 3, 5)
    xph = xph.reshape(N, 4 * (Ho + 1), Wo + 1, C)
    return _s2_conv(xph, w, bias, ho=Ho, wo=Wo, cin=C, tn_max=tn_max)


def conv3d_bn_relu(x, batch, seq, w, bias, *, tn_max=_TN_MAX):
    """Temporal conv, kernel (3,1,1), pad (1,0,0).  x: (batch*seq, H, W, C),
    w: (3*Cin, Cout) bf16 with folded BN scale (tap-major rows)."""
    BS, H, W, C = x.shape
    HW = H * W
    Cout = w.shape[1]
    x4 = x.reshape(batch, seq, HW, C)                            # free reshape
    xp = jnp.pad(x4, ((0, 0), (1, 1), (0, 0), (0, 0)))           # pad time
    xf = xp.reshape(batch, (seq + 2) * HW, C)                    # free reshape
    taps = (0, HW, 2 * HW)
    y = _shift_conv(xf, w, bias, taps=taps, m=seq * HW, cin=C, mask_w=None,
                    tn_max=tn_max)
    return y.reshape(batch * seq, H, W, Cout)


def upsample2(x):
    """Nearest-neighbour x2 (F.interpolate scale_factor=(2,2)), NHWC."""
    return jnp.repeat(jnp.repeat(x, 2, axis=1), 2, axis=2)


# ----------------------------------------------------------------------------
# Deterministic parameter construction (conv + folded eval-mode BatchNorm).
# NOTE: real PyTorch weights (Cout, Cin, kh, kw) must be permuted to
# (kh, kw, Cin)-major rows before flattening to (9*Cin, Cout).
# ----------------------------------------------------------------------------
def _make_conv_bn(key, k_elems, cin, cout):
    k1, k2, k3, k4, k5, k6 = jax.random.split(key, 6)
    fan_in = k_elems * cin
    w = jax.random.normal(k1, (fan_in, cout), jnp.float32) / jnp.sqrt(float(fan_in))
    b_conv = 0.1 * jax.random.normal(k2, (cout,), jnp.float32)
    gamma = 1.0 + 0.1 * jax.random.normal(k3, (cout,), jnp.float32)
    beta = 0.1 * jax.random.normal(k4, (cout,), jnp.float32)
    mean = 0.1 * jax.random.normal(k5, (cout,), jnp.float32)
    var = jnp.abs(jax.random.normal(k6, (cout,), jnp.float32)) + 0.5
    scale = gamma / jnp.sqrt(var + 1e-5)
    bias = scale * (b_conv - mean) + beta
    w_folded = (w * scale[None, :]).astype(jnp.bfloat16)
    return (w_folded, bias.astype(jnp.float32))


def make_params(key, height_feat_size=13):
    layer_defs = {
        'pre1': (9, height_feat_size, 32), 'pre2': (9, 32, 32),
        'c1_1': (9, 32, 64),   'c1_2': (9, 64, 64),   'c3d_1': (3, 64, 64),
        'c2_1': (9, 64, 128),  'c2_2': (9, 128, 128), 'c3d_2': (3, 128, 128),
        'c3_1': (9, 128, 256), 'c3_2': (9, 256, 256), 'c3d_3': (3, 256, 256),
        'c4_1': (9, 256, 512), 'c4_2': (9, 512, 512), 'c3d_4': (3, 512, 512),
        'c5_1': (9, 512 + 256, 256), 'c5_2': (9, 256, 256),
        'c6_1': (9, 256 + 128, 128), 'c6_2': (9, 128, 128),
        'c7_1': (9, 128 + 64, 64),   'c7_2': (9, 64, 64),
        'c8_1': (9, 64 + 32, 32),    'c8_2': (9, 32, 32),
    }
    keys = jax.random.split(key, len(layer_defs))
    return {name: _make_conv_bn(k, *spec)
            for k, (name, spec) in zip(keys, layer_defs.items())}


# ----------------------------------------------------------------------------
# Full STPN_mod forward
# ----------------------------------------------------------------------------
def stpn_forward(x, params):
    """x: (batch, seq, z, h, w)  ->  (batch, 32, h, w)  (NCHW, like PyTorch)."""
    b, s, z, h, w = x.shape
    p = params

    # NCHW -> NHWC, bf16 activations throughout (f32 accumulation in-kernel).
    xx = x.reshape(b * s, z, h, w).transpose(0, 2, 3, 1).astype(jnp.bfloat16)

    # --- encoder -------------------------------------------------------------
    xx = conv3x3_bn_relu(xx, *p['pre1'])
    xx = conv3x3_bn_relu(xx, *p['pre2'])

    x1 = conv3x3_bn_relu(xx, *p['c1_1'], stride=2)
    x1 = conv3x3_bn_relu(x1, *p['c1_2'])
    x1 = conv3d_bn_relu(x1, b, s, *p['c3d_1'])

    x2 = conv3x3_bn_relu(x1, *p['c2_1'], stride=2)
    x2 = conv3x3_bn_relu(x2, *p['c2_2'])
    x2 = conv3d_bn_relu(x2, b, s, *p['c3d_2'])

    x3 = conv3x3_bn_relu(x2, *p['c3_1'], stride=2)
    x3 = conv3x3_bn_relu(x3, *p['c3_2'])
    x3 = conv3d_bn_relu(x3, b, s, *p['c3d_3'])

    x4 = conv3x3_bn_relu(x3, *p['c4_1'], stride=2)
    x4 = conv3x3_bn_relu(x4, *p['c4_2'])
    x4 = conv3d_bn_relu(x4, b, s, *p['c3d_4'])

    # --- temporal max pooling (adaptive_max_pool3d over seq, output size 1) --
    x4p = temporal_max(x4, b, s)
    x3p = temporal_max(x3, b, s)
    x2p = temporal_max(x2, b, s)
    x1p = temporal_max(x1, b, s)
    xxp = temporal_max(xx, b, s)

    # --- decoder (upsample + concat + fused conv) ----------------------------
    x5 = conv3x3_bn_relu(jnp.concatenate([upsample2(x4p), x3p], axis=-1), *p['c5_1'])
    x5 = conv3x3_bn_relu(x5, *p['c5_2'])

    x6 = conv3x3_bn_relu(jnp.concatenate([upsample2(x5), x2p], axis=-1), *p['c6_1'])
    x6 = conv3x3_bn_relu(x6, *p['c6_2'])

    x7 = conv3x3_bn_relu(jnp.concatenate([upsample2(x6), x1p], axis=-1), *p['c7_1'])
    x7 = conv3x3_bn_relu(x7, *p['c7_2'])

    x8 = conv3x3_bn_relu(jnp.concatenate([upsample2(x7), xxp], axis=-1), *p['c8_1'])
    res = conv3x3_bn_relu(x8, *p['c8_2'])

    return res.transpose(0, 3, 1, 2).astype(jnp.float32)   # back to NCHW, f32


# ----------------------------------------------------------------------------
if __name__ == "__main__":
    key = jax.random.PRNGKey(0)
    k_params, k_x = jax.random.split(key)

    batch, seq, z, h, w = 2, 2, 13, 16, 16
    x = jax.random.normal(k_x, (batch, seq, z, h, w), jnp.float32)

    params = make_params(k_params, height_feat_size=z)

    out = stpn_forward(x, params)
    out = jax.block_until_ready(out)

    assert out.shape == (batch, 32, h, w), out.shape
    assert bool(jnp.all(jnp.isfinite(out)))
    print("KERNEL_OK")
</pallas_src>

<mosaic_0001>
module attributes {stable_mosaic.version = 11 : i64} {
  func.func @kernel(%arg0: i32, %arg1: i32, %arg2: memref<1x290x13xbf16, #tpu.memory_space<vmem>>, %arg3: memref<117x32xbf16, #tpu.memory_space<vmem>>, %arg4: memref<1x32xf32, #tpu.memory_space<vmem>>, %arg5: memref<1x256x32xbf16, #tpu.memory_space<vmem>>) attributes {dimension_semantics = [#tpu.dimension_semantics<parallel>, #tpu.dimension_semantics<parallel>], iteration_bounds = array<i64: 1, 4>, scalar_prefetch = 0 : i64, scratch_operands = 0 : i64, tpu.core_type = #tpu.core_type<tc>, window_params = [{transform_indices = @transform_0, window_bounds = array<i64: 1, 290, 13>}, {transform_indices = @transform_1, window_bounds = array<i64: 117, 32>}, {transform_indices = @transform_2, window_bounds = array<i64: 1, 32>}, {transform_indices = @transform_3, window_bounds = array<i64: 1, 256, 32>}]} {
    %0 = tpu.iota {dimensions = array<i32: 0>} : vector<256x1xi32>
    %c16_i32 = arith.constant 16 : i32
    %c0_i32 = arith.constant 0 : i32
    %1 = arith.cmpi eq, %c16_i32, %c0_i32 : i32
    %c1_i32 = arith.constant 1 : i32
    %2 = arith.select %1, %c1_i32, %c16_i32 : i32
    %3 = vector.broadcast %2 : i32 to vector<256x1xi32>
    %4 = arith.remsi %0, %3 : vector<256x1xi32>
    %c0_i32_0 = arith.constant 0 : i32
    %5 = vector.broadcast %c0_i32_0 : i32 to vector<256x1xi32>
    %6 = arith.cmpi ne, %4, %5 : vector<256x1xi32>
    %c0_i32_1 = arith.constant 0 : i32
    %7 = vector.broadcast %c0_i32_1 : i32 to vector<256x1xi32>
    %8 = arith.cmpi slt, %4, %7 : vector<256x1xi32>
    %c0_i32_2 = arith.constant 0 : i32
    %9 = arith.cmpi slt, %2, %c0_i32_2 : i32
    %10 = vector.broadcast %9 : i1 to vector<256x1xi1>
    %11 = vector.broadcast %10 : vector<256x1xi1> to vector<256x1xi1>
    %12 = arith.xori %8, %11 : vector<256x1xi1>
    %13 = arith.andi %12, %6 : vector<256x1xi1>
    %14 = vector.broadcast %2 : i32 to vector<256x1xi32>
    %15 = arith.addi %4, %14 : vector<256x1xi32>
    %16 = arith.select %13, %15, %4 : vector<256x1xi1>, vector<256x1xi32>
    %c0_i32_3 = arith.constant 0 : i32
    %17 = vector.broadcast %c0_i32_3 : i32 to vector<256x1xi32>
    %18 = arith.cmpi ne, %16, %17 : vector<256x1xi32>
    %c15_i32 = arith.constant 15 : i32
    %19 = vector.broadcast %c15_i32 : i32 to vector<256x1xi32>
    %20 = arith.cmpi ne, %16, %19 : vector<256x1xi32>
    %cst = arith.constant 0.000000e+00 : f32
    %21 = vector.broadcast %cst : f32 to vector<256x32xf32>
    %c0 = arith.constant 0 : index
    %c0_4 = arith.constant 0 : index
    %c0_5 = arith.constant 0 : index
    %22 = vector.load %arg2[%c0, %c0_4, %c0_5] : memref<1x290x13xbf16, #tpu.memory_space<vmem>>, vector<1x256x13xbf16>
    %23 = vector.shape_cast %22 : vector<1x256x13xbf16> to vector<256x13xbf16>
    %c0_i32_6 = arith.constant 0 : i32
    %24 = arith.sitofp %c0_i32_6 : i32 to bf16
    %25 = vector.shape_cast %18 : vector<256x1xi1> to vector<256x1xi1>
    %26 = vector.broadcast %25 : vector<256x1xi1> to vector<256x13xi1>
    %27 = vector.broadcast %24 : bf16 to vector<256x13xbf16>
    %28 = arith.select %26, %23, %27 : vector<256x13xi1>, vector<256x13xbf16>
    %c0_7 = arith.constant 0 : index
    %c0_8 = arith.constant 0 : index
    %29 = vector.load %arg3[%c0_7, %c0_8] : memref<117x32xbf16, #tpu.memory_space<vmem>>, vector<13x32xbf16>
    %cst_9 = arith.constant dense<0.000000e+00> : vector<256x32xf32>
    %30 = tpu.matmul %28, %29, %cst_9 {dimension_numbers = #tpu.dot_dimension_numbers<[1], [0], [0], [1], [0, 0, 1, 1], [], []>} : vector<256x13xbf16>, vector<13x32xbf16>, vector<256x32xf32> -> vector<256x32xf32>
    %31 = arith.addf %21, %30 : vector<256x32xf32>
    %c0_10 = arith.constant 0 : index
    %c1 = arith.constant 1 : index
    %c0_11 = arith.constant 0 : index
    %32 = vector.load %arg2[%c0_10, %c1, %c0_11] : memref<1x290x13xbf16, #tpu.memory_space<vmem>>, vector<1x256x13xbf16>
    %33 = vector.shape_cast %32 : vector<1x256x13xbf16> to vector<256x13xbf16>
    %c13 = arith.constant 13 : index
    %c0_12 = arith.constant 0 : index
    %34 = vector.load %arg3[%c13, %c0_12] : memref<117x32xbf16, #tpu.memory_space<vmem>>, vector<13x32xbf16>
    %cst_13 = arith.constant dense<0.000000e+00> : vector<256x32xf32>
    %35 = tpu.matmul %33, %34, %cst_13 {dimension_numbers = #tpu.dot_dimension_numbers<[1], [0], [0], [1], [0, 0, 1, 1], [], []>} : vector<256x13xbf16>, vector<13x32xbf16>, vector<256x32xf32> -> vector<256x32xf32>
    %36 = arith.addf %31, %35 : vector<256x32xf32>
    %c0_14 = arith.constant 0 : index
    %c2 = arith.constant 2 : index
    %c0_15 = arith.constant 0 : index
    %37 = vector.load %arg2[%c0_14, %c2, %c0_15] : memref<1x290x13xbf16, #tpu.memory_space<vmem>>, vector<1x256x13xbf16>
    %38 = vector.shape_cast %37 : vector<1x256x13xbf16> to vector<256x13xbf16>
    %c0_i32_16 = arith.constant 0 : i32
    %39 = arith.sitofp %c0_i32_16 : i32 to bf16
    %40 = vector.shape_cast %20 : vector<256x1xi1> to vector<256x1xi1>
    %41 = vector.broadcast %40 : vector<256x1xi1> to vector<256x13xi1>
    %42 = vector.broadcast %39 : bf16 to vector<256x13xbf16>
    %43 = arith.select %41, %38, %42 : vector<256x13xi1>, vector<256x13xbf16>
    %c26 = arith.constant 26 : index
    %c0_17 = arith.constant 0 : index
    %44 = vector.load %arg3[%c26, %c0_17] : memref<117x32xbf16, #tpu.memory_space<vmem>>, vector<13x32xbf16>
    %cst_18 = arith.constant dense<0.000000e+00> : vector<256x32xf32>
    %45 = tpu.matmul %43, %44, %cst_18 {dimension_numbers = #tpu.dot_dimension_numbers<[1], [0], [0], [1], [0, 0, 1, 1], [], []>} : vector<256x13xbf16>, vector<13x32xbf16>, vector<256x32xf32> -> vector<256x32xf32>
    %46 = arith.addf %36, %45 : vector<256x32xf32>
    %c0_19 = arith.constant 0 : index
    %c16 = arith.constant 16 : index
    %c0_20 = arith.constant 0 : index
    %47 = vector.load %arg2[%c0_19, %c16, %c0_20] : memref<1x290x13xbf16, #tpu.memory_space<vmem>>, vector<1x256x13xbf16>
    %48 = vector.shape_cast %47 : vector<1x256x13xbf16> to vector<256x13xbf16>
    %c0_i32_21 = arith.constant 0 : i32
    %49 = arith.sitofp %c0_i32_21 : i32 to bf16
    %50 = vector.shape_cast %18 : vector<256x1xi1> to vector<256x1xi1>
    %51 = vector.broadcast %50 : vector<256x1xi1> to vector<256x13xi1>
    %52 = vector.broadcast %49 : bf16 to vector<256x13xbf16>
    %53 = arith.select %51, %48, %52 : vector<256x13xi1>, vector<256x13xbf16>
    %c39 = arith.constant 39 : index
    %c0_22 = arith.constant 0 : index
    %54 = vector.load %arg3[%c39, %c0_22] : memref<117x32xbf16, #tpu.memory_space<vmem>>, vector<13x32xbf16>
    %cst_23 = arith.constant dense<0.000000e+00> : vector<256x32xf32>
    %55 = tpu.matmul %53, %54, %cst_23 {dimension_numbers = #tpu.dot_dimension_numbers<[1], [0], [0], [1], [0, 0, 1, 1], [], []>} : vector<256x13xbf16>, vector<13x32xbf16>, vector<256x32xf32> -> vector<256x32xf32>
    %56 = arith.addf %46, %55 : vector<256x32xf32>
    %c0_24 = arith.constant 0 : index
    %c17 = arith.constant 17 : index
    %c0_25 = arith.constant 0 : index
    %57 = vector.load %arg2[%c0_24, %c17, %c0_25] : memref<1x290x13xbf16, #tpu.memory_space<vmem>>, vector<1x256x13xbf16>
    %58 = vector.shape_cast %57 : vector<1x256x13xbf16> to vector<256x13xbf16>
    %c52 = arith.constant 52 : index
    %c0_26 = arith.constant 0 : index
    %59 = vector.load %arg3[%c52, %c0_26] : memref<117x32xbf16, #tpu.memory_space<vmem>>, vector<13x32xbf16>
    %cst_27 = arith.constant dense<0.000000e+00> : vector<256x32xf32>
    %60 = tpu.matmul %58, %59, %cst_27 {dimension_numbers = #tpu.dot_dimension_numbers<[1], [0], [0], [1], [0, 0, 1, 1], [], []>} : vector<256x13xbf16>, vector<13x32xbf16>, vector<256x32xf32> -> vector<256x32xf32>
    %61 = arith.addf %56, %60 : vector<256x32xf32>
    %c0_28 = arith.constant 0 : index
    %c18 = arith.constant 18 : index
    %c0_29 = arith.constant 0 : index
    %62 = vector.load %arg2[%c0_28, %c18, %c0_29] : memref<1x290x13xbf16, #tpu.memory_space<vmem>>, vector<1x256x13xbf16>
    %63 = vector.shape_cast %62 : vector<1x256x13xbf16> to vector<256x13xbf16>
    %c0_i32_30 = arith.constant 0 : i32
    %64 = arith.sitofp %c0_i32_30 : i32 to bf16
    %65 = vector.shape_cast %20 : vector<256x1xi1> to vector<256x1xi1>
    %66 = vector.broadcast %65 : vector<256x1xi1> to vector<256x13xi1>
    %67 = vector.broadcast %64 : bf16 to vector<256x13xbf16>
    %68 = arith.select %66, %63, %67 : vector<256x13xi1>, vector<256x13xbf16>
    %c65 = arith.constant 65 : index
    %c0_31 = arith.constant 0 : index
    %69 = vector.load %arg3[%c65, %c0_31] : memref<117x32xbf16, #tpu.memory_space<vmem>>, vector<13x32xbf16>
    %cst_32 = arith.constant dense<0.000000e+00> : vector<256x32xf32>
    %70 = tpu.matmul %68, %69, %cst_32 {dimension_numbers = #tpu.dot_dimension_numbers<[1], [0], [0], [1], [0, 0, 1, 1], [], []>} : vector<256x13xbf16>, vector<13x32xbf16>, vector<256x32xf32> -> vector<256x32xf32>
    %71 = arith.addf %61, %70 : vector<256x32xf32>
    %c0_33 = arith.constant 0 : index
    %c32 = arith.constant 32 : index
    %c0_34 = arith.constant 0 : index
    %72 = vector.load %arg2[%c0_33, %c32, %c0_34] : memref<1x290x13xbf16, #tpu.memory_space<vmem>>, vector<1x256x13xbf16>
    %73 = vector.shape_cast %72 : vector<1x256x13xbf16> to vector<256x13xbf16>
    %c0_i32_35 = arith.constant 0 : i32
    %74 = arith.sitofp %c0_i32_35 : i32 to bf16
    %75 = vector.shape_cast %18 : vector<256x1xi1> to vector<256x1xi1>
    %76 = vector.broadcast %75 : vector<256x1xi1> to vector<256x13xi1>
    %77 = vector.broadcast %74 : bf16 to vector<256x13xbf16>
    %78 = arith.select %76, %73, %77 : vector<256x13xi1>, vector<256x13xbf16>
    %c78 = arith.constant 78 : index
    %c0_36 = arith.constant 0 : index
    %79 = vector.load %arg3[%c78, %c0_36] : memref<117x32xbf16, #tpu.memory_space<vmem>>, vector<13x32xbf16>
    %cst_37 = arith.constant dense<0.000000e+00> : vector<256x32xf32>
    %80 = tpu.matmul %78, %79, %cst_37 {dimension_numbers = #tpu.dot_dimension_numbers<[1], [0], [0], [1], [0, 0, 1, 1], [], []>} : vector<256x13xbf16>, vector<13x32xbf16>, vector<256x32xf32> -> vector<256x32xf32>
    %81 = arith.addf %71, %80 : vector<256x32xf32>
    %c0_38 = arith.constant 0 : index
    %c33 = arith.constant 33 : index
    %c0_39 = arith.constant 0 : index
    %82 = vector.load %arg2[%c0_38, %c33, %c0_39] : memref<1x290x13xbf16, #tpu.memory_space<vmem>>, vector<1x256x13xbf16>
    %83 = vector.shape_cast %82 : vector<1x256x13xbf16> to vector<256x13xbf16>
    %c91 = arith.constant 91 : index
    %c0_40 = arith.constant 0 : index
    %84 = vector.load %arg3[%c91, %c0_40] : memref<117x32xbf16, #tpu.memory_space<vmem>>, vector<13x32xbf16>
    %cst_41 = arith.constant dense<0.000000e+00> : vector<256x32xf32>
    %85 = tpu.matmul %83, %84, %cst_41 {dimension_numbers = #tpu.dot_dimension_numbers<[1], [0], [0], [1], [0, 0, 1, 1], [], []>} : vector<256x13xbf16>, vector<13x32xbf16>, vector<256x32xf32> -> vector<256x32xf32>
    %86 = arith.addf %81, %85 : vector<256x32xf32>
    %c0_42 = arith.constant 0 : index
    %c34 = arith.constant 34 : index
    %c0_43 = arith.constant 0 : index
    %87 = vector.load %arg2[%c0_42, %c34, %c0_43] : memref<1x290x13xbf16, #tpu.memory_space<vmem>>, vector<1x256x13xbf16>
    %88 = vector.shape_cast %87 : vector<1x256x13xbf16> to vector<256x13xbf16>
    %c0_i32_44 = arith.constant 0 : i32
    %89 = arith.sitofp %c0_i32_44 : i32 to bf16
    %90 = vector.shape_cast %20 : vector<256x1xi1> to vector<256x1xi1>
    %91 = vector.broadcast %90 : vector<256x1xi1> to vector<256x13xi1>
    %92 = vector.broadcast %89 : bf16 to vector<256x13xbf16>
    %93 = arith.select %91, %88, %92 : vector<256x13xi1>, vector<256x13xbf16>
    %c104 = arith.constant 104 : index
    %c0_45 = arith.constant 0 : index
    %94 = vector.load %arg3[%c104, %c0_45] : memref<117x32xbf16, #tpu.memory_space<vmem>>, vector<13x32xbf16>
    %cst_46 = arith.constant dense<0.000000e+00> : vector<256x32xf32>
    %95 = tpu.matmul %93, %94, %cst_46 {dimension_numbers = #tpu.dot_dimension_numbers<[1], [0], [0], [1], [0, 0, 1, 1], [], []>} : vector<256x13xbf16>, vector<13x32xbf16>, vector<256x32xf32> -> vector<256x32xf32>
    %96 = arith.addf %86, %95 : vector<256x32xf32>
    %c0_47 = arith.constant 0 : index
    %c0_48 = arith.constant 0 : index
    %97 = vector.load %arg4[%c0_47, %c0_48] : memref<1x32xf32, #tpu.memory_space<vmem>>, vector<1x32xf32>
    %98 = vector.broadcast %97 : vector<1x32xf32> to vector<256x32xf32>
    %99 = arith.addf %96, %98 : vector<256x32xf32>
    %cst_49 = arith.constant 0.000000e+00 : f32
    %100 = vector.broadcast %cst_49 : f32 to vector<256x32xf32>
    %101 = arith.maximumf %99, %100 : vector<256x32xf32>
    %102 = arith.truncf %101 : vector<256x32xf32> to vector<256x32xbf16>
    %c0_50 = arith.constant 0 : index
    %c0_51 = arith.constant 0 : index
    %c0_52 = arith.constant 0 : index
    %103 = vector.load %arg5[%c0_50, %c0_51, %c0_52] : memref<1x256x32xbf16, #tpu.memory_space<vmem>>, vector<1x256x32xbf16>
    %104 = vector.shape_cast %103 : vector<1x256x32xbf16> to vector<256x32xbf16>
    %105 = vector.shape_cast %102 : vector<256x32xbf16> to vector<1x256x32xbf16>
    tpu.vector_store %arg5[%c0_50, %c0_51, %c0_52], %105 {strides = array<i32>} : memref<1x256x32xbf16, #tpu.memory_space<vmem>>, vector<1x256x32xbf16>,
    return
  }
  func.func @transform_0(%arg0: i32, %arg1: i32) -> (i32, i32, i32) {
    %c0_i32 = arith.constant 0 : i32
    %c0_i32_0 = arith.constant 0 : i32
    %c0_i32_1 = arith.constant 0 : i32
    return %arg1, %c0_i32, %c0_i32_0 : i32, i32, i32
  }
  func.func @transform_1(%arg0: i32, %arg1: i32) -> (i32, i32) {
    %c0_i32 = arith.constant 0 : i32
    %c0_i32_0 = arith.constant 0 : i32
    return %c0_i32, %arg0 : i32, i32
  }
  func.func @transform_2(%arg0: i32, %arg1: i32) -> (i32, i32) {
    %c0_i32 = arith.constant 0 : i32
    %c0_i32_0 = arith.constant 0 : i32
    return %c0_i32, %arg0 : i32, i32
  }
  func.func @transform_3(%arg0: i32, %arg1: i32) -> (i32, i32, i32) {
    %c0_i32 = arith.constant 0 : i32
    %c0_i32_0 = arith.constant 0 : i32
    return %arg1, %c0_i32, %arg0 : i32, i32, i32
  }
}

</mosaic_0001>

<llo_original>
// kernel: tpu_custom_call.1
$region0: #{tpu_custom_call.1}
  #allocation0 [shape = 'u32[]', space=smem, size = 0x4, offset = 0x4, fixed_abs, tag = 'smem constant byte address 0x4 - core index']
  #allocation1 [shape = 'u32[72,128]{1,0:T(1,128)}', space=vmem, size = 0x9000, scoped, tag = 'internal scratch']
  %s0 = inlined_call_operand.vmem [shape: bf16[4,290,13], index: 0, kind: input, shape index: {}]
  %s1 = inlined_call_operand.vmem [shape: bf16[117,32], index: 1, kind: input, shape index: {}]
  %s2 = inlined_call_operand.vmem [shape: f32[1,32], index: 2, kind: input, shape index: {}]
  %s3 = inlined_call_operand.vmem [shape: bf16[4,256,32], index: 3, kind: output, shape index: {}]
  %s4 = sld [smem:[#allocation0]]
  $region45: #{tpu_custom_call.1} parent=0
    _
  %s6 = ssub.s32 1, %s4
  %s7 = scalar_select 0, %s6, %s4
  loop: start=0, step=1, limit=6
  $region2: #{tpu_custom_call.1} parent=0 // loop_pre_header
    _
  $region3: #{tpu_custom_call.1} parent=0 // loop_header
    %s9 = sphi 0, %s13
    %p10 = scmp.ge.s32.totalorder %s9, 6
    %s16 = sphi 0, %s28
    %s17 = sphi 0, %s24
    %s18 = sphi 0, %s16
    %s19 = sphi 0, %s17
    %s20 = sphi 0, %s18
    %s21 = sphi 0, %s19
    %s31 = sphi 0, %s33
    %s34 = sphi 0, %s31
    %s35 = sphi 0, %s34
    %s51 = sphi 0, %s35
    %s57 = sphi 0, %s59
    %s60 = sphi 0, %s57
    %s61 = sphi 0, %s60
    %s77 = sphi 0, %s61
    %s83 = sphi 0, %s85
    %s86 = sphi 0, %s83
    %s87 = sphi 0, %s86
    %s103 = sphi 0, %s87
    %s111 = sphi 0, %s113
    %s114 = sphi 0, %s111
    %s115 = sphi 0, %s114
    %s131 = sphi 0, %s115
  $region4: #{tpu_custom_call.1} parent=0 // loop_header_branch
    %12 = sbr.rel (%p10) target = $region8
  $region5: #{tpu_custom_call.1} parent=0 // loop_body
    %s14 = ssub.s32 %s9, 1
    %s15 = ssub.s32 %s9, 2
    %s22 = sadd.s32 1, %s17
    %p23 = scmp.ge.s32.totalorder %s22, 4
    %s24 = scalar_select %p23, 0, %s22
    %s25 = sadd.s32 1, %s16
    %s26 = scalar_select %p23, %s25, %s16
    %p27 = scmp.ge.s32.totalorder %s26, 1
    %s28 = scalar_select %p27, 0, %s26
    %s29 = ssub.s32 %s17, %s24
    %p30 = scmp.eq.s32.totalorder %s29, 0
    %s32 = sadd.s32 %s31, 1
    %s33 = scalar_select %p30, %s31, %s32
    %p36 = pneg %p30
    %p37 = scmp.eq.s32.totalorder %s9, 3
    %p38 = por %p36, %p37
    %p39 = scmp.ne.s32.totalorder %s31, %s34
    %p40 = scmp.eq.s32.totalorder %s9, 0
    %p41 = por %p39, %p40
    %p42 = scmp.ne.s32.totalorder %s31, %s34
    %p43 = scmp.eq.s32.totalorder %s14, 3
    %p44 = por %p42, %p43
    %p45 = scmp.ne.s32.totalorder %s34, %s35
    %p46 = scmp.eq.s32.totalorder %s14, 0
    %p47 = por %p45, %p46
    %p48 = scmp.ne.s32.totalorder %s34, %s35
    %p49 = scmp.eq.s32.totalorder %s15, 3
    %p50 = por %p48, %p49
    %p52 = scmp.ne.s32.totalorder %s35, %s51
    %p53 = scmp.eq.s32.totalorder %s15, 0
    %p54 = por %p52, %p53
    %s55 = ssub.s32 %s16, %s28
    %p56 = scmp.eq.s32.totalorder %s55, 0
    %s58 = sadd.s32 %s57, 1
    %s59 = scalar_select %p56, %s57, %s58
    %p62 = pneg %p56
    %p63 = scmp.eq.s32.totalorder %s9, 3
    %p64 = por %p62, %p63
    %p65 = scmp.ne.s32.totalorder %s57, %s60
    %p66 = scmp.eq.s32.totalorder %s9, 0
    %p67 = por %p65, %p66
    %p68 = scmp.ne.s32.totalorder %s57, %s60
    %p69 = scmp.eq.s32.totalorder %s14, 3
    %p70 = por %p68, %p69
    %p71 = scmp.ne.s32.totalorder %s60, %s61
    %p72 = scmp.eq.s32.totalorder %s14, 0
    %p73 = por %p71, %p72
    %p74 = scmp.ne.s32.totalorder %s60, %s61
    %p75 = scmp.eq.s32.totalorder %s15, 3
    %p76 = por %p74, %p75
    %p78 = scmp.ne.s32.totalorder %s61, %s77
    %p79 = scmp.eq.s32.totalorder %s15, 0
    %p80 = por %p78, %p79
    %s81 = ssub.s32 %s16, %s28
    %p82 = scmp.eq.s32.totalorder %s81, 0
    %s84 = sadd.s32 %s83, 1
    %s85 = scalar_select %p82, %s83, %s84
    %p88 = pneg %p82
    %p89 = scmp.eq.s32.totalorder %s9, 3
    %p90 = por %p88, %p89
    %p91 = scmp.ne.s32.totalorder %s83, %s86
    %p92 = scmp.eq.s32.totalorder %s9, 0
    %p93 = por %p91, %p92
    %p94 = scmp.ne.s32.totalorder %s83, %s86
    %p95 = scmp.eq.s32.totalorder %s14, 3
    %p96 = por %p94, %p95
    %p97 = scmp.ne.s32.totalorder %s86, %s87
    %p98 = scmp.eq.s32.totalorder %s14, 0
    %p99 = por %p97, %p98
    %p100 = scmp.ne.s32.totalorder %s86, %s87
    %p101 = scmp.eq.s32.totalorder %s15, 3
    %p102 = por %p100, %p101
    %p104 = scmp.ne.s32.totalorder %s87, %s103
    %p105 = scmp.eq.s32.totalorder %s15, 0
    %p106 = por %p104, %p105
    %s107 = ssub.s32 %s17, %s24
    %s108 = ssub.s32 %s16, %s28
    %s109 = sor.u32 %s107, %s108
    %p110 = scmp.eq.s32.totalorder %s109, 0
    %s112 = sadd.s32 %s111, 1
    %s113 = scalar_select %p110, %s111, %s112
    %p116 = pneg %p110
    %p117 = scmp.eq.s32.totalorder %s9, 3
    %p118 = por %p116, %p117
    %p119 = scmp.ne.s32.totalorder %s111, %s114
    %p120 = scmp.eq.s32.totalorder %s9, 0
    %p121 = por %p119, %p120
    %p122 = scmp.ne.s32.totalorder %s111, %s114
    %p123 = scmp.eq.s32.totalorder %s14, 3
    %p124 = por %p122, %p123
    %p125 = scmp.ne.s32.totalorder %s114, %s115
    %p126 = scmp.eq.s32.totalorder %s14, 0
    %p127 = por %p125, %p126
    %p128 = scmp.ne.s32.totalorder %s114, %s115
    %p129 = scmp.eq.s32.totalorder %s15, 3
    %p130 = por %p128, %p129
    %p132 = scmp.ne.s32.totalorder %s115, %s131
    %p133 = scmp.eq.s32.totalorder %s15, 0
    %p134 = por %p132, %p133
    %p135 = scmp.le.s32.totalorder 1, %s9
    %p136 = scmp.lt.s32.totalorder %s9, 5
    %p137 = pnand %p135, %p136
    %p138 = pneg %p137
    // Predicated region
    $region9: #{tpu_custom_call.1} parent=5 // pred_check
      _
    $region10: #{tpu_custom_call.1} parent=5 // pred_check_branch
      %140 = sbr.rel (%p137) target = $region12
    $region11: #{tpu_custom_call.1} parent=5 // pred_region
      %s141 = ssub.s32 %s9, 1
      // Predicated region
      $region13: #{tpu_custom_call.1} parent=11 // pred_check
        %p142 = pneg %p73
      $region14: #{tpu_custom_call.1} parent=11 // pred_check_branch
        %144 = sbr.rel (%p142) target = $region16
      $region15: #{tpu_custom_call.1} parent=11 // pred_region
        %p145 = scmp.lt.s32.totalorder %s18, 0
        %s146 = scalar_select %p145, %s18, 0
        %s147 = smul.addr %s146, 4
        %s148 = scalar_lea.vmem %s1, %s147
      $region16: #{tpu_custom_call.1} parent=11 // pred_fallthru
        _
      // Predicated region
      $region17: #{tpu_custom_call.1} parent=11 // pred_check
        %p149 = pneg %p99
      $region18: #{tpu_custom_call.1} parent=11 // pred_check_branch
        %151 = sbr.rel (%p149) target = $region20
      $region19: #{tpu_custom_call.1} parent=11 // pred_region
        %p152 = scmp.lt.s32.totalorder %s18, 0
        %s153 = scalar_select %p152, %s18, 0
        %s154 = scalar_lea.vmem %s2, %s153
      $region20: #{tpu_custom_call.1} parent=11 // pred_fallthru
        _
    $region12: #{tpu_custom_call.1} parent=5 // pred_fallthru
      _
    %p155 = scmp.lt.s32.totalorder %s9, 4
    // Predicated region
    $region21: #{tpu_custom_call.1} parent=5 // pred_check
      %p156 = pneg %p155
    $region22: #{tpu_custom_call.1} parent=5 // pred_check_branch
      %158 = sbr.rel (%p156) target = $region24
    $region23: #{tpu_custom_call.1} parent=5 // pred_region
      // Predicated region
      $region25: #{tpu_custom_call.1} parent=23 // pred_check
        %p159 = pneg %p41
      $region26: #{tpu_custom_call.1} parent=23 // pred_check_branch
        %161 = sbr.rel (%p159) target = $region28
      $region27: #{tpu_custom_call.1} parent=23 // pred_region
        %p162 = scmp.lt.s32.totalorder %s17, 3
        %s163 = scalar_select %p162, %s17, 3
        %s164 = smul.addr %s163, 37
        %s165 = smul.addr %s164, 4
        %s166 = scalar_lea.vmem %s0, %s165
      $region28: #{tpu_custom_call.1} parent=23 // pred_fallthru
        _
    $region24: #{tpu_custom_call.1} parent=5 // pred_fallthru
      _
    %p167 = scmp.le.s32.totalorder 1, %s9
    %p168 = scmp.lt.s32.totalorder %s9, 5
    %p169 = pnand %p167, %p168
    %p170 = pneg %p169
    // Predicated region
    $region29: #{tpu_custom_call.1} parent=5 // pred_check
      _
    $region30: #{tpu_custom_call.1} parent=5 // pred_check_branch
      %172 = sbr.rel (%p169) target = $region32
    $region31: #{tpu_custom_call.1} parent=5 // pred_region
      %s173 = ssub.s32 %s9, 1
      %p174 = scmp.lt.s32.totalorder %s19, 3
      %s175 = scalar_select %p174, %s19, 3
      %s176 = smul.addr %s175, 37
      %s177 = smul.addr %s176, 4
      %s178 = scalar_lea.vmem %s0, %s177
      %p179 = pneg %p47
      %p180 = pneg %p44
      %p181 = scmp.lt.s32.totalorder %s18, 0
      %s182 = scalar_select %p181, %s18, 0
      %s183 = smul.addr %s182, 4
      %s184 = scalar_lea.vmem %s1, %s183
      %p185 = pneg %p73
      %p186 = pneg %p70
      %p187 = scmp.lt.s32.totalorder %s18, 0
      %s188 = scalar_select %p187, %s18, 0
      %s189 = scalar_lea.vmem %s2, %s188
      %p190 = pneg %p99
      %p191 = pneg %p96
      %p192 = pneg %p127
      %p193 = pneg %p124
      %p194 = scmp.lt.s32.totalorder %s19, 3
      %s195 = scalar_select %p194, %s19, 3
      %p196 = scmp.lt.s32.totalorder %s18, 0
      %s197 = scalar_select %p196, %s18, 0
      %s198 = smul.addr %s195, 32
      %s199 = sadd.s32 %s197, %s198
      %s200 = smul.addr %s199, 4
      %s201 = scalar_lea.vmem %s3, %s200
      %p202 = scmp.lt.s32.totalorder %s19, 3
      %s203 = scalar_select %p202, %s19, 3
      %s204 = smul.addr %s203, 37
      %s205 = smul.addr %s204, 4
      %s206 = scalar_lea.vmem %s0, %s205
      %p207 = scmp.lt.s32.totalorder %s18, 0
      %s208 = scalar_select %p207, %s18, 0
      %s209 = smul.addr %s208, 4
      %s210 = scalar_lea.vmem %s1, %s209
      %p211 = scmp.lt.s32.totalorder %s18, 0
      %s212 = scalar_select %p211, %s18, 0
      %s213 = scalar_lea.vmem %s2, %s212
      %p214 = scmp.lt.s32.totalorder %s19, 3
      %s215 = scalar_select %p214, %s19, 3
      %p216 = scmp.lt.s32.totalorder %s18, 0
      %s217 = scalar_select %p216, %s18, 0
      %s218 = smul.addr %s215, 32
      %s219 = sadd.s32 %s217, %s218
      %s220 = smul.addr %s219, 4
      %s221 = scalar_lea.vmem %s3, %s220
      %v225 = vlaneseq
      %v226 = vshrl.u32 %v225, 7
      %v227 = vadd.s32 %v226, 8
      %v228 = vadd.s32 %v226, 16
      %v229 = vadd.s32 %v226, 24
      %v230 = vadd.s32 %v226, 32
      %v231 = vadd.s32 %v226, 40
      %v232 = vadd.s32 %v226, 48
      %v233 = vadd.s32 %v226, 56
      %v234 = vadd.s32 %v226, 64
      %v235 = vadd.s32 %v226, 72
      %v236 = vadd.s32 %v226, 80
      %v237 = vadd.s32 %v226, 88
      %v238 = vadd.s32 %v226, 96
      %v239 = vadd.s32 %v226, 104
      %v240 = vadd.s32 %v226, 112
      %v241 = vadd.s32 %v226, 120
      %v242 = vadd.s32 %v226, 128
      %v243 = vadd.s32 %v226, 136
      %v244 = vadd.s32 %v226, 144
      %v245 = vadd.s32 %v226, 152
      %v246 = vadd.s32 %v226, 160
      %v247 = vadd.s32 %v226, 168
      %v248 = vadd.s32 %v226, 176
      %v249 = vadd.s32 %v226, 184
      %v250 = vadd.s32 %v226, 192
      %v251 = vadd.s32 %v226, 200
      %v252 = vadd.s32 %v226, 208
      %v253 = vadd.s32 %v226, 216
      %v254 = vadd.s32 %v226, 224
      %v255 = vadd.s32 %v226, 232
      %v256 = vadd.s32 %v226, 240
      %v257 = vadd.s32 %v226, 248
      %vm258 = vcmp.lt.s32.totalorder %v226, 0
      %v259 = vsub.s32 0, %v226
      %v260 = vsel %vm258, %v259, %v226
      %v261 = vshrl.u32 %v260, 4
      %v262 = vand.u32 %v260, 15
      %v263 = vsub.s32 0, %v262
      %v264 = vsel %vm258, %v263, %v262
      %vm265 = vcmp.lt.s32.totalorder %v227, 0
      %v266 = vsub.s32 0, %v227
      %v267 = vsel %vm265, %v266, %v227
      %v268 = vshrl.u32 %v267, 4
      %v269 = vand.u32 %v267, 15
      %v270 = vsub.s32 0, %v269
      %v271 = vsel %vm265, %v270, %v269
      %vm272 = vcmp.lt.s32.totalorder %v228, 0
      %v273 = vsub.s32 0, %v228
      %v274 = vsel %vm272, %v273, %v228
      %v275 = vshrl.u32 %v274, 4
      %v276 = vand.u32 %v274, 15
      %v277 = vsub.s32 0, %v276
      %v278 = vsel %vm272, %v277, %v276
      %vm279 = vcmp.lt.s32.totalorder %v229, 0
      %v280 = vsub.s32 0, %v229
      %v281 = vsel %vm279, %v280, %v229
      %v282 = vshrl.u32 %v281, 4
      %v283 = vand.u32 %v281, 15
      %v284 = vsub.s32 0, %v283
      %v285 = vsel %vm279, %v284, %v283
      %vm286 = vcmp.lt.s32.totalorder %v230, 0
      %v287 = vsub.s32 0, %v230
      %v288 = vsel %vm286, %v287, %v230
      %v289 = vshrl.u32 %v288, 4
      %v290 = vand.u32 %v288, 15
      %v291 = vsub.s32 0, %v290
      %v292 = vsel %vm286, %v291, %v290
      %vm293 = vcmp.lt.s32.totalorder %v231, 0
      %v294 = vsub.s32 0, %v231
      %v295 = vsel %vm293, %v294, %v231
      %v296 = vshrl.u32 %v295, 4
      %v297 = vand.u32 %v295, 15
      %v298 = vsub.s32 0, %v297
      %v299 = vsel %vm293, %v298, %v297
      %vm300 = vcmp.lt.s32.totalorder %v232, 0
      %v301 = vsub.s32 0, %v232
      %v302 = vsel %vm300, %v301, %v232
      %v303 = vshrl.u32 %v302, 4
      %v304 = vand.u32 %v302, 15
      %v305 = vsub.s32 0, %v304
      %v306 = vsel %vm300, %v305, %v304
      %vm307 = vcmp.lt.s32.totalorder %v233, 0
      %v308 = vsub.s32 0, %v233
      %v309 = vsel %vm307, %v308, %v233
      %v310 = vshrl.u32 %v309, 4
      %v311 = vand.u32 %v309, 15
      %v312 = vsub.s32 0, %v311
      %v313 = vsel %vm307, %v312, %v311
      %vm314 = vcmp.lt.s32.totalorder %v234, 0
      %v315 = vsub.s32 0, %v234
      %v316 = vsel %vm314, %v315, %v234
      %v317 = vshrl.u32 %v316, 4
      %v318 = vand.u32 %v316, 15
      %v319 = vsub.s32 0, %v318
      %v320 = vsel %vm314, %v319, %v318
      %vm321 = vcmp.lt.s32.totalorder %v235, 0
      %v322 = vsub.s32 0, %v235
      %v323 = vsel %vm321, %v322, %v235
      %v324 = vshrl.u32 %v323, 4
      %v325 = vand.u32 %v323, 15
      %v326 = vsub.s32 0, %v325
      %v327 = vsel %vm321, %v326, %v325
      %vm328 = vcmp.lt.s32.totalorder %v236, 0
      %v329 = vsub.s32 0, %v236
      %v330 = vsel %vm328, %v329, %v236
      %v331 = vshrl.u32 %v330, 4
      %v332 = vand.u32 %v330, 15
      %v333 = vsub.s32 0, %v332
      %v334 = vsel %vm328, %v333, %v332
      %vm335 = vcmp.lt.s32.totalorder %v237, 0
      %v336 = vsub.s32 0, %v237
      %v337 = vsel %vm335, %v336, %v237
      %v338 = vshrl.u32 %v337, 4
      %v339 = vand.u32 %v337, 15
      %v340 = vsub.s32 0, %v339
      %v341 = vsel %vm335, %v340, %v339
      %vm342 = vcmp.lt.s32.totalorder %v238, 0
      %v343 = vsub.s32 0, %v238
      %v344 = vsel %vm342, %v343, %v238
      %v345 = vshrl.u32 %v344, 4
      %v346 = vand.u32 %v344, 15
      %v347 = vsub.s32 0, %v346
      %v348 = vsel %vm342, %v347, %v346
      %vm349 = vcmp.lt.s32.totalorder %v239, 0
      %v350 = vsub.s32 0, %v239
      %v351 = vsel %vm349, %v350, %v239
      %v352 = vshrl.u32 %v351, 4
      %v353 = vand.u32 %v351, 15
      %v354 = vsub.s32 0, %v353
      %v355 = vsel %vm349, %v354, %v353
      %vm356 = vcmp.lt.s32.totalorder %v240, 0
      %v357 = vsub.s32 0, %v240
      %v358 = vsel %vm356, %v357, %v240
      %v359 = vshrl.u32 %v358, 4
      %v360 = vand.u32 %v358, 15
      %v361 = vsub.s32 0, %v360
      %v362 = vsel %vm356, %v361, %v360
      %vm363 = vcmp.lt.s32.totalorder %v241, 0
      %v364 = vsub.s32 0, %v241
      %v365 = vsel %vm363, %v364, %v241
      %v366 = vshrl.u32 %v365, 4
      %v367 = vand.u32 %v365, 15
      %v368 = vsub.s32 0, %v367
      %v369 = vsel %vm363, %v368, %v367
      %vm370 = vcmp.lt.s32.totalorder %v242, 0
      %v371 = vsub.s32 0, %v242
      %v372 = vsel %vm370, %v371, %v242
      %v373 = vshrl.u32 %v372, 4
      %v374 = vand.u32 %v372, 15
      %v375 = vsub.s32 0, %v374
      %v376 = vsel %vm370, %v375, %v374
      %vm377 = vcmp.lt.s32.totalorder %v243, 0
      %v378 = vsub.s32 0, %v243
      %v379 = vsel %vm377, %v378, %v243
      %v380 = vshrl.u32 %v379, 4
      %v381 = vand.u32 %v379, 15
      %v382 = vsub.s32 0, %v381
      %v383 = vsel %vm377, %v382, %v381
      %vm384 = vcmp.lt.s32.totalorder %v244, 0
      %v385 = vsub.s32 0, %v244
      %v386 = vsel %vm384, %v385, %v244
      %v387 = vshrl.u32 %v386, 4
      %v388 = vand.u32 %v386, 15
      %v389 = vsub.s32 0, %v388
      %v390 = vsel %vm384, %v389, %v388
      %vm391 = vcmp.lt.s32.totalorder %v245, 0
      %v392 = vsub.s32 0, %v245
      %v393 = vsel %vm391, %v392, %v245
      %v394 = vshrl.u32 %v393, 4
      %v395 = vand.u32 %v393, 15
      %v396 = vsub.s32 0, %v395
      %v397 = vsel %vm391, %v396, %v395
      %vm398 = vcmp.lt.s32.totalorder %v246, 0
      %v399 = vsub.s32 0, %v246
      %v400 = vsel %vm398, %v399, %v246
      %v401 = vshrl.u32 %v400, 4
      %v402 = vand.u32 %v400, 15
      %v403 = vsub.s32 0, %v402
      %v404 = vsel %vm398, %v403, %v402
      %vm405 = vcmp.lt.s32.totalorder %v247, 0
      %v406 = vsub.s32 0, %v247
      %v407 = vsel %vm405, %v406, %v247
      %v408 = vshrl.u32 %v407, 4
      %v409 = vand.u32 %v407, 15
      %v410 = vsub.s32 0, %v409
      %v411 = vsel %vm405, %v410, %v409
      %vm412 = vcmp.lt.s32.totalorder %v248, 0
      %v413 = vsub.s32 0, %v248
      %v414 = vsel %vm412, %v413, %v248
      %v415 = vshrl.u32 %v414, 4
      %v416 = vand.u32 %v414, 15
      %v417 = vsub.s32 0, %v416
      %v418 = vsel %vm412, %v417, %v416
      %vm419 = vcmp.lt.s32.totalorder %v249, 0
      %v420 = vsub.s32 0, %v249
      %v421 = vsel %vm419, %v420, %v249
      %v422 = vshrl.u32 %v421, 4
      %v423 = vand.u32 %v421, 15
      %v424 = vsub.s32 0, %v423
      %v425 = vsel %vm419, %v424, %v423
      %vm426 = vcmp.lt.s32.totalorder %v250, 0
      %v427 = vsub.s32 0, %v250
      %v428 = vsel %vm426, %v427, %v250
      %v429 = vshrl.u32 %v428, 4
      %v430 = vand.u32 %v428, 15
      %v431 = vsub.s32 0, %v430
      %v432 = vsel %vm426, %v431, %v430
      %vm433 = vcmp.lt.s32.totalorder %v251, 0
      %v434 = vsub.s32 0, %v251
      %v435 = vsel %vm433, %v434, %v251
      %v436 = vshrl.u32 %v435, 4
      %v437 = vand.u32 %v435, 15
      %v438 = vsub.s32 0, %v437
      %v439 = vsel %vm433, %v438, %v437
      %vm440 = vcmp.lt.s32.totalorder %v252, 0
      %v441 = vsub.s32 0, %v252
      %v442 = vsel %vm440, %v441, %v252
      %v443 = vshrl.u32 %v442, 4
      %v444 = vand.u32 %v442, 15
      %v445 = vsub.s32 0, %v444
      %v446 = vsel %vm440, %v445, %v444
      %vm447 = vcmp.lt.s32.totalorder %v253, 0
      %v448 = vsub.s32 0, %v253
      %v449 = vsel %vm447, %v448, %v253
      %v450 = vshrl.u32 %v449, 4
      %v451 = vand.u32 %v449, 15
      %v452 = vsub.s32 0, %v451
      %v453 = vsel %vm447, %v452, %v451
      %vm454 = vcmp.lt.s32.totalorder %v254, 0
      %v455 = vsub.s32 0, %v254
      %v456 = vsel %vm454, %v455, %v254
      %v457 = vshrl.u32 %v456, 4
      %v458 = vand.u32 %v456, 15
      %v459 = vsub.s32 0, %v458
      %v460 = vsel %vm454, %v459, %v458
      %vm461 = vcmp.lt.s32.totalorder %v255, 0
      %v462 = vsub.s32 0, %v255
      %v463 = vsel %vm461, %v462, %v255
      %v464 = vshrl.u32 %v463, 4
      %v465 = vand.u32 %v463, 15
      %v466 = vsub.s32 0, %v465
      %v467 = vsel %vm461, %v466, %v465
      %vm468 = vcmp.lt.s32.totalorder %v256, 0
      %v469 = vsub.s32 0, %v256
      %v470 = vsel %vm468, %v469, %v256
      %v471 = vshrl.u32 %v470, 4
      %v472 = vand.u32 %v470, 15
      %v473 = vsub.s32 0, %v472
      %v474 = vsel %vm468, %v473, %v472
      %vm475 = vcmp.lt.s32.totalorder %v257, 0
      %v476 = vsub.s32 0, %v257
      %v477 = vsel %vm475, %v476, %v257
      %v478 = vshrl.u32 %v477, 4
      %v479 = vand.u32 %v477, 15
      %v480 = vsub.s32 0, %v479
      %v481 = vsel %vm475, %v480, %v479
      %vm482 = vcmp.ne.s32.totalorder %v264, 0
      %vm483 = vcmp.ne.s32.totalorder %v271, 0
      %vm484 = vcmp.ne.s32.totalorder %v278, 0
      %vm485 = vcmp.ne.s32.totalorder %v285, 0
      %vm486 = vcmp.ne.s32.totalorder %v292, 0
      %vm487 = vcmp.ne.s32.totalorder %v299, 0
      %vm488 = vcmp.ne.s32.totalorder %v306, 0
      %vm489 = vcmp.ne.s32.totalorder %v313, 0
      %vm490 = vcmp.ne.s32.totalorder %v320, 0
      %vm491 = vcmp.ne.s32.totalorder %v327, 0
      %vm492 = vcmp.ne.s32.totalorder %v334, 0
      %vm493 = vcmp.ne.s32.totalorder %v341, 0
      %vm494 = vcmp.ne.s32.totalorder %v348, 0
      %vm495 = vcmp.ne.s32.totalorder %v355, 0
      %vm496 = vcmp.ne.s32.totalorder %v362, 0
      %vm497 = vcmp.ne.s32.totalorder %v369, 0
      %vm498 = vcmp.ne.s32.totalorder %v376, 0
      %vm499 = vcmp.ne.s32.totalorder %v383, 0
      %vm500 = vcmp.ne.s32.totalorder %v390, 0
      %vm501 = vcmp.ne.s32.totalorder %v397, 0
      %vm502 = vcmp.ne.s32.totalorder %v404, 0
      %vm503 = vcmp.ne.s32.totalorder %v411, 0
      %vm504 = vcmp.ne.s32.totalorder %v418, 0
      %vm505 = vcmp.ne.s32.totalorder %v425, 0
      %vm506 = vcmp.ne.s32.totalorder %v432, 0
      %vm507 = vcmp.ne.s32.totalorder %v439, 0
      %vm508 = vcmp.ne.s32.totalorder %v446, 0
      %vm509 = vcmp.ne.s32.totalorder %v453, 0
      %vm510 = vcmp.ne.s32.totalorder %v460, 0
      %vm511 = vcmp.ne.s32.totalorder %v467, 0
      %vm512 = vcmp.ne.s32.totalorder %v474, 0
      %vm513 = vcmp.ne.s32.totalorder %v481, 0
      %vm514 = vcmp.lt.s32.totalorder %v264, 0
      %vm515 = vcmp.lt.s32.totalorder %v271, 0
      %vm516 = vcmp.lt.s32.totalorder %v278, 0
      %vm517 = vcmp.lt.s32.totalorder %v285, 0
      %vm518 = vcmp.lt.s32.totalorder %v292, 0
      %vm519 = vcmp.lt.s32.totalorder %v299, 0
      %vm520 = vcmp.lt.s32.totalorder %v306, 0
      %vm521 = vcmp.lt.s32.totalorder %v313, 0
      %vm522 = vcmp.lt.s32.totalorder %v320, 0
      %vm523 = vcmp.lt.s32.totalorder %v327, 0
      %vm524 = vcmp.lt.s32.totalorder %v334, 0
      %vm525 = vcmp.lt.s32.totalorder %v341, 0
      %vm526 = vcmp.lt.s32.totalorder %v348, 0
      %vm527 = vcmp.lt.s32.totalorder %v355, 0
      %vm528 = vcmp.lt.s32.totalorder %v362, 0
      %vm529 = vcmp.lt.s32.totalorder %v369, 0
      %vm530 = vcmp.lt.s32.totalorder %v376, 0
      %vm531 = vcmp.lt.s32.totalorder %v383, 0
      %vm532 = vcmp.lt.s32.totalorder %v390, 0
      %vm533 = vcmp.lt.s32.totalorder %v397, 0
      %vm534 = vcmp.lt.s32.totalorder %v404, 0
      %vm535 = vcmp.lt.s32.totalorder %v411, 0
      %vm536 = vcmp.lt.s32.totalorder %v418, 0
      %vm537 = vcmp.lt.s32.totalorder %v425, 0
      %vm538 = vcmp.lt.s32.totalorder %v432, 0
      %vm539 = vcmp.lt.s32.totalorder %v439, 0
      %vm540 = vcmp.lt.s32.totalorder %v446, 0
      %vm541 = vcmp.lt.s32.totalorder %v453, 0
      %vm542 = vcmp.lt.s32.totalorder %v460, 0
      %vm543 = vcmp.lt.s32.totalorder %v467, 0
      %vm544 = vcmp.lt.s32.totalorder %v474, 0
      %vm545 = vcmp.lt.s32.totalorder %v481, 0
      %vm546 = vmand %vm514, %vm482
      %vm547 = vmand %vm515, %vm483
      %vm548 = vmand %vm516, %vm484
      %vm549 = vmand %vm517, %vm485
      %vm550 = vmand %vm518, %vm486
      %vm551 = vmand %vm519, %vm487
      %vm552 = vmand %vm520, %vm488
      %vm553 = vmand %vm521, %vm489
      %vm554 = vmand %vm522, %vm490
      %vm555 = vmand %vm523, %vm491
      %vm556 = vmand %vm524, %vm492
      %vm557 = vmand %vm525, %vm493
      %vm558 = vmand %vm526, %vm494
      %vm559 = vmand %vm527, %vm495
      %vm560 = vmand %vm528, %vm496
      %vm561 = vmand %vm529, %vm497
      %vm562 = vmand %vm530, %vm498
      %vm563 = vmand %vm531, %vm499
      %vm564 = vmand %vm532, %vm500
      %vm565 = vmand %vm533, %vm501
      %vm566 = vmand %vm534, %vm502
      %vm567 = vmand %vm535, %vm503
      %vm568 = vmand %vm536, %vm504
      %vm569 = vmand %vm537, %vm505
      %vm570 = vmand %vm538, %vm506
      %vm571 = vmand %vm539, %vm507
      %vm572 = vmand %vm540, %vm508
      %vm573 = vmand %vm541, %vm509
      %vm574 = vmand %vm542, %vm510
      %vm575 = vmand %vm543, %vm511
      %vm576 = vmand %vm544, %vm512
      %vm577 = vmand %vm545, %vm513
      %v578 = vadd.s32 %v264, 16
      %v579 = vadd.s32 %v271, 16
      %v580 = vadd.s32 %v278, 16
      %v581 = vadd.s32 %v285, 16
      %v582 = vadd.s32 %v292, 16
      %v583 = vadd.s32 %v299, 16
      %v584 = vadd.s32 %v306, 16
      %v585 = vadd.s32 %v313, 16
      %v586 = vadd.s32 %v320, 16
      %v587 = vadd.s32 %v327, 16
      %v588 = vadd.s32 %v334, 16
      %v589 = vadd.s32 %v341, 16
      %v590 = vadd.s32 %v348, 16
      %v591 = vadd.s32 %v355, 16
      %v592 = vadd.s32 %v362, 16
      %v593 = vadd.s32 %v369, 16
      %v594 = vadd.s32 %v376, 16
      %v595 = vadd.s32 %v383, 16
      %v596 = vadd.s32 %v390, 16
      %v597 = vadd.s32 %v397, 16
      %v598 = vadd.s32 %v404, 16
      %v599 = vadd.s32 %v411, 16
      %v600 = vadd.s32 %v418, 16
      %v601 = vadd.s32 %v425, 16
      %v602 = vadd.s32 %v432, 16
      %v603 = vadd.s32 %v439, 16
      %v604 = vadd.s32 %v446, 16
      %v605 = vadd.s32 %v453, 16
      %v606 = vadd.s32 %v460, 16
      %v607 = vadd.s32 %v467, 16
      %v608 = vadd.s32 %v474, 16
      %v609 = vadd.s32 %v481, 16
      %v610 = vsel %vm546, %v578, %v264
      %v611 = vsel %vm547, %v579, %v271
      %v612 = vsel %vm548, %v580, %v278
      %v613 = vsel %vm549, %v581, %v285
      %v614 = vsel %vm550, %v582, %v292
      %v615 = vsel %vm551, %v583, %v299
      %v616 = vsel %vm552, %v584, %v306
      %v617 = vsel %vm553, %v585, %v313
      %v618 = vsel %vm554, %v586, %v320
      %v619 = vsel %vm555, %v587, %v327
      %v620 = vsel %vm556, %v588, %v334
      %v621 = vsel %vm557, %v589, %v341
      %v622 = vsel %vm558, %v590, %v348
      %v623 = vsel %vm559, %v591, %v355
      %v624 = vsel %vm560, %v592, %v362
      %v625 = vsel %vm561, %v593, %v369
      %v626 = vsel %vm562, %v594, %v376
      %v627 = vsel %vm563, %v595, %v383
      %v628 = vsel %vm564, %v596, %v390
      %v629 = vsel %vm565, %v597, %v397
      %v630 = vsel %vm566, %v598, %v404
      %v631 = vsel %vm567, %v599, %v411
      %v632 = vsel %vm568, %v600, %v418
      %v633 = vsel %vm569, %v601, %v425
      %v634 = vsel %vm570, %v602, %v432
      %v635 = vsel %vm571, %v603, %v439
      %v636 = vsel %vm572, %v604, %v446
      %v637 = vsel %vm573, %v605, %v453
      %v638 = vsel %vm574, %v606, %v460
      %v639 = vsel %vm575, %v607, %v467
      %v640 = vsel %vm576, %v608, %v474
      %v641 = vsel %vm577, %v609, %v481
      %vm642 = vcmp.ne.s32.totalorder %v610, 0
      %vm643 = vcmp.ne.s32.totalorder %v611, 0
      %vm644 = vcmp.ne.s32.totalorder %v612, 0
      %vm645 = vcmp.ne.s32.totalorder %v613, 0
      %vm646 = vcmp.ne.s32.totalorder %v614, 0
      %vm647 = vcmp.ne.s32.totalorder %v615, 0
      %vm648 = vcmp.ne.s32.totalorder %v616, 0
      %vm649 = vcmp.ne.s32.totalorder %v617, 0
      %vm650 = vcmp.ne.s32.totalorder %v618, 0
      %vm651 = vcmp.ne.s32.totalorder %v619, 0
      %vm652 = vcmp.ne.s32.totalorder %v620, 0
      %vm653 = vcmp.ne.s32.totalorder %v621, 0
      %vm654 = vcmp.ne.s32.totalorder %v622, 0
      %vm655 = vcmp.ne.s32.totalorder %v623, 0
      %vm656 = vcmp.ne.s32.totalorder %v624, 0
      %vm657 = vcmp.ne.s32.totalorder %v625, 0
      %vm658 = vcmp.ne.s32.totalorder %v626, 0
      %vm659 = vcmp.ne.s32.totalorder %v627, 0
      %vm660 = vcmp.ne.s32.totalorder %v628, 0
      %vm661 = vcmp.ne.s32.totalorder %v629, 0
      %vm662 = vcmp.ne.s32.totalorder %v630, 0
      %vm663 = vcmp.ne.s32.totalorder %v631, 0
      %vm664 = vcmp.ne.s32.totalorder %v632, 0
      %vm665 = vcmp.ne.s32.totalorder %v633, 0
      %vm666 = vcmp.ne.s32.totalorder %v634, 0
      %vm667 = vcmp.ne.s32.totalorder %v635, 0
      %vm668 = vcmp.ne.s32.totalorder %v636, 0
      %vm669 = vcmp.ne.s32.totalorder %v637, 0
      %vm670 = vcmp.ne.s32.totalorder %v638, 0
      %vm671 = vcmp.ne.s32.totalorder %v639, 0
      %vm672 = vcmp.ne.s32.totalorder %v640, 0
      %vm673 = vcmp.ne.s32.totalorder %v641, 0
      %vm674 = vcmp.ne.s32.totalorder %v610, 15
      %vm675 = vcmp.ne.s32.totalorder %v611, 15
      %vm676 = vcmp.ne.s32.totalorder %v612, 15
      %vm677 = vcmp.ne.s32.totalorder %v613, 15
      %vm678 = vcmp.ne.s32.totalorder %v614, 15
      %vm679 = vcmp.ne.s32.totalorder %v615, 15
      %vm680 = vcmp.ne.s32.totalorder %v616, 15
      %vm681 = vcmp.ne.s32.totalorder %v617, 15
      %vm682 = vcmp.ne.s32.totalorder %v618, 15
      %vm683 = vcmp.ne.s32.totalorder %v619, 15
      %vm684 = vcmp.ne.s32.totalorder %v620, 15
      %vm685 = vcmp.ne.s32.totalorder %v621, 15
      %vm686 = vcmp.ne.s32.totalorder %v622, 15
      %vm687 = vcmp.ne.s32.totalorder %v623, 15
      %vm688 = vcmp.ne.s32.totalorder %v624, 15
      %vm689 = vcmp.ne.s32.totalorder %v625, 15
      %vm690 = vcmp.ne.s32.totalorder %v626, 15
      %vm691 = vcmp.ne.s32.totalorder %v627, 15
      %vm692 = vcmp.ne.s32.totalorder %v628, 15
      %vm693 = vcmp.ne.s32.totalorder %v629, 15
      %vm694 = vcmp.ne.s32.totalorder %v630, 15
      %vm695 = vcmp.ne.s32.totalorder %v631, 15
      %vm696 = vcmp.ne.s32.totalorder %v632, 15
      %vm697 = vcmp.ne.s32.totalorder %v633, 15
      %vm698 = vcmp.ne.s32.totalorder %v634, 15
      %vm699 = vcmp.ne.s32.totalorder %v635, 15
      %vm700 = vcmp.ne.s32.totalorder %v636, 15
      %vm701 = vcmp.ne.s32.totalorder %v637, 15
      %vm702 = vcmp.ne.s32.totalorder %v638, 15
      %vm703 = vcmp.ne.s32.totalorder %v639, 15
      %vm704 = vcmp.ne.s32.totalorder %v640, 15
      %vm705 = vcmp.ne.s32.totalorder %v641, 15
      %v706 = vld [vmem:[%s206] sm:$0xf]
      %v707 = vld [vmem:[%s206 + $0x4] sm:$0xf]
      %v708 = vld [vmem:[%s206 + $0x8] sm:$0xf]
      %v709 = vld [vmem:[%s206 + $0xc] sm:$0xf]
      %v710 = vld [vmem:[%s206 + $0x10] sm:$0xf]
      %v711 = vld [vmem:[%s206 + $0x14] sm:$0xf]
      %v712 = vld [vmem:[%s206 + $0x18] sm:$0xf]
      %v713 = vld [vmem:[%s206 + $0x1c] sm:$0xf]
      %v714 = vld [vmem:[%s206 + $0x20] sm:$0xf]
      %v715 = vld [vmem:[%s206 + $0x24] sm:$0xf]
      %v716 = vld [vmem:[%s206 + $0x28] sm:$0xf]
      %v717 = vld [vmem:[%s206 + $0x2c] sm:$0xf]
      %v718 = vld [vmem:[%s206 + $0x30] sm:$0xf]
      %v719 = vld [vmem:[%s206 + $0x34] sm:$0xf]
      %v720 = vld [vmem:[%s206 + $0x38] sm:$0xf]
      %v721 = vld [vmem:[%s206 + $0x3c] sm:$0xf]
      %v722 = vld [vmem:[%s206 + $0x40] sm:$0xf]
      %v723 = vld [vmem:[%s206 + $0x44] sm:$0xf]
      %v724 = vld [vmem:[%s206 + $0x48] sm:$0xf]
      %v725 = vld [vmem:[%s206 + $0x4c] sm:$0xf]
      %v726 = vld [vmem:[%s206 + $0x50] sm:$0xf]
      %v727 = vld [vmem:[%s206 + $0x54] sm:$0xf]
      %v728 = vld [vmem:[%s206 + $0x58] sm:$0xf]
      %v729 = vld [vmem:[%s206 + $0x5c] sm:$0xf]
      %v730 = vld [vmem:[%s206 + $0x60] sm:$0xf]
      %v731 = vld [vmem:[%s206 + $0x64] sm:$0xf]
      %v732 = vld [vmem:[%s206 + $0x68] sm:$0xf]
      %v733 = vld [vmem:[%s206 + $0x6c] sm:$0xf]
      %v734 = vld [vmem:[%s206 + $0x70] sm:$0xf]
      %v735 = vld [vmem:[%s206 + $0x74] sm:$0xf]
      %v736 = vld [vmem:[%s206 + $0x78] sm:$0xf]
      %v737 = vld [vmem:[%s206 + $0x7c] sm:$0xf]
      %v738 = vsel %vm642, 1, 0
      %v739 = vsel %vm643, 1, 0
      %v740 = vsel %vm644, 1, 0
      %v741 = vsel %vm645, 1, 0
      %v742 = vsel %vm646, 1, 0
      %v743 = vsel %vm647, 1, 0
      %v744 = vsel %vm648, 1, 0
      %v745 = vsel %vm649, 1, 0
      %v746 = vsel %vm650, 1, 0
      %v747 = vsel %vm651, 1, 0
      %v748 = vsel %vm652, 1, 0
      %v749 = vsel %vm653, 1, 0
      %v750 = vsel %vm654, 1, 0
      %v751 = vsel %vm655, 1, 0
      %v752 = vsel %vm656, 1, 0
      %v753 = vsel %vm657, 1, 0
      %v754 = vsel %vm658, 1, 0
      %v755 = vsel %vm659, 1, 0
      %v756 = vsel %vm660, 1, 0
      %v757 = vsel %vm661, 1, 0
      %v758 = vsel %vm662, 1, 0
      %v759 = vsel %vm663, 1, 0
      %v760 = vsel %vm664, 1, 0
      %v761 = vsel %vm665, 1, 0
      %v762 = vsel %vm666, 1, 0
      %v763 = vsel %vm667, 1, 0
      %v764 = vsel %vm668, 1, 0
      %v765 = vsel %vm669, 1, 0
      %v766 = vsel %vm670, 1, 0
      %v767 = vsel %vm671, 1, 0
      %v768 = vsel %vm672, 1, 0
      %v769 = vsel %vm673, 1, 0
      %vm770 = vcmp.eq.s32.totalorder %v738, 1
      %vm771 = vcmp.eq.s32.totalorder %v739, 1
      %vm772 = vcmp.eq.s32.totalorder %v740, 1
      %vm773 = vcmp.eq.s32.totalorder %v741, 1
      %vm774 = vcmp.eq.s32.totalorder %v742, 1
      %vm775 = vcmp.eq.s32.totalorder %v743, 1
      %vm776 = vcmp.eq.s32.totalorder %v744, 1
      %vm777 = vcmp.eq.s32.totalorder %v745, 1
      %vm778 = vcmp.eq.s32.totalorder %v746, 1
      %vm779 = vcmp.eq.s32.totalorder %v747, 1
      %vm780 = vcmp.eq.s32.totalorder %v748, 1
      %vm781 = vcmp.eq.s32.totalorder %v749, 1
      %vm782 = vcmp.eq.s32.totalorder %v750, 1
      %vm783 = vcmp.eq.s32.totalorder %v751, 1
      %vm784 = vcmp.eq.s32.totalorder %v752, 1
      %vm785 = vcmp.eq.s32.totalorder %v753, 1
      %vm786 = vcmp.eq.s32.totalorder %v754, 1
      %vm787 = vcmp.eq.s32.totalorder %v755, 1
      %vm788 = vcmp.eq.s32.totalorder %v756, 1
      %vm789 = vcmp.eq.s32.totalorder %v757, 1
      %vm790 = vcmp.eq.s32.totalorder %v758, 1
      %vm791 = vcmp.eq.s32.totalorder %v759, 1
      %vm792 = vcmp.eq.s32.totalorder %v760, 1
      %vm793 = vcmp.eq.s32.totalorder %v761, 1
      %vm794 = vcmp.eq.s32.totalorder %v762, 1
      %vm795 = vcmp.eq.s32.totalorder %v763, 1
      %vm796 = vcmp.eq.s32.totalorder %v764, 1
      %vm797 = vcmp.eq.s32.totalorder %v765, 1
      %vm798 = vcmp.eq.s32.totalorder %v766, 1
      %vm799 = vcmp.eq.s32.totalorder %v767, 1
      %vm800 = vcmp.eq.s32.totalorder %v768, 1
      %vm801 = vcmp.eq.s32.totalorder %v769, 1
      %vm802 = vmpackc.low %vm770, %vm770
      %vm803 = vmpackc.low %vm771, %vm771
      %vm804 = vmpackc.low %vm772, %vm772
      %vm805 = vmpackc.low %vm773, %vm773
      %vm806 = vmpackc.low %vm774, %vm774
      %vm807 = vmpackc.low %vm775, %vm775
      %vm808 = vmpackc.low %vm776, %vm776
      %vm809 = vmpackc.low %vm777, %vm777
      %vm810 = vmpackc.low %vm778, %vm778
      %vm811 = vmpackc.low %vm779, %vm779
      %vm812 = vmpackc.low %vm780, %vm780
      %vm813 = vmpackc.low %vm781, %vm781
      %vm814 = vmpackc.low %vm782, %vm782
      %vm815 = vmpackc.low %vm783, %vm783
      %vm816 = vmpackc.low %vm784, %vm784
      %vm817 = vmpackc.low %vm785, %vm785
      %vm818 = vmpackc.low %vm786, %vm786
      %vm819 = vmpackc.low %vm787, %vm787
      %vm820 = vmpackc.low %vm788, %vm788
      %vm821 = vmpackc.low %vm789, %vm789
      %vm822 = vmpackc.low %vm790, %vm790
      %vm823 = vmpackc.low %vm791, %vm791
      %vm824 = vmpackc.low %vm792, %vm792
      %vm825 = vmpackc.low %vm793, %vm793
      %vm826 = vmpackc.low %vm794, %vm794
      %vm827 = vmpackc.low %vm795, %vm795
      %vm828 = vmpackc.low %vm796, %vm796
      %vm829 = vmpackc.low %vm797, %vm797
      %vm830 = vmpackc.low %vm798, %vm798
      %vm831 = vmpackc.low %vm799, %vm799
      %vm832 = vmpackc.low %vm800, %vm800
      %vm833 = vmpackc.low %vm801, %vm801
      %v834 = vsel %vm802, %v706, 0
      %v835 = vsel %vm803, %v707, 0
      %v836 = vsel %vm804, %v708, 0
      %v837 = vsel %vm805, %v709, 0
      %v838 = vsel %vm806, %v710, 0
      %v839 = vsel %vm807, %v711, 0
      %v840 = vsel %vm808, %v712, 0
      %v841 = vsel %vm809, %v713, 0
      %v842 = vsel %vm810, %v714, 0
      %v843 = vsel %vm811, %v715, 0
      %v844 = vsel %vm812, %v716, 0
      %v845 = vsel %vm813, %v717, 0
      %v846 = vsel %vm814, %v718, 0
      %v847 = vsel %vm815, %v719, 0
      %v848 = vsel %vm816, %v720, 0
      %v849 = vsel %vm817, %v721, 0
      %v850 = vsel %vm818, %v722, 0
      %v851 = vsel %vm819, %v723, 0
      %v852 = vsel %vm820, %v724, 0
      %v853 = vsel %vm821, %v725, 0
      %v854 = vsel %vm822, %v726, 0
      %v855 = vsel %vm823, %v727, 0
      %v856 = vsel %vm824, %v728, 0
      %v857 = vsel %vm825, %v729, 0
      %v858 = vsel %vm826, %v730, 0
      %v859 = vsel %vm827, %v731, 0
      %v860 = vsel %vm828, %v732, 0
      %v861 = vsel %vm829, %v733, 0
      %v862 = vsel %vm830, %v734, 0
      %v863 = vsel %vm831, %v735, 0
      %v864 = vsel %vm832, %v736, 0
      %v865 = vsel %vm833, %v737, 0
      %v866 = vld [vmem:[%s210] sm:$0xf]
      %v867 = vld [vmem:[%s210 + $0x4] sm:$0x7]
      %v868 = vld [vmem:[%s206 + $0x80] sm:$0x1]
      %v869 = vld [vmem:[%s210 + $0x4] sm:$0xc]
      %v870 = vld [vmem:[%s210 + $0x8] sm:$0xf]
      %v871 = vld [vmem:[%s210 + $0xc] sm:$0x1]
      %v905 = vunpack.c.l.b16 %v706
      %v906 = vunpack.c.l.b16 %v707
      %v907 = vunpack.c.l.b16 %v708
      %v908 = vunpack.c.l.b16 %v709
      %v909 = vunpack.c.l.b16 %v710
      %v910 = vunpack.c.l.b16 %v711
      %v911 = vunpack.c.l.b16 %v712
      %v912 = vunpack.c.l.b16 %v713
      %v913 = vunpack.c.l.b16 %v714
      %v914 = vunpack.c.l.b16 %v715
      %v915 = vunpack.c.l.b16 %v716
      %v916 = vunpack.c.l.b16 %v717
      %v917 = vunpack.c.l.b16 %v718
      %v918 = vunpack.c.l.b16 %v719
      %v919 = vunpack.c.l.b16 %v720
      %v920 = vunpack.c.l.b16 %v721
      %v921 = vunpack.c.l.b16 %v722
      %v922 = vunpack.c.l.b16 %v723
      %v923 = vunpack.c.l.b16 %v724
      %v924 = vunpack.c.l.b16 %v725
      %v925 = vunpack.c.l.b16 %v726
      %v926 = vunpack.c.l.b16 %v727
      %v927 = vunpack.c.l.b16 %v728
      %v928 = vunpack.c.l.b16 %v729
      %v929 = vunpack.c.l.b16 %v730
      %v930 = vunpack.c.l.b16 %v731
      %v931 = vunpack.c.l.b16 %v732
      %v932 = vunpack.c.l.b16 %v733
      %v933 = vunpack.c.l.b16 %v734
      %v934 = vunpack.c.l.b16 %v735
      %v935 = vunpack.c.l.b16 %v736
      %v936 = vunpack.c.l.b16 %v737
      %v937 = vunpack.c.l.b16 %v868
      %v938 = vpack.c.b16 %v906, %v905
      %v939 = vpack.c.b16 %v908, %v907
      %v940 = vpack.c.b16 %v910, %v909
      %v941 = vpack.c.b16 %v912, %v911
      %v942 = vpack.c.b16 %v914, %v913
      %v943 = vpack.c.b16 %v916, %v915
      %v944 = vpack.c.b16 %v918, %v917
      %v945 = vpack.c.b16 %v920, %v919
      %v946 = vpack.c.b16 %v922, %v921
      %v947 = vpack.c.b16 %v924, %v923
      %v948 = vpack.c.b16 %v926, %v925
      %v949 = vpack.c.b16 %v928, %v927
      %v950 = vpack.c.b16 %v930, %v929
      %v951 = vpack.c.b16 %v932, %v931
      %v952 = vpack.c.b16 %v934, %v933
      %v953 = vpack.c.b16 %v936, %v935
      %v954 = vpack.c.b16 %v937, %v937
      %vm955 = vsmask.f32 7424
      %v957 = vshrl.u32 %v938, 16
      %v959 = vshll.u32 %v938, 16
      %v961 = vrot.slane %v959, 1
      %v962 = vor.u32 %v957, %v961
      %v964 = vshll.u32 %v939, 16
      %v966 = vrot.slane %v964, 1
      %v967 = vsel %vm955, %v962, %v966
      %v968 = vshrl.u32 %v939, 16
      %v970 = vor.u32 %v968, %v966
      %v972 = vshll.u32 %v940, 16
      %v974 = vrot.slane %v972, 1
      %v975 = vsel %vm955, %v970, %v974
      %v976 = vshrl.u32 %v940, 16
      %v978 = vor.u32 %v976, %v974
      %v980 = vshll.u32 %v941, 16
      %v982 = vrot.slane %v980, 1
      %v983 = vsel %vm955, %v978, %v982
      %v984 = vshrl.u32 %v941, 16
      %v986 = vor.u32 %v984, %v982
      %v988 = vshll.u32 %v942, 16
      %v990 = vrot.slane %v988, 1
      %v991 = vsel %vm955, %v986, %v990
      %v992 = vshrl.u32 %v942, 16
      %v994 = vor.u32 %v992, %v990
      %v996 = vshll.u32 %v943, 16
      %v998 = vrot.slane %v996, 1
      %v999 = vsel %vm955, %v994, %v998
      %v1000 = vshrl.u32 %v943, 16
      %v1002 = vor.u32 %v1000, %v998
      %v1004 = vshll.u32 %v944, 16
      %v1006 = vrot.slane %v1004, 1
      %v1007 = vsel %vm955, %v1002, %v1006
      %v1008 = vshrl.u32 %v944, 16
      %v1010 = vor.u32 %v1008, %v1006
      %v1012 = vshll.u32 %v945, 16
      %v1014 = vrot.slane %v1012, 1
      %v1015 = vsel %vm955, %v1010, %v1014
      %v1016 = vshrl.u32 %v945, 16
      %v1018 = vor.u32 %v1016, %v1014
      %v1020 = vshll.u32 %v946, 16
      %v1022 = vrot.slane %v1020, 1
      %v1023 = vsel %vm955, %v1018, %v1022
      %v1024 = vshrl.u32 %v946, 16
      %v1026 = vor.u32 %v1024, %v1022
      %v1028 = vshll.u32 %v947, 16
      %v1030 = vrot.slane %v1028, 1
      %v1031 = vsel %vm955, %v1026, %v1030
      %v1032 = vshrl.u32 %v947, 16
      %v1034 = vor.u32 %v1032, %v1030
      %v1036 = vshll.u32 %v948, 16
      %v1038 = vrot.slane %v1036, 1
      %v1039 = vsel %vm955, %v1034, %v1038
      %v1040 = vshrl.u32 %v948, 16
      %v1042 = vor.u32 %v1040, %v1038
      %v1044 = vshll.u32 %v949, 16
      %v1046 = vrot.slane %v1044, 1
      %v1047 = vsel %vm955, %v1042, %v1046
      %v1048 = vshrl.u32 %v949, 16
      %v1050 = vor.u32 %v1048, %v1046
      %v1052 = vshll.u32 %v950, 16
      %v1054 = vrot.slane %v1052, 1
      %v1055 = vsel %vm955, %v1050, %v1054
      %v1056 = vshrl.u32 %v950, 16
      %v1058 = vor.u32 %v1056, %v1054
      %v1060 = vshll.u32 %v951, 16
      %v1062 = vrot.slane %v1060, 1
      %v1063 = vsel %vm955, %v1058, %v1062
      %v1064 = vshrl.u32 %v951, 16
      %v1066 = vor.u32 %v1064, %v1062
      %v1068 = vshll.u32 %v952, 16
      %v1070 = vrot.slane %v1068, 1
      %v1071 = vsel %vm955, %v1066, %v1070
      %v1072 = vshrl.u32 %v952, 16
      %v1074 = vor.u32 %v1072, %v1070
      %v1076 = vshll.u32 %v953, 16
      %v1078 = vrot.slane %v1076, 1
      %v1079 = vsel %vm955, %v1074, %v1078
      %v1080 = vshrl.u32 %v953, 16
      %v1082 = vor.u32 %v1080, %v1078
      %v1084 = vshll.u32 %v954, 16
      %v1086 = vrot.slane %v1084, 1
      %v1087 = vsel %vm955, %v1082, %v1086
      %v1091 = vunpack.c.l.b16 %v869
      %v1092 = vunpack.c.l.b16 %v870
      %v1093 = vunpack.c.l.b16 %v871
      %v1094 = vpack.c.b16 %v1092, %v1091
      %v1095 = vpack.c.b16 %v1093, %v1093
      %vm1096 = vsmask.f32 5376
      %v1098 = vshrl.u32 %v1094, 16
      %v1100 = vrot.slane %v1098, 2
      %v1101 = vshll.u32 %v1094, 16
      %v1103 = vrot.slane %v1101, 3
      %v1104 = vor.u32 %v1100, %v1103
      %v1106 = vshrl.u32 %v1095, 16
      %v1108 = vrot.slane %v1106, 2
      %v1109 = vshll.u32 %v1095, 16
      %v1111 = vrot.slane %v1109, 3
      %v1112 = vor.u32 %v1108, %v1111
      %v1113 = vsel %vm1096, %v1104, %v1112
      %vm1114 = vcmask 105472
      %v1116 = vsel %vm1114, %v967, 0
      %v1119 = vsel %vm1114, %v975, 0
      %v1122 = vsel %vm1114, %v983, 0
      %v1125 = vsel %vm1114, %v991, 0
      %v1128 = vsel %vm1114, %v999, 0
      %v1131 = vsel %vm1114, %v1007, 0
      %v1134 = vsel %vm1114, %v1015, 0
      %v1137 = vsel %vm1114, %v1023, 0
      %v1140 = vsel %vm1114, %v1031, 0
      %v1143 = vsel %vm1114, %v1039, 0
      %v1146 = vsel %vm1114, %v1047, 0
      %v1149 = vsel %vm1114, %v1055, 0
      %v1152 = vsel %vm1114, %v1063, 0
      %v1155 = vsel %vm1114, %v1071, 0
      %v1158 = vsel %vm1114, %v1079, 0
      %v1161 = vsel %vm1114, %v1087, 0
      %vm1163 = vcmask 1045504
      %vm1164 = vcmask 1046528
      %v1165 = vsel %vm1163, 4294967295, 65535
      %v1166 = vsel %vm1164, %v1165, 0
      %v1168 = vand.u32 %v1113, %v1166
      %1170 = vmatpush.bf16.msra.mxu0 0
      %1171 = vmatpush.bf16.msra.mxu0 0
      %1172 = vmatpush.bf16.msra.mxu0 0
      %1173 = vmatpush.bf16.msra.mxu0 0
      %1174 = vmatpush.bf16.msra.mxu0 0
      %1175 = vmatpush.bf16.msra.mxu0 0
      %1176 = vmatpush.bf16.msra.mxu0 0
      %1177 = vmatpush.bf16.msra.mxu0 %v1168
      %1178 = vmatmul.bf16.gmra.mxu0 %v1116
      %v1179 = vpop.f32.mrf.mxu0
      %v1180 = vadd.f32 0.0, %v1179
      %v1181 = vpop.f32.mrf.mxu0
      %v1182 = vadd.f32 0.0, %v1181
      %1183 = vmatmul.bf16.gmra.mxu0 %v1119
      %v1184 = vpop.f32.mrf.mxu0
      %v1185 = vadd.f32 0.0, %v1184
      %v1186 = vpop.f32.mrf.mxu0
      %v1187 = vadd.f32 0.0, %v1186
      %1188 = vmatmul.bf16.gmra.mxu0 %v1122
      %v1189 = vpop.f32.mrf.mxu0
      %v1190 = vadd.f32 0.0, %v1189
      %v1191 = vpop.f32.mrf.mxu0
      %v1192 = vadd.f32 0.0, %v1191
      %1193 = vmatmul.bf16.gmra.mxu0 %v1125
      %v1194 = vpop.f32.mrf.mxu0
      %v1195 = vadd.f32 0.0, %v1194
      %v1196 = vpop.f32.mrf.mxu0
      %v1197 = vadd.f32 0.0, %v1196
      %1198 = vmatmul.bf16.gmra.mxu0 %v1128
      %v1199 = vpop.f32.mrf.mxu0
      %v1200 = vadd.f32 0.0, %v1199
      %v1201 = vpop.f32.mrf.mxu0
      %v1202 = vadd.f32 0.0, %v1201
      %1203 = vmatmul.bf16.gmra.mxu0 %v1131
      %v1204 = vpop.f32.mrf.mxu0
      %v1205 = vadd.f32 0.0, %v1204
      %v1206 = vpop.f32.mrf.mxu0
      %v1207 = vadd.f32 0.0, %v1206
      %1208 = vmatmul.bf16.gmra.mxu0 %v1134
      %v1209 = vpop.f32.mrf.mxu0
      %v1210 = vadd.f32 0.0, %v1209
      %v1211 = vpop.f32.mrf.mxu0
      %v1212 = vadd.f32 0.0, %v1211
      %1213 = vmatmul.bf16.gmra.mxu0 %v1137
      %v1214 = vpop.f32.mrf.mxu0
      %v1215 = vadd.f32 0.0, %v1214
      %v1216 = vpop.f32.mrf.mxu0
      %v1217 = vadd.f32 0.0, %v1216
      %1218 = vmatmul.bf16.gmra.mxu0 %v1140
      %v1219 = vpop.f32.mrf.mxu0
      %v1220 = vadd.f32 0.0, %v1219
      %v1221 = vpop.f32.mrf.mxu0
      %v1222 = vadd.f32 0.0, %v1221
      %1223 = vmatmul.bf16.gmra.mxu0 %v1143
      %v1224 = vpop.f32.mrf.mxu0
      %v1225 = vadd.f32 0.0, %v1224
      %v1226 = vpop.f32.mrf.mxu0
      %v1227 = vadd.f32 0.0, %v1226
      %1228 = vmatmul.bf16.gmra.mxu0 %v1146
      %v1229 = vpop.f32.mrf.mxu0
      %v1230 = vadd.f32 0.0, %v1229
      %v1231 = vpop.f32.mrf.mxu0
      %v1232 = vadd.f32 0.0, %v1231
      %1233 = vmatmul.bf16.gmra.mxu0 %v1149
      %v1234 = vpop.f32.mrf.mxu0
      %v1235 = vadd.f32 0.0, %v1234
      %v1236 = vpop.f32.mrf.mxu0
      %v1237 = vadd.f32 0.0, %v1236
      %1238 = vmatmul.bf16.gmra.mxu0 %v1152
      %v1239 = vpop.f32.mrf.mxu0
      %v1240 = vadd.f32 0.0, %v1239
      %v1241 = vpop.f32.mrf.mxu0
      %v1242 = vadd.f32 0.0, %v1241
      %1243 = vmatmul.bf16.gmra.mxu0 %v1155
      %v1244 = vpop.f32.mrf.mxu0
      %v1245 = vadd.f32 0.0, %v1244
      %v1246 = vpop.f32.mrf.mxu0
      %v1247 = vadd.f32 0.0, %v1246
      %1248 = vmatmul.bf16.gmra.mxu0 %v1158
      %v1249 = vpop.f32.mrf.mxu0
      %v1250 = vadd.f32 0.0, %v1249
      %v1251 = vpop.f32.mrf.mxu0
      %v1252 = vadd.f32 0.0, %v1251
      %1253 = vmatmul.bf16.gmra.mxu0 %v1161
      %v1254 = vpop.f32.mrf.mxu0
      %v1255 = vadd.f32 0.0, %v1254
      %v1256 = vpop.f32.mrf.mxu0
      %v1257 = vadd.f32 0.0, %v1256
      %1258 = vdwg.mxu0
      %v1291 = vunpack.c.l.b16 %v834
      %v1292 = vunpack.c.l.b16 %v835
      %v1293 = vunpack.c.l.b16 %v836
      %v1294 = vunpack.c.l.b16 %v837
      %v1295 = vunpack.c.l.b16 %v838
      %v1296 = vunpack.c.l.b16 %v839
      %v1297 = vunpack.c.l.b16 %v840
      %v1298 = vunpack.c.l.b16 %v841
      %v1299 = vunpack.c.l.b16 %v842
      %v1300 = vunpack.c.l.b16 %v843
      %v1301 = vunpack.c.l.b16 %v844
      %v1302 = vunpack.c.l.b16 %v845
      %v1303 = vunpack.c.l.b16 %v846
      %v1304 = vunpack.c.l.b16 %v847
      %v1305 = vunpack.c.l.b16 %v848
      %v1306 = vunpack.c.l.b16 %v849
      %v1307 = vunpack.c.l.b16 %v850
      %v1308 = vunpack.c.l.b16 %v851
      %v1309 = vunpack.c.l.b16 %v852
      %v1310 = vunpack.c.l.b16 %v853
      %v1311 = vunpack.c.l.b16 %v854
      %v1312 = vunpack.c.l.b16 %v855
      %v1313 = vunpack.c.l.b16 %v856
      %v1314 = vunpack.c.l.b16 %v857
      %v1315 = vunpack.c.l.b16 %v858
      %v1316 = vunpack.c.l.b16 %v859
      %v1317 = vunpack.c.l.b16 %v860
      %v1318 = vunpack.c.l.b16 %v861
      %v1319 = vunpack.c.l.b16 %v862
      %v1320 = vunpack.c.l.b16 %v863
      %v1321 = vunpack.c.l.b16 %v864
      %v1322 = vunpack.c.l.b16 %v865
      %v1323 = vpack.c.b16 %v1292, %v1291
      %v1324 = vpack.c.b16 %v1294, %v1293
      %v1325 = vpack.c.b16 %v1296, %v1295
      %v1326 = vpack.c.b16 %v1298, %v1297
      %v1327 = vpack.c.b16 %v1300, %v1299
      %v1328 = vpack.c.b16 %v1302, %v1301
      %v1329 = vpack.c.b16 %v1304, %v1303
      %v1330 = vpack.c.b16 %v1306, %v1305
      %v1331 = vpack.c.b16 %v1308, %v1307
      %v1332 = vpack.c.b16 %v1310, %v1309
      %v1333 = vpack.c.b16 %v1312, %v1311
      %v1334 = vpack.c.b16 %v1314, %v1313
      %v1335 = vpack.c.b16 %v1316, %v1315
      %v1336 = vpack.c.b16 %v1318, %v1317
      %v1337 = vpack.c.b16 %v1320, %v1319
      %v1338 = vpack.c.b16 %v1322, %v1321
      %v1341 = vunpack.c.l.b16 %v866
      %v1342 = vunpack.c.l.b16 %v867
      %v1343 = vpack.c.b16 %v1342, %v1341
      %v1345 = vsel %vm1114, %v1323, 0
      %v1348 = vsel %vm1114, %v1324, 0
      %v1351 = vsel %vm1114, %v1325, 0
      %v1354 = vsel %vm1114, %v1326, 0
      %v1357 = vsel %vm1114, %v1327, 0
      %v1360 = vsel %vm1114, %v1328, 0
      %v1363 = vsel %vm1114, %v1329, 0
      %v1366 = vsel %vm1114, %v1330, 0
      %v1369 = vsel %vm1114, %v1331, 0
      %v1372 = vsel %vm1114, %v1332, 0
      %v1375 = vsel %vm1114, %v1333, 0
      %v1378 = vsel %vm1114, %v1334, 0
      %v1381 = vsel %vm1114, %v1335, 0
      %v1384 = vsel %vm1114, %v1336, 0
      %v1387 = vsel %vm1114, %v1337, 0
      %v1390 = vsel %vm1114, %v1338, 0
      %v1393 = vand.u32 %v1343, %v1166
      %1395 = vmatpush.bf16.msra.mxu0 0
      %1396 = vmatpush.bf16.msra.mxu0 0
      %1397 = vmatpush.bf16.msra.mxu0 0
      %1398 = vmatpush.bf16.msra.mxu0 0
      %1399 = vmatpush.bf16.msra.mxu0 0
      %1400 = vmatpush.bf16.msra.mxu0 0
      %1401 = vmatpush.bf16.msra.mxu0 0
      %1402 = vmatpush.bf16.msra.mxu0 %v1393
      %1403 = vmatmul.bf16.gmra.mxu0 %v1345
      %v1404 = vpop.f32.mrf.mxu0
      %v1405 = vadd.f32 %v1180, %v1404
      %v1406 = vpop.f32.mrf.mxu0
      %v1407 = vadd.f32 %v1182, %v1406
      %1408 = vmatmul.bf16.gmra.mxu0 %v1348
      %v1409 = vpop.f32.mrf.mxu0
      %v1410 = vadd.f32 %v1185, %v1409
      %v1411 = vpop.f32.mrf.mxu0
      %v1412 = vadd.f32 %v1187, %v1411
      %1413 = vmatmul.bf16.gmra.mxu0 %v1351
      %v1414 = vpop.f32.mrf.mxu0
      %v1415 = vadd.f32 %v1190, %v1414
      %v1416 = vpop.f32.mrf.mxu0
      %v1417 = vadd.f32 %v1192, %v1416
      %1418 = vmatmul.bf16.gmra.mxu0 %v1354
      %v1419 = vpop.f32.mrf.mxu0
      %v1420 = vadd.f32 %v1195, %v1419
      %v1421 = vpop.f32.mrf.mxu0
      %v1422 = vadd.f32 %v1197, %v1421
      %1423 = vmatmul.bf16.gmra.mxu0 %v1357
      %v1424 = vpop.f32.mrf.mxu0
      %v1425 = vadd.f32 %v1200, %v1424
      %v1426 = vpop.f32.mrf.mxu0
      %v1427 = vadd.f32 %v1202, %v1426
      %1428 = vmatmul.bf16.gmra.mxu0 %v1360
      %v1429 = vpop.f32.mrf.mxu0
      %v1430 = vadd.f32 %v1205, %v1429
      %v1431 = vpop.f32.mrf.mxu0
      %v1432 = vadd.f32 %v1207, %v1431
      %1433 = vmatmul.bf16.gmra.mxu0 %v1363
      %v1434 = vpop.f32.mrf.mxu0
      %v1435 = vadd.f32 %v1210, %v1434
      %v1436 = vpop.f32.mrf.mxu0
      %v1437 = vadd.f32 %v1212, %v1436
      %1438 = vmatmul.bf16.gmra.mxu0 %v1366
      %v1439 = vpop.f32.mrf.mxu0
      %v1440 = vadd.f32 %v1215, %v1439
      %v1441 = vpop.f32.mrf.mxu0
      %v1442 = vadd.f32 %v1217, %v1441
      %1443 = vmatmul.bf16.gmra.mxu0 %v1369
      %v1444 = vpop.f32.mrf.mxu0
      %v1445 = vadd.f32 %v1220, %v1444
      %v1446 = vpop.f32.mrf.mxu0
      %v1447 = vadd.f32 %v1222, %v1446
      %1448 = vmatmul.bf16.gmra.mxu0 %v1372
      %v1449 = vpop.f32.mrf.mxu0
      %v1450 = vadd.f32 %v1225, %v1449
      %v1451 = vpop.f32.mrf.mxu0
      %v1452 = vadd.f32 %v1227, %v1451
      %1453 = vmatmul.bf16.gmra.mxu0 %v1375
      %v1454 = vpop.f32.mrf.mxu0
      %v1455 = vadd.f32 %v1230, %v1454
      %v1456 = vpop.f32.mrf.mxu0
      %v1457 = vadd.f32 %v1232, %v1456
      %1458 = vmatmul.bf16.gmra.mxu0 %v1378
      %v1459 = vpop.f32.mrf.mxu0
      %v1460 = vadd.f32 %v1235, %v1459
      %v1461 = vpop.f32.mrf.mxu0
      %v1462 = vadd.f32 %v1237, %v1461
      %1463 = vmatmul.bf16.gmra.mxu0 %v1381
      %v1464 = vpop.f32.mrf.mxu0
      %v1465 = vadd.f32 %v1240, %v1464
      %v1466 = vpop.f32.mrf.mxu0
      %v1467 = vadd.f32 %v1242, %v1466
      %1468 = vmatmul.bf16.gmra.mxu0 %v1384
      %v1469 = vpop.f32.mrf.mxu0
      %v1470 = vadd.f32 %v1245, %v1469
      %v1471 = vpop.f32.mrf.mxu0
      %v1472 = vadd.f32 %v1247, %v1471
      %1473 = vmatmul.bf16.gmra.mxu0 %v1387
      %v1474 = vpop.f32.mrf.mxu0
      %v1475 = vadd.f32 %v1250, %v1474
      %v1476 = vpop.f32.mrf.mxu0
      %v1477 = vadd.f32 %v1252, %v1476
      %1478 = vmatmul.bf16.gmra.mxu0 %v1390
      %v1479 = vpop.f32.mrf.mxu0
      %v1480 = vadd.f32 %v1255, %v1479
      %v1481 = vpop.f32.mrf.mxu0
      %v1482 = vadd.f32 %v1257, %v1481
      %1483 = vdwg.mxu0
      %v1484 = vld [vmem:[%s206] sm:$0xe]
      %v1485 = vsel %vm674, 1, 0
      %v1486 = vsel %vm675, 1, 0
      %v1487 = vsel %vm676, 1, 0
      %v1488 = vsel %vm677, 1, 0
      %v1489 = vsel %vm678, 1, 0
      %v1490 = vsel %vm679, 1, 0
      %v1491 = vsel %vm680, 1, 0
      %v1492 = vsel %vm681, 1, 0
      %v1493 = vsel %vm682, 1, 0
      %v1494 = vsel %vm683, 1, 0
      %v1495 = vsel %vm684, 1, 0
      %v1496 = vsel %vm685, 1, 0
      %v1497 = vsel %vm686, 1, 0
      %v1498 = vsel %vm687, 1, 0
      %v1499 = vsel %vm688, 1, 0
      %v1500 = vsel %vm689, 1, 0
      %v1501 = vsel %vm690, 1, 0
      %v1502 = vsel %vm691, 1, 0
      %v1503 = vsel %vm692, 1, 0
      %v1504 = vsel %vm693, 1, 0
      %v1505 = vsel %vm694, 1, 0
      %v1506 = vsel %vm695, 1, 0
      %v1507 = vsel %vm696, 1, 0
      %v1508 = vsel %vm697, 1, 0
      %v1509 = vsel %vm698, 1, 0
      %v1510 = vsel %vm699, 1, 0
      %v1511 = vsel %vm700, 1, 0
      %v1512 = vsel %vm701, 1, 0
      %v1513 = vsel %vm702, 1, 0
      %v1514 = vsel %vm703, 1, 0
      %v1515 = vsel %vm704, 1, 0
      %v1516 = vsel %vm705, 1, 0
      %vm1517 = vcmp.eq.s32.totalorder %v1485, 1
      %vm1518 = vcmp.eq.s32.totalorder %v1486, 1
      %vm1519 = vcmp.eq.s32.totalorder %v1487, 1
      %vm1520 = vcmp.eq.s32.totalorder %v1488, 1
      %vm1521 = vcmp.eq.s32.totalorder %v1489, 1
      %vm1522 = vcmp.eq.s32.totalorder %v1490, 1
      %vm1523 = vcmp.eq.s32.totalorder %v1491, 1
      %vm1524 = vcmp.eq.s32.totalorder %v1492, 1
      %vm1525 = vcmp.eq.s32.totalorder %v1493, 1
      %vm1526 = vcmp.eq.s32.totalorder %v1494, 1
      %vm1527 = vcmp.eq.s32.totalorder %v1495, 1
      %vm1528 = vcmp.eq.s32.totalorder %v1496, 1
      %vm1529 = vcmp.eq.s32.totalorder %v1497, 1
      %vm1530 = vcmp.eq.s32.totalorder %v1498, 1
      %vm1531 = vcmp.eq.s32.totalorder %v1499, 1
      %vm1532 = vcmp.eq.s32.totalorder %v1500, 1
      %vm1533 = vcmp.eq.s32.totalorder %v1501, 1
      %vm1534 = vcmp.eq.s32.totalorder %v1502, 1
      %vm1535 = vcmp.eq.s32.totalorder %v1503, 1
      %vm1536 = vcmp.eq.s32.totalorder %v1504, 1
      %vm1537 = vcmp.eq.s32.totalorder %v1505, 1
      %vm1538 = vcmp.eq.s32.totalorder %v1506, 1
      %vm1539 = vcmp.eq.s32.totalorder %v1507, 1
      %vm1540 = vcmp.eq.s32.totalorder %v1508, 1
      %vm1541 = vcmp.eq.s32.totalorder %v1509, 1
      %vm1542 = vcmp.eq.s32.totalorder %v1510, 1
      %vm1543 = vcmp.eq.s32.totalorder %v1511, 1
      %vm1544 = vcmp.eq.s32.totalorder %v1512, 1
      %vm1545 = vcmp.eq.s32.totalorder %v1513, 1
      %vm1546 = vcmp.eq.s32.totalorder %v1514, 1
      %vm1547 = vcmp.eq.s32.totalorder %v1515, 1
      %vm1548 = vcmp.eq.s32.totalorder %v1516, 1
      %vm1549 = vmpackc.low %vm1517, %vm1517
      %vm1550 = vmpackc.low %vm1518, %vm1518
      %vm1551 = vmpackc.low %vm1519, %vm1519
      %vm1552 = vmpackc.low %vm1520, %vm1520
      %vm1553 = vmpackc.low %vm1521, %vm1521
      %vm1554 = vmpackc.low %vm1522, %vm1522
      %vm1555 = vmpackc.low %vm1523, %vm1523
      %vm1556 = vmpackc.low %vm1524, %vm1524
      %vm1557 = vmpackc.low %vm1525, %vm1525
      %vm1558 = vmpackc.low %vm1526, %vm1526
      %vm1559 = vmpackc.low %vm1527, %vm1527
      %vm1560 = vmpackc.low %vm1528, %vm1528
      %vm1561 = vmpackc.low %vm1529, %vm1529
      %vm1562 = vmpackc.low %vm1530, %vm1530
      %vm1563 = vmpackc.low %vm1531, %vm1531
      %vm1564 = vmpackc.low %vm1532, %vm1532
      %vm1565 = vmpackc.low %vm1533, %vm1533
      %vm1566 = vmpackc.low %vm1534, %vm1534
      %vm1567 = vmpackc.low %vm1535, %vm1535
      %vm1568 = vmpackc.low %vm1536, %vm1536
      %vm1569 = vmpackc.low %vm1537, %vm1537
      %vm1570 = vmpackc.low %vm1538, %vm1538
      %vm1571 = vmpackc.low %vm1539, %vm1539
      %vm1572 = vmpackc.low %vm1540, %vm1540
      %vm1573 = vmpackc.low %vm1541, %vm1541
      %vm1574 = vmpackc.low %vm1542, %vm1542
      %vm1575 = vmpackc.low %vm1543, %vm1543
      %vm1576 = vmpackc.low %vm1544, %vm1544
      %vm1577 = vmpackc.low %vm1545, %vm1545
      %vm1578 = vmpackc.low %vm1546, %vm1546
      %vm1579 = vmpackc.low %vm1547, %vm1547
      %vm1580 = vmpackc.low %vm1548, %vm1548
      %v1581 = vsel %vm1549, 65537, 0
      %v1582 = vsel %vm1550, 65537, 0
      %v1583 = vsel %vm1551, 65537, 0
      %v1584 = vsel %vm1552, 65537, 0
      %v1585 = vsel %vm1553, 65537, 0
      %v1586 = vsel %vm1554, 65537, 0
      %v1587 = vsel %vm1555, 65537, 0
      %v1588 = vsel %vm1556, 65537, 0
      %v1589 = vsel %vm1557, 65537, 0
      %v1590 = vsel %vm1558, 65537, 0
      %v1591 = vsel %vm1559, 65537, 0
      %v1592 = vsel %vm1560, 65537, 0
      %v1593 = vsel %vm1561, 65537, 0
      %v1594 = vsel %vm1562, 65537, 0
      %v1595 = vsel %vm1563, 65537, 0
      %v1596 = vsel %vm1564, 65537, 0
      %v1597 = vsel %vm1565, 65537, 0
      %v1598 = vsel %vm1566, 65537, 0
      %v1599 = vsel %vm1567, 65537, 0
      %v1600 = vsel %vm1568, 65537, 0
      %v1601 = vsel %vm1569, 65537, 0
      %v1602 = vsel %vm1570, 65537, 0
      %v1603 = vsel %vm1571, 65537, 0
      %v1604 = vsel %vm1572, 65537, 0
      %v1605 = vsel %vm1573, 65537, 0
      %v1606 = vsel %vm1574, 65537, 0
      %v1607 = vsel %vm1575, 65537, 0
      %v1608 = vsel %vm1576, 65537, 0
      %v1609 = vsel %vm1577, 65537, 0
      %v1610 = vsel %vm1578, 65537, 0
      %v1611 = vsel %vm1579, 65537, 0
      %v1612 = vsel %vm1580, 65537, 0
      %vm1613 = vcmask 1040384
      %vm1614 = vcmask 1044484
      %vm1615 = vmor %vm1613, %vm1614
      %v1616 = vrot.slane %v1581, 7
      %v1617 = vrot.slane %v1616, 4
      %v1618 = vrot.slane %v1582, 7
      %v1619 = vsel %vm1615, %v1617, %v1618
      %v1620 = vrot.slane %v1618, 4
      %v1621 = vrot.slane %v1583, 7
      %v1622 = vsel %vm1615, %v1620, %v1621
      %v1623 = vrot.slane %v1621, 4
      %v1624 = vrot.slane %v1584, 7
      %v1625 = vsel %vm1615, %v1623, %v1624
      %v1626 = vrot.slane %v1624, 4
      %v1627 = vrot.slane %v1585, 7
      %v1628 = vsel %vm1615, %v1626, %v1627
      %v1629 = vrot.slane %v1627, 4
      %v1630 = vrot.slane %v1586, 7
      %v1631 = vsel %vm1615, %v1629, %v1630
      %v1632 = vrot.slane %v1630, 4
      %v1633 = vrot.slane %v1587, 7
      %v1634 = vsel %vm1615, %v1632, %v1633
      %v1635 = vrot.slane %v1633, 4
      %v1636 = vrot.slane %v1588, 7
      %v1637 = vsel %vm1615, %v1635, %v1636
      %v1638 = vrot.slane %v1636, 4
      %v1639 = vrot.slane %v1589, 7
      %v1640 = vsel %vm1615, %v1638, %v1639
      %v1641 = vrot.slane %v1639, 4
      %v1642 = vrot.slane %v1590, 7
      %v1643 = vsel %vm1615, %v1641, %v1642
      %v1644 = vrot.slane %v1642, 4
      %v1645 = vrot.slane %v1591, 7
      %v1646 = vsel %vm1615, %v1644, %v1645
      %v1647 = vrot.slane %v1645, 4
      %v1648 = vrot.slane %v1592, 7
      %v1649 = vsel %vm1615, %v1647, %v1648
      %v1650 = vrot.slane %v1648, 4
      %v1651 = vrot.slane %v1593, 7
      %v1652 = vsel %vm1615, %v1650, %v1651
      %v1653 = vrot.slane %v1651, 4
      %v1654 = vrot.slane %v1594, 7
      %v1655 = vsel %vm1615, %v1653, %v1654
      %v1656 = vrot.slane %v1654, 4
      %v1657 = vrot.slane %v1595, 7
      %v1658 = vsel %vm1615, %v1656, %v1657
      %v1659 = vrot.slane %v1657, 4
      %v1660 = vrot.slane %v1596, 7
      %v1661 = vsel %vm1615, %v1659, %v1660
      %v1662 = vrot.slane %v1660, 4
      %v1663 = vrot.slane %v1597, 7
      %v1664 = vsel %vm1615, %v1662, %v1663
      %v1665 = vrot.slane %v1663, 4
      %v1666 = vrot.slane %v1598, 7
      %v1667 = vsel %vm1615, %v1665, %v1666
      %v1668 = vrot.slane %v1666, 4
      %v1669 = vrot.slane %v1599, 7
      %v1670 = vsel %vm1615, %v1668, %v1669
      %v1671 = vrot.slane %v1669, 4
      %v1672 = vrot.slane %v1600, 7
      %v1673 = vsel %vm1615, %v1671, %v1672
      %v1674 = vrot.slane %v1672, 4
      %v1675 = vrot.slane %v1601, 7
      %v1676 = vsel %vm1615, %v1674, %v1675
      %v1677 = vrot.slane %v1675, 4
      %v1678 = vrot.slane %v1602, 7
      %v1679 = vsel %vm1615, %v1677, %v1678
      %v1680 = vrot.slane %v1678, 4
      %v1681 = vrot.slane %v1603, 7
      %v1682 = vsel %vm1615, %v1680, %v1681
      %v1683 = vrot.slane %v1681, 4
      %v1684 = vrot.slane %v1604, 7
      %v1685 = vsel %vm1615, %v1683, %v1684
      %v1686 = vrot.slane %v1684, 4
      %v1687 = vrot.slane %v1605, 7
      %v1688 = vsel %vm1615, %v1686, %v1687
      %v1689 = vrot.slane %v1687, 4
      %v1690 = vrot.slane %v1606, 7
      %v1691 = vsel %vm1615, %v1689, %v1690
      %v1692 = vrot.slane %v1690, 4
      %v1693 = vrot.slane %v1607, 7
      %v1694 = vsel %vm1615, %v1692, %v1693
      %v1695 = vrot.slane %v1693, 4
      %v1696 = vrot.slane %v1608, 7
      %v1697 = vsel %vm1615, %v1695, %v1696
      %v1698 = vrot.slane %v1696, 4
      %v1699 = vrot.slane %v1609, 7
      %v1700 = vsel %vm1615, %v1698, %v1699
      %v1701 = vrot.slane %v1699, 4
      %v1702 = vrot.slane %v1610, 7
      %v1703 = vsel %vm1615, %v1701, %v1702
      %v1704 = vrot.slane %v1702, 4
      %v1705 = vrot.slane %v1611, 7
      %v1706 = vsel %vm1615, %v1704, %v1705
      %v1707 = vrot.slane %v1705, 4
      %v1708 = vrot.slane %v1612, 7
      %v1709 = vsel %vm1615, %v1707, %v1708
      %v1710 = vrot.slane %v1708, 4
      %v1711 = vunpack.c.l.b16 %v1616
      %v1712 = vunpack.c.h.b16 %v1616
      %v1713 = vunpack.c.l.b16 0
      %v1714 = vunpack.c.h.b16 0
      %vm1715 = vcmp.ne.s32.totalorder %v1711, %v1713
      %vm1716 = vcmp.ne.s32.totalorder %v1712, %v1714
      %vm1717 = vmpackc.low %vm1716, %vm1715
      %v1718 = vunpack.c.l.b16 %v1619
      %v1719 = vunpack.c.h.b16 %v1619
      %v1720 = vunpack.c.l.b16 0
      %v1721 = vunpack.c.h.b16 0
      %vm1722 = vcmp.ne.s32.totalorder %v1718, %v1720
      %vm1723 = vcmp.ne.s32.totalorder %v1719, %v1721
      %vm1724 = vmpackc.low %vm1723, %vm1722
      %v1725 = vunpack.c.l.b16 %v1622
      %v1726 = vunpack.c.h.b16 %v1622
      %v1727 = vunpack.c.l.b16 0
      %v1728 = vunpack.c.h.b16 0
      %vm1729 = vcmp.ne.s32.totalorder %v1725, %v1727
      %vm1730 = vcmp.ne.s32.totalorder %v1726, %v1728
      %vm1731 = vmpackc.low %vm1730, %vm1729
      %v1732 = vunpack.c.l.b16 %v1625
      %v1733 = vunpack.c.h.b16 %v1625
      %v1734 = vunpack.c.l.b16 0
      %v1735 = vunpack.c.h.b16 0
      %vm1736 = vcmp.ne.s32.totalorder %v1732, %v1734
      %vm1737 = vcmp.ne.s32.totalorder %v1733, %v1735
      %vm1738 = vmpackc.low %vm1737, %vm1736
      %v1739 = vunpack.c.l.b16 %v1628
      %v1740 = vunpack.c.h.b16 %v1628
      %v1741 = vunpack.c.l.b16 0
      %v1742 = vunpack.c.h.b16 0
      %vm1743 = vcmp.ne.s32.totalorder %v1739, %v1741
      %vm1744 = vcmp.ne.s32.totalorder %v1740, %v1742
      %vm1745 = vmpackc.low %vm1744, %vm1743
      %v1746 = vunpack.c.l.b16 %v1631
      %v1747 = vunpack.c.h.b16 %v1631
      %v1748 = vunpack.c.l.b16 0
      %v1749 = vunpack.c.h.b16 0
      %vm1750 = vcmp.ne.s32.totalorder %v1746, %v1748
      %vm1751 = vcmp.ne.s32.totalorder %v1747, %v1749
      %vm1752 = vmpackc.low %vm1751, %vm1750
      %v1753 = vunpack.c.l.b16 %v1634
      %v1754 = vunpack.c.h.b16 %v1634
      %v1755 = vunpack.c.l.b16 0
      %v1756 = vunpack.c.h.b16 0
      %vm1757 = vcmp.ne.s32.totalorder %v1753, %v1755
      %vm1758 = vcmp.ne.s32.totalorder %v1754, %v1756
      %vm1759 = vmpackc.low %vm1758, %vm1757
      %v1760 = vunpack.c.l.b16 %v1637
      %v1761 = vunpack.c.h.b16 %v1637
      %v1762 = vunpack.c.l.b16 0
      %v1763 = vunpack.c.h.b16 0
      %vm1764 = vcmp.ne.s32.totalorder %v1760, %v1762
      %vm1765 = vcmp.ne.s32.totalorder %v1761, %v1763
      %vm1766 = vmpackc.low %vm1765, %vm1764
      %v1767 = vunpack.c.l.b16 %v1640
      %v1768 = vunpack.c.h.b16 %v1640
      %v1769 = vunpack.c.l.b16 0
      %v1770 = vunpack.c.h.b16 0
      %vm1771 = vcmp.ne.s32.totalorder %v1767, %v1769
      %vm1772 = vcmp.ne.s32.totalorder %v1768, %v1770
      %vm1773 = vmpackc.low %vm1772, %vm1771
      %v1774 = vunpack.c.l.b16 %v1643
      %v1775 = vunpack.c.h.b16 %v1643
      %v1776 = vunpack.c.l.b16 0
      %v1777 = vunpack.c.h.b16 0
      %vm1778 = vcmp.ne.s32.totalorder %v1774, %v1776
      %vm1779 = vcmp.ne.s32.totalorder %v1775, %v1777
      %vm1780 = vmpackc.low %vm1779, %vm1778
      %v1781 = vunpack.c.l.b16 %v1646
      %v1782 = vunpack.c.h.b16 %v1646
      %v1783 = vunpack.c.l.b16 0
      %v1784 = vunpack.c.h.b16 0
      %vm1785 = vcmp.ne.s32.totalorder %v1781, %v1783
      %vm1786 = vcmp.ne.s32.totalorder %v1782, %v1784
      %vm1787 = vmpackc.low %vm1786, %vm1785
      %v1788 = vunpack.c.l.b16 %v1649
      %v1789 = vunpack.c.h.b16 %v1649
      %v1790 = vunpack.c.l.b16 0
      %v1791 = vunpack.c.h.b16 0
      %vm1792 = vcmp.ne.s32.totalorder %v1788, %v1790
      %vm1793 = vcmp.ne.s32.totalorder %v1789, %v1791
      %vm1794 = vmpackc.low %vm1793, %vm1792
      %v1795 = vunpack.c.l.b16 %v1652
      %v1796 = vunpack.c.h.b16 %v1652
      %v1797 = vunpack.c.l.b16 0
      %v1798 = vunpack.c.h.b16 0
      %vm1799 = vcmp.ne.s32.totalorder %v1795, %v1797
      %vm1800 = vcmp.ne.s32.totalorder %v1796, %v1798
      %vm1801 = vmpackc.low %vm1800, %vm1799
      %v1802 = vunpack.c.l.b16 %v1655
      %v1803 = vunpack.c.h.b16 %v1655
      %v1804 = vunpack.c.l.b16 0
      %v1805 = vunpack.c.h.b16 0
      %vm1806 = vcmp.ne.s32.totalorder %v1802, %v1804
      %vm1807 = vcmp.ne.s32.totalorder %v1803, %v1805
      %vm1808 = vmpackc.low %vm1807, %vm1806
      %v1809 = vunpack.c.l.b16 %v1658
      %v1810 = vunpack.c.h.b16 %v1658
      %v1811 = vunpack.c.l.b16 0
      %v1812 = vunpack.c.h.b16 0
      %vm1813 = vcmp.ne.s32.totalorder %v1809, %v1811
      %vm1814 = vcmp.ne.s32.totalorder %v1810, %v1812
      %vm1815 = vmpackc.low %vm1814, %vm1813
      %v1816 = vunpack.c.l.b16 %v1661
      %v1817 = vunpack.c.h.b16 %v1661
      %v1818 = vunpack.c.l.b16 0
      %v1819 = vunpack.c.h.b16 0
      %vm1820 = vcmp.ne.s32.totalorder %v1816, %v1818
      %vm1821 = vcmp.ne.s32.totalorder %v1817, %v1819
      %vm1822 = vmpackc.low %vm1821, %vm1820
      %v1823 = vunpack.c.l.b16 %v1664
      %v1824 = vunpack.c.h.b16 %v1664
      %v1825 = vunpack.c.l.b16 0
      %v1826 = vunpack.c.h.b16 0
      %vm1827 = vcmp.ne.s32.totalorder %v1823, %v1825
      %vm1828 = vcmp.ne.s32.totalorder %v1824, %v1826
      %vm1829 = vmpackc.low %vm1828, %vm1827
      %v1830 = vunpack.c.l.b16 %v1667
      %v1831 = vunpack.c.h.b16 %v1667
      %v1832 = vunpack.c.l.b16 0
      %v1833 = vunpack.c.h.b16 0
      %vm1834 = vcmp.ne.s32.totalorder %v1830, %v1832
      %vm1835 = vcmp.ne.s32.totalorder %v1831, %v1833
      %vm1836 = vmpackc.low %vm1835, %vm1834
      %v1837 = vunpack.c.l.b16 %v1670
      %v1838 = vunpack.c.h.b16 %v1670
      %v1839 = vunpack.c.l.b16 0
      %v1840 = vunpack.c.h.b16 0
      %vm1841 = vcmp.ne.s32.totalorder %v1837, %v1839
      %vm1842 = vcmp.ne.s32.totalorder %v1838, %v1840
      %vm1843 = vmpackc.low %vm1842, %vm1841
      %v1844 = vunpack.c.l.b16 %v1673
      %v1845 = vunpack.c.h.b16 %v1673
      %v1846 = vunpack.c.l.b16 0
      %v1847 = vunpack.c.h.b16 0
      %vm1848 = vcmp.ne.s32.totalorder %v1844, %v1846
      %vm1849 = vcmp.ne.s32.totalorder %v1845, %v1847
      %vm1850 = vmpackc.low %vm1849, %vm1848
      %v1851 = vunpack.c.l.b16 %v1676
      %v1852 = vunpack.c.h.b16 %v1676
      %v1853 = vunpack.c.l.b16 0
      %v1854 = vunpack.c.h.b16 0
      %vm1855 = vcmp.ne.s32.totalorder %v1851, %v1853
      %vm1856 = vcmp.ne.s32.totalorder %v1852, %v1854
      %vm1857 = vmpackc.low %vm1856, %vm1855
      %v1858 = vunpack.c.l.b16 %v1679
      %v1859 = vunpack.c.h.b16 %v1679
      %v1860 = vunpack.c.l.b16 0
      %v1861 = vunpack.c.h.b16 0
      %vm1862 = vcmp.ne.s32.totalorder %v1858, %v1860
      %vm1863 = vcmp.ne.s32.totalorder %v1859, %v1861
      %vm1864 = vmpackc.low %vm1863, %vm1862
      %v1865 = vunpack.c.l.b16 %v1682
      %v1866 = vunpack.c.h.b16 %v1682
      %v1867 = vunpack.c.l.b16 0
      %v1868 = vunpack.c.h.b16 0
      %vm1869 = vcmp.ne.s32.totalorder %v1865, %v1867
      %vm1870 = vcmp.ne.s32.totalorder %v1866, %v1868
      %vm1871 = vmpackc.low %vm1870, %vm1869
      %v1872 = vunpack.c.l.b16 %v1685
      %v1873 = vunpack.c.h.b16 %v1685
      %v1874 = vunpack.c.l.b16 0
      %v1875 = vunpack.c.h.b16 0
      %vm1876 = vcmp.ne.s32.totalorder %v1872, %v1874
      %vm1877 = vcmp.ne.s32.totalorder %v1873, %v1875
      %vm1878 = vmpackc.low %vm1877, %vm1876
      %v1879 = vunpack.c.l.b16 %v1688
      %v1880 = vunpack.c.h.b16 %v1688
      %v1881 = vunpack.c.l.b16 0
      %v1882 = vunpack.c.h.b16 0
      %vm1883 = vcmp.ne.s32.totalorder %v1879, %v1881
      %vm1884 = vcmp.ne.s32.totalorder %v1880, %v1882
      %vm1885 = vmpackc.low %vm1884, %vm1883
      %v1886 = vunpack.c.l.b16 %v1691
      %v1887 = vunpack.c.h.b16 %v1691
      %v1888 = vunpack.c.l.b16 0
      %v1889 = vunpack.c.h.b16 0
      %vm1890 = vcmp.ne.s32.totalorder %v1886, %v1888
      %vm1891 = vcmp.ne.s32.totalorder %v1887, %v1889
      %vm1892 = vmpackc.low %vm1891, %vm1890
      %v1893 = vunpack.c.l.b16 %v1694
      %v1894 = vunpack.c.h.b16 %v1694
      %v1895 = vunpack.c.l.b16 0
      %v1896 = vunpack.c.h.b16 0
      %vm1897 = vcmp.ne.s32.totalorder %v1893, %v1895
      %vm1898 = vcmp.ne.s32.totalorder %v1894, %v1896
      %vm1899 = vmpackc.low %vm1898, %vm1897
      %v1900 = vunpack.c.l.b16 %v1697
      %v1901 = vunpack.c.h.b16 %v1697
      %v1902 = vunpack.c.l.b16 0
      %v1903 = vunpack.c.h.b16 0
      %vm1904 = vcmp.ne.s32.totalorder %v1900, %v1902
      %vm1905 = vcmp.ne.s32.totalorder %v1901, %v1903
      %vm1906 = vmpackc.low %vm1905, %vm1904
      %v1907 = vunpack.c.l.b16 %v1700
      %v1908 = vunpack.c.h.b16 %v1700
      %v1909 = vunpack.c.l.b16 0
      %v1910 = vunpack.c.h.b16 0
      %vm1911 = vcmp.ne.s32.totalorder %v1907, %v1909
      %vm1912 = vcmp.ne.s32.totalorder %v1908, %v1910
      %vm1913 = vmpackc.low %vm1912, %vm1911
      %v1914 = vunpack.c.l.b16 %v1703
      %v1915 = vunpack.c.h.b16 %v1703
      %v1916 = vunpack.c.l.b16 0
      %v1917 = vunpack.c.h.b16 0
      %vm1918 = vcmp.ne.s32.totalorder %v1914, %v1916
      %vm1919 = vcmp.ne.s32.totalorder %v1915, %v1917
      %vm1920 = vmpackc.low %vm1919, %vm1918
      %v1921 = vunpack.c.l.b16 %v1706
      %v1922 = vunpack.c.h.b16 %v1706
      %v1923 = vunpack.c.l.b16 0
      %v1924 = vunpack.c.h.b16 0
      %vm1925 = vcmp.ne.s32.totalorder %v1921, %v1923
      %vm1926 = vcmp.ne.s32.totalorder %v1922, %v1924
      %vm1927 = vmpackc.low %vm1926, %vm1925
      %v1928 = vunpack.c.l.b16 %v1709
      %v1929 = vunpack.c.h.b16 %v1709
      %v1930 = vunpack.c.l.b16 0
      %v1931 = vunpack.c.h.b16 0
      %vm1932 = vcmp.ne.s32.totalorder %v1928, %v1930
      %vm1933 = vcmp.ne.s32.totalorder %v1929, %v1931
      %vm1934 = vmpackc.low %vm1933, %vm1932
      %v1935 = vunpack.c.l.b16 %v1710
      %v1936 = vunpack.c.h.b16 %v1710
      %v1937 = vunpack.c.l.b16 0
      %v1938 = vunpack.c.h.b16 0
      %vm1939 = vcmp.ne.s32.totalorder %v1935, %v1937
      %vm1940 = vcmp.ne.s32.totalorder %v1936, %v1938
      %vm1941 = vmpackc.low %vm1940, %vm1939
      %v1942 = vsel %vm1717, %v1484, 0
      %v1943 = vsel %vm1724, %v707, 0
      %v1944 = vsel %vm1731, %v708, 0
      %v1945 = vsel %vm1738, %v709, 0
      %v1946 = vsel %vm1745, %v710, 0
      %v1947 = vsel %vm1752, %v711, 0
      %v1948 = vsel %vm1759, %v712, 0
      %v1949 = vsel %vm1766, %v713, 0
      %v1950 = vsel %vm1773, %v714, 0
      %v1951 = vsel %vm1780, %v715, 0
      %v1952 = vsel %vm1787, %v716, 0
      %v1953 = vsel %vm1794, %v717, 0
      %v1954 = vsel %vm1801, %v718, 0
      %v1955 = vsel %vm1808, %v719, 0
      %v1956 = vsel %vm1815, %v720, 0
      %v1957 = vsel %vm1822, %v721, 0
      %v1958 = vsel %vm1829, %v722, 0
      %v1959 = vsel %vm1836, %v723, 0
      %v1960 = vsel %vm1843, %v724, 0
      %v1961 = vsel %vm1850, %v725, 0
      %v1962 = vsel %vm1857, %v726, 0
      %v1963 = vsel %vm1864, %v727, 0
      %v1964 = vsel %vm1871, %v728, 0
      %v1965 = vsel %vm1878, %v729, 0
      %v1966 = vsel %vm1885, %v730, 0
      %v1967 = vsel %vm1892, %v731, 0
      %v1968 = vsel %vm1899, %v732, 0
      %v1969 = vsel %vm1906, %v733, 0
      %v1970 = vsel %vm1913, %v734, 0
      %v1971 = vsel %vm1920, %v735, 0
      %v1972 = vsel %vm1927, %v736, 0
      %v1973 = vsel %vm1934, %v737, 0
      %v1974 = vsel %vm1941, %v868, 0
      %v1975 = vld [vmem:[%s210 + $0xc] sm:$0xe]
      %v1976 = vld [vmem:[%s210 + $0x10] sm:$0xf]
      %v2010 = vunpack.c.l.b16 %v1942
      %v2011 = vunpack.c.l.b16 %v1943
      %v2012 = vunpack.c.l.b16 %v1944
      %v2013 = vunpack.c.l.b16 %v1945
      %v2014 = vunpack.c.l.b16 %v1946
      %v2015 = vunpack.c.l.b16 %v1947
      %v2016 = vunpack.c.l.b16 %v1948
      %v2017 = vunpack.c.l.b16 %v1949
      %v2018 = vunpack.c.l.b16 %v1950
      %v2019 = vunpack.c.l.b16 %v1951
      %v2020 = vunpack.c.l.b16 %v1952
      %v2021 = vunpack.c.l.b16 %v1953
      %v2022 = vunpack.c.l.b16 %v1954
      %v2023 = vunpack.c.l.b16 %v1955
      %v2024 = vunpack.c.l.b16 %v1956
      %v2025 = vunpack.c.l.b16 %v1957
      %v2026 = vunpack.c.l.b16 %v1958
      %v2027 = vunpack.c.l.b16 %v1959
      %v2028 = vunpack.c.l.b16 %v1960
      %v2029 = vunpack.c.l.b16 %v1961
      %v2030 = vunpack.c.l.b16 %v1962
      %v2031 = vunpack.c.l.b16 %v1963
      %v2032 = vunpack.c.l.b16 %v1964
      %v2033 = vunpack.c.l.b16 %v1965
      %v2034 = vunpack.c.l.b16 %v1966
      %v2035 = vunpack.c.l.b16 %v1967
      %v2036 = vunpack.c.l.b16 %v1968
      %v2037 = vunpack.c.l.b16 %v1969
      %v2038 = vunpack.c.l.b16 %v1970
      %v2039 = vunpack.c.l.b16 %v1971
      %v2040 = vunpack.c.l.b16 %v1972
      %v2041 = vunpack.c.l.b16 %v1973
      %v2042 = vunpack.c.l.b16 %v1974
      %v2043 = vpack.c.b16 %v2011, %v2010
      %v2044 = vpack.c.b16 %v2013, %v2012
      %v2045 = vpack.c.b16 %v2015, %v2014
      %v2046 = vpack.c.b16 %v2017, %v2016
      %v2047 = vpack.c.b16 %v2019, %v2018
      %v2048 = vpack.c.b16 %v2021, %v2020
      %v2049 = vpack.c.b16 %v2023, %v2022
      %v2050 = vpack.c.b16 %v2025, %v2024
      %v2051 = vpack.c.b16 %v2027, %v2026
      %v2052 = vpack.c.b16 %v2029, %v2028
      %v2053 = vpack.c.b16 %v2031, %v2030
      %v2054 = vpack.c.b16 %v2033, %v2032
      %v2055 = vpack.c.b16 %v2035, %v2034
      %v2056 = vpack.c.b16 %v2037, %v2036
      %v2057 = vpack.c.b16 %v2039, %v2038
      %v2058 = vpack.c.b16 %v2041, %v2040
      %v2059 = vpack.c.b16 %v2042, %v2042
      %vm2060 = vcmask 1046528
      %v2061 = vrot.slane %v2043, 1
      %v2062 = vrot.slane %v2044, 1
      %v2063 = vsel %vm2060, %v2061, %v2062
      %v2064 = vrot.slane %v2045, 1
      %v2065 = vsel %vm2060, %v2062, %v2064
      %v2066 = vrot.slane %v2046, 1
      %v2067 = vsel %vm2060, %v2064, %v2066
      %v2068 = vrot.slane %v2047, 1
      %v2069 = vsel %vm2060, %v2066, %v2068
      %v2070 = vrot.slane %v2048, 1
      %v2071 = vsel %vm2060, %v2068, %v2070
      %v2072 = vrot.slane %v2049, 1
      %v2073 = vsel %vm2060, %v2070, %v2072
      %v2074 = vrot.slane %v2050, 1
      %v2075 = vsel %vm2060, %v2072, %v2074
      %v2076 = vrot.slane %v2051, 1
      %v2077 = vsel %vm2060, %v2074, %v2076
      %v2078 = vrot.slane %v2052, 1
      %v2079 = vsel %vm2060, %v2076, %v2078
      %v2080 = vrot.slane %v2053, 1
      %v2081 = vsel %vm2060, %v2078, %v2080
      %v2082 = vrot.slane %v2054, 1
      %v2083 = vsel %vm2060, %v2080, %v2082
      %v2084 = vrot.slane %v2055, 1
      %v2085 = vsel %vm2060, %v2082, %v2084
      %v2086 = vrot.slane %v2056, 1
      %v2087 = vsel %vm2060, %v2084, %v2086
      %v2088 = vrot.slane %v2057, 1
      %v2089 = vsel %vm2060, %v2086, %v2088
      %v2090 = vrot.slane %v2058, 1
      %v2091 = vsel %vm2060, %v2088, %v2090
      %v2092 = vrot.slane %v2059, 1
      %v2093 = vsel %vm2060, %v2090, %v2092
      %v2096 = vunpack.c.l.b16 %v1975
      %v2097 = vunpack.c.l.b16 %v1976
      %v2098 = vpack.c.b16 %v2097, %v2096
      %v2099 = vrot.slane %v2098, 1
      %v2101 = vsel %vm1114, %v2063, 0
      %v2104 = vsel %vm1114, %v2065, 0
      %v2107 = vsel %vm1114, %v2067, 0
      %v2110 = vsel %vm1114, %v2069, 0
      %v2113 = vsel %vm1114, %v2071, 0
      %v2116 = vsel %vm1114, %v2073, 0
      %v2119 = vsel %vm1114, %v2075, 0
      %v2122 = vsel %vm1114, %v2077, 0
      %v2125 = vsel %vm1114, %v2079, 0
      %v2128 = vsel %vm1114, %v2081, 0
      %v2131 = vsel %vm1114, %v2083, 0
      %v2134 = vsel %vm1114, %v2085, 0
      %v2137 = vsel %vm1114, %v2087, 0
      %v2140 = vsel %vm1114, %v2089, 0
      %v2143 = vsel %vm1114, %v2091, 0
      %v2146 = vsel %vm1114, %v2093, 0
      %v2149 = vand.u32 %v2099, %v1166
      %2151 = vmatpush.bf16.msra.mxu0 0
      %2152 = vmatpush.bf16.msra.mxu0 0
      %2153 = vmatpush.bf16.msra.mxu0 0
      %2154 = vmatpush.bf16.msra.mxu0 0
      %2155 = vmatpush.bf16.msra.mxu0 0
      %2156 = vmatpush.bf16.msra.mxu0 0
      %2157 = vmatpush.bf16.msra.mxu0 0
      %2158 = vmatpush.bf16.msra.mxu0 %v2149
      %2159 = vmatmul.bf16.gmra.mxu0 %v2101
      %v2160 = vpop.f32.mrf.mxu0
      %v2161 = vadd.f32 0.0, %v2160
      %v2162 = vpop.f32.mrf.mxu0
      %v2163 = vadd.f32 0.0, %v2162
      %2164 = vmatmul.bf16.gmra.mxu0 %v2104
      %v2165 = vpop.f32.mrf.mxu0
      %v2166 = vadd.f32 0.0, %v2165
      %v2167 = vpop.f32.mrf.mxu0
      %v2168 = vadd.f32 0.0, %v2167
      %2169 = vmatmul.bf16.gmra.mxu0 %v2107
      %v2170 = vpop.f32.mrf.mxu0
      %v2171 = vadd.f32 0.0, %v2170
      %v2172 = vpop.f32.mrf.mxu0
      %v2173 = vadd.f32 0.0, %v2172
      %2174 = vmatmul.bf16.gmra.mxu0 %v2110
      %v2175 = vpop.f32.mrf.mxu0
      %v2176 = vadd.f32 0.0, %v2175
      %v2177 = vpop.f32.mrf.mxu0
      %v2178 = vadd.f32 0.0, %v2177
      %2179 = vmatmul.bf16.gmra.mxu0 %v2113
      %v2180 = vpop.f32.mrf.mxu0
      %v2181 = vadd.f32 0.0, %v2180
      %v2182 = vpop.f32.mrf.mxu0
      %v2183 = vadd.f32 0.0, %v2182
      %2184 = vmatmul.bf16.gmra.mxu0 %v2116
      %v2185 = vpop.f32.mrf.mxu0
      %v2186 = vadd.f32 0.0, %v2185
      %v2187 = vpop.f32.mrf.mxu0
      %v2188 = vadd.f32 0.0, %v2187
      %2189 = vmatmul.bf16.gmra.mxu0 %v2119
      %v2190 = vpop.f32.mrf.mxu0
      %v2191 = vadd.f32 0.0, %v2190
      %v2192 = vpop.f32.mrf.mxu0
      %v2193 = vadd.f32 0.0, %v2192
      %2194 = vmatmul.bf16.gmra.mxu0 %v2122
      %v2195 = vpop.f32.mrf.mxu0
      %v2196 = vadd.f32 0.0, %v2195
      %v2197 = vpop.f32.mrf.mxu0
      %v2198 = vadd.f32 0.0, %v2197
      %2199 = vmatmul.bf16.gmra.mxu0 %v2125
      %v2200 = vpop.f32.mrf.mxu0
      %v2201 = vadd.f32 0.0, %v2200
      %v2202 = vpop.f32.mrf.mxu0
      %v2203 = vadd.f32 0.0, %v2202
      %2204 = vmatmul.bf16.gmra.mxu0 %v2128
      %v2205 = vpop.f32.mrf.mxu0
      %v2206 = vadd.f32 0.0, %v2205
      %v2207 = vpop.f32.mrf.mxu0
      %v2208 = vadd.f32 0.0, %v2207
      %2209 = vmatmul.bf16.gmra.mxu0 %v2131
      %v2210 = vpop.f32.mrf.mxu0
      %v2211 = vadd.f32 0.0, %v2210
      %v2212 = vpop.f32.mrf.mxu0
      %v2213 = vadd.f32 0.0, %v2212
      %2214 = vmatmul.bf16.gmra.mxu0 %v2134
      %v2215 = vpop.f32.mrf.mxu0
      %v2216 = vadd.f32 0.0, %v2215
      %v2217 = vpop.f32.mrf.mxu0
      %v2218 = vadd.f32 0.0, %v2217
      %2219 = vmatmul.bf16.gmra.mxu0 %v2137
      %v2220 = vpop.f32.mrf.mxu0
      %v2221 = vadd.f32 0.0, %v2220
      %v2222 = vpop.f32.mrf.mxu0
      %v2223 = vadd.f32 0.0, %v2222
      %2224 = vmatmul.bf16.gmra.mxu0 %v2140
      %v2225 = vpop.f32.mrf.mxu0
      %v2226 = vadd.f32 0.0, %v2225
      %v2227 = vpop.f32.mrf.mxu0
      %v2228 = vadd.f32 0.0, %v2227
      %2229 = vmatmul.bf16.gmra.mxu0 %v2143
      %v2230 = vpop.f32.mrf.mxu0
      %v2231 = vadd.f32 0.0, %v2230
      %v2232 = vpop.f32.mrf.mxu0
      %v2233 = vadd.f32 0.0, %v2232
      %2234 = vmatmul.bf16.gmra.mxu0 %v2146
      %v2235 = vpop.f32.mrf.mxu0
      %v2236 = vadd.f32 0.0, %v2235
      %v2237 = vpop.f32.mrf.mxu0
      %v2238 = vadd.f32 0.0, %v2237
      %2239 = vdwg.mxu0
      %v2240 = vadd.f32 %v1405, %v2161
      %v2241 = vadd.f32 %v1407, %v2163
      %v2242 = vadd.f32 %v1410, %v2166
      %v2243 = vadd.f32 %v1412, %v2168
      %v2244 = vadd.f32 %v1415, %v2171
      %v2245 = vadd.f32 %v1417, %v2173
      %v2246 = vadd.f32 %v1420, %v2176
      %v2247 = vadd.f32 %v1422, %v2178
      %v2248 = vadd.f32 %v1425, %v2181
      %v2249 = vadd.f32 %v1427, %v2183
      %v2250 = vadd.f32 %v1430, %v2186
      %v2251 = vadd.f32 %v1432, %v2188
      %v2252 = vadd.f32 %v1435, %v2191
      %v2253 = vadd.f32 %v1437, %v2193
      %v2254 = vadd.f32 %v1440, %v2196
      %v2255 = vadd.f32 %v1442, %v2198
      %v2256 = vadd.f32 %v1445, %v2201
      %v2257 = vadd.f32 %v1447, %v2203
      %v2258 = vadd.f32 %v1450, %v2206
      %v2259 = vadd.f32 %v1452, %v2208
      %v2260 = vadd.f32 %v1455, %v2211
      %v2261 = vadd.f32 %v1457, %v2213
      %v2262 = vadd.f32 %v1460, %v2216
      %v2263 = vadd.f32 %v1462, %v2218
      %v2264 = vadd.f32 %v1465, %v2221
      %v2265 = vadd.f32 %v1467, %v2223
      %v2266 = vadd.f32 %v1470, %v2226
      %v2267 = vadd.f32 %v1472, %v2228
      %v2268 = vadd.f32 %v1475, %v2231
      %v2269 = vadd.f32 %v1477, %v2233
      %v2270 = vadd.f32 %v1480, %v2236
      %v2271 = vadd.f32 %v1482, %v2238
      %v2272 = vld [vmem:[%s206 + $0x8] sm:$0xf]
      %v2273 = vld [vmem:[%s206 + $0xc] sm:$0xf]
      %v2274 = vld [vmem:[%s206 + $0x10] sm:$0xf]
      %v2275 = vld [vmem:[%s206 + $0x14] sm:$0xf]
      %v2276 = vld [vmem:[%s206 + $0x18] sm:$0xf]
      %v2277 = vld [vmem:[%s206 + $0x1c] sm:$0xf]
      %v2278 = vld [vmem:[%s206 + $0x20] sm:$0xf]
      %v2279 = vld [vmem:[%s206 + $0x24] sm:$0xf]
      %v2280 = vld [vmem:[%s206 + $0x28] sm:$0xf]
      %v2281 = vld [vmem:[%s206 + $0x2c] sm:$0xf]
      %v2282 = vld [vmem:[%s206 + $0x30] sm:$0xf]
      %v2283 = vld [vmem:[%s206 + $0x34] sm:$0xf]
      %v2284 = vld [vmem:[%s206 + $0x38] sm:$0xf]
      %v2285 = vld [vmem:[%s206 + $0x3c] sm:$0xf]
      %v2286 = vld [vmem:[%s206 + $0x40] sm:$0xf]
      %v2287 = vld [vmem:[%s206 + $0x44] sm:$0xf]
      %v2288 = vld [vmem:[%s206 + $0x48] sm:$0xf]
      %v2289 = vld [vmem:[%s206 + $0x4c] sm:$0xf]
      %v2290 = vld [vmem:[%s206 + $0x50] sm:$0xf]
      %v2291 = vld [vmem:[%s206 + $0x54] sm:$0xf]
      %v2292 = vld [vmem:[%s206 + $0x58] sm:$0xf]
      %v2293 = vld [vmem:[%s206 + $0x5c] sm:$0xf]
      %v2294 = vld [vmem:[%s206 + $0x60] sm:$0xf]
      %v2295 = vld [vmem:[%s206 + $0x64] sm:$0xf]
      %v2296 = vld [vmem:[%s206 + $0x68] sm:$0xf]
      %v2297 = vld [vmem:[%s206 + $0x6c] sm:$0xf]
      %v2298 = vld [vmem:[%s206 + $0x70] sm:$0xf]
      %v2299 = vld [vmem:[%s206 + $0x74] sm:$0xf]
      %v2300 = vld [vmem:[%s206 + $0x78] sm:$0xf]
      %v2301 = vld [vmem:[%s206 + $0x7c] sm:$0xf]
      %v2302 = vld [vmem:[%s206 + $0x80] sm:$0xf]
      %v2303 = vld [vmem:[%s206 + $0x84] sm:$0xf]
      %v2304 = vsel %vm802, %v2272, 0
      %v2305 = vsel %vm803, %v2273, 0
      %v2306 = vsel %vm804, %v2274, 0
      %v2307 = vsel %vm805, %v2275, 0
      %v2308 = vsel %vm806, %v2276, 0
      %v2309 = vsel %vm807, %v2277, 0
      %v2310 = vsel %vm808, %v2278, 0
      %v2311 = vsel %vm809, %v2279, 0
      %v2312 = vsel %vm810, %v2280, 0
      %v2313 = vsel %vm811, %v2281, 0
      %v2314 = vsel %vm812, %v2282, 0
      %v2315 = vsel %vm813, %v2283, 0
      %v2316 = vsel %vm814, %v2284, 0
      %v2317 = vsel %vm815, %v2285, 0
      %v2318 = vsel %vm816, %v2286, 0
      %v2319 = vsel %vm817, %v2287, 0
      %v2320 = vsel %vm818, %v2288, 0
      %v2321 = vsel %vm819, %v2289, 0
      %v2322 = vsel %vm820, %v2290, 0
      %v2323 = vsel %vm821, %v2291, 0
      %v2324 = vsel %vm822, %v2292, 0
      %v2325 = vsel %vm823, %v2293, 0
      %v2326 = vsel %vm824, %v2294, 0
      %v2327 = vsel %vm825, %v2295, 0
      %v2328 = vsel %vm826, %v2296, 0
      %v2329 = vsel %vm827, %v2297, 0
      %v2330 = vsel %vm828, %v2298, 0
      %v2331 = vsel %vm829, %v2299, 0
      %v2332 = vsel %vm830, %v2300, 0
      %v2333 = vsel %vm831, %v2301, 0
      %v2334 = vsel %vm832, %v2302, 0
      %v2335 = vsel %vm833, %v2303, 0
      %v2336 = vld [vmem:[%s210 + $0x10] sm:$0x8]
      %v2337 = vld [vmem:[%s210 + $0x14] sm:$0xf]
      %v2338 = vld [vmem:[%s210 + $0x18] sm:$0x3]
      %v2371 = vunpack.c.l.b16 %v2304
      %v2372 = vunpack.c.l.b16 %v2305
      %v2373 = vunpack.c.l.b16 %v2306
      %v2374 = vunpack.c.l.b16 %v2307
      %v2375 = vunpack.c.l.b16 %v2308
      %v2376 = vunpack.c.l.b16 %v2309
      %v2377 = vunpack.c.l.b16 %v2310
      %v2378 = vunpack.c.l.b16 %v2311
      %v2379 = vunpack.c.l.b16 %v2312
      %v2380 = vunpack.c.l.b16 %v2313
      %v2381 = vunpack.c.l.b16 %v2314
      %v2382 = vunpack.c.l.b16 %v2315
      %v2383 = vunpack.c.l.b16 %v2316
      %v2384 = vunpack.c.l.b16 %v2317
      %v2385 = vunpack.c.l.b16 %v2318
      %v2386 = vunpack.c.l.b16 %v2319
      %v2387 = vunpack.c.l.b16 %v2320
      %v2388 = vunpack.c.l.b16 %v2321
      %v2389 = vunpack.c.l.b16 %v2322
      %v2390 = vunpack.c.l.b16 %v2323
      %v2391 = vunpack.c.l.b16 %v2324
      %v2392 = vunpack.c.l.b16 %v2325
      %v2393 = vunpack.c.l.b16 %v2326
      %v2394 = vunpack.c.l.b16 %v2327
      %v2395 = vunpack.c.l.b16 %v2328
      %v2396 = vunpack.c.l.b16 %v2329
      %v2397 = vunpack.c.l.b16 %v2330
      %v2398 = vunpack.c.l.b16 %v2331
      %v2399 = vunpack.c.l.b16 %v2332
      %v2400 = vunpack.c.l.b16 %v2333
      %v2401 = vunpack.c.l.b16 %v2334
      %v2402 = vunpack.c.l.b16 %v2335
      %v2403 = vpack.c.b16 %v2372, %v2371
      %v2404 = vpack.c.b16 %v2374, %v2373
      %v2405 = vpack.c.b16 %v2376, %v2375
      %v2406 = vpack.c.b16 %v2378, %v2377
      %v2407 = vpack.c.b16 %v2380, %v2379
      %v2408 = vpack.c.b16 %v2382, %v2381
      %v2409 = vpack.c.b16 %v2384, %v2383
      %v2410 = vpack.c.b16 %v2386, %v2385
      %v2411 = vpack.c.b16 %v2388, %v2387
      %v2412 = vpack.c.b16 %v2390, %v2389
      %v2413 = vpack.c.b16 %v2392, %v2391
      %v2414 = vpack.c.b16 %v2394, %v2393
      %v2415 = vpack.c.b16 %v2396, %v2395
      %v2416 = vpack.c.b16 %v2398, %v2397
      %v2417 = vpack.c.b16 %v2400, %v2399
      %v2418 = vpack.c.b16 %v2402, %v2401
      %v2422 = vunpack.c.l.b16 %v2336
      %v2423 = vunpack.c.l.b16 %v2337
      %v2424 = vunpack.c.l.b16 %v2338
      %v2425 = vpack.c.b16 %v2423, %v2422
      %v2426 = vpack.c.b16 %v2424, %v2424
      %vm2427 = vsmask.f32 4352
      %v2429 = vshrl.u32 %v2425, 16
      %v2431 = vrot.slane %v2429, 3
      %v2432 = vshll.u32 %v2425, 16
      %v2434 = vrot.slane %v2432, 4
      %v2435 = vor.u32 %v2431, %v2434
      %v2437 = vshrl.u32 %v2426, 16
      %v2439 = vrot.slane %v2437, 3
      %v2440 = vshll.u32 %v2426, 16
      %v2442 = vrot.slane %v2440, 4
      %v2443 = vor.u32 %v2439, %v2442
      %v2444 = vsel %vm2427, %v2435, %v2443
      %v2446 = vsel %vm1114, %v2403, 0
      %v2449 = vsel %vm1114, %v2404, 0
      %v2452 = vsel %vm1114, %v2405, 0
      %v2455 = vsel %vm1114, %v2406, 0
      %v2458 = vsel %vm1114, %v2407, 0
      %v2461 = vsel %vm1114, %v2408, 0
      %v2464 = vsel %vm1114, %v2409, 0
      %v2467 = vsel %vm1114, %v2410, 0
      %v2470 = vsel %vm1114, %v2411, 0
      %v2473 = vsel %vm1114, %v2412, 0
      %v2476 = vsel %vm1114, %v2413, 0
      %v2479 = vsel %vm1114, %v2414, 0
      %v2482 = vsel %vm1114, %v2415, 0
      %v2485 = vsel %vm1114, %v2416, 0
      %v2488 = vsel %vm1114, %v2417, 0
      %v2491 = vsel %vm1114, %v2418, 0
      %v2494 = vand.u32 %v2444, %v1166
      %2496 = vmatpush.bf16.msra.mxu0 0
      %2497 = vmatpush.bf16.msra.mxu0 0
      %2498 = vmatpush.bf16.msra.mxu0 0
      %2499 = vmatpush.bf16.msra.mxu0 0
      %2500 = vmatpush.bf16.msra.mxu0 0
      %2501 = vmatpush.bf16.msra.mxu0 0
      %2502 = vmatpush.bf16.msra.mxu0 0
      %2503 = vmatpush.bf16.msra.mxu0 %v2494
      %2504 = vmatmul.bf16.gmra.mxu0 %v2446
      %v2505 = vpop.f32.mrf.mxu0
      %v2506 = vadd.f32 0.0, %v2505
      %v2507 = vpop.f32.mrf.mxu0
      %v2508 = vadd.f32 0.0, %v2507
      %2509 = vmatmul.bf16.gmra.mxu0 %v2449
      %v2510 = vpop.f32.mrf.mxu0
      %v2511 = vadd.f32 0.0, %v2510
      %v2512 = vpop.f32.mrf.mxu0
      %v2513 = vadd.f32 0.0, %v2512
      %2514 = vmatmul.bf16.gmra.mxu0 %v2452
      %v2515 = vpop.f32.mrf.mxu0
      %v2516 = vadd.f32 0.0, %v2515
      %v2517 = vpop.f32.mrf.mxu0
      %v2518 = vadd.f32 0.0, %v2517
      %2519 = vmatmul.bf16.gmra.mxu0 %v2455
      %v2520 = vpop.f32.mrf.mxu0
      %v2521 = vadd.f32 0.0, %v2520
      %v2522 = vpop.f32.mrf.mxu0
      %v2523 = vadd.f32 0.0, %v2522
      %2524 = vmatmul.bf16.gmra.mxu0 %v2458
      %v2525 = vpop.f32.mrf.mxu0
      %v2526 = vadd.f32 0.0, %v2525
      %v2527 = vpop.f32.mrf.mxu0
      %v2528 = vadd.f32 0.0, %v2527
      %2529 = vmatmul.bf16.gmra.mxu0 %v2461
      %v2530 = vpop.f32.mrf.mxu0
      %v2531 = vadd.f32 0.0, %v2530
      %v2532 = vpop.f32.mrf.mxu0
      %v2533 = vadd.f32 0.0, %v2532
      %2534 = vmatmul.bf16.gmra.mxu0 %v2464
      %v2535 = vpop.f32.mrf.mxu0
      %v2536 = vadd.f32 0.0, %v2535
      %v2537 = vpop.f32.mrf.mxu0
      %v2538 = vadd.f32 0.0, %v2537
      %2539 = vmatmul.bf16.gmra.mxu0 %v2467
      %v2540 = vpop.f32.mrf.mxu0
      %v2541 = vadd.f32 0.0, %v2540
      %v2542 = vpop.f32.mrf.mxu0
      %v2543 = vadd.f32 0.0, %v2542
      %2544 = vmatmul.bf16.gmra.mxu0 %v2470
      %v2545 = vpop.f32.mrf.mxu0
      %v2546 = vadd.f32 0.0, %v2545
      %v2547 = vpop.f32.mrf.mxu0
      %v2548 = vadd.f32 0.0, %v2547
      %2549 = vmatmul.bf16.gmra.mxu0 %v2473
      %v2550 = vpop.f32.mrf.mxu0
      %v2551 = vadd.f32 0.0, %v2550
      %v2552 = vpop.f32.mrf.mxu0
      %v2553 = vadd.f32 0.0, %v2552
      %2554 = vmatmul.bf16.gmra.mxu0 %v2476
      %v2555 = vpop.f32.mrf.mxu0
      %v2556 = vadd.f32 0.0, %v2555
      %v2557 = vpop.f32.mrf.mxu0
      %v2558 = vadd.f32 0.0, %v2557
      %2559 = vmatmul.bf16.gmra.mxu0 %v2479
      %v2560 = vpop.f32.mrf.mxu0
      %v2561 = vadd.f32 0.0, %v2560
      %v2562 = vpop.f32.mrf.mxu0
      %v2563 = vadd.f32 0.0, %v2562
      %2564 = vmatmul.bf16.gmra.mxu0 %v2482
      %v2565 = vpop.f32.mrf.mxu0
      %v2566 = vadd.f32 0.0, %v2565
      %v2567 = vpop.f32.mrf.mxu0
      %v2568 = vadd.f32 0.0, %v2567
      %2569 = vmatmul.bf16.gmra.mxu0 %v2485
      %v2570 = vpop.f32.mrf.mxu0
      %v2571 = vadd.f32 0.0, %v2570
      %v2572 = vpop.f32.mrf.mxu0
      %v2573 = vadd.f32 0.0, %v2572
      %2574 = vmatmul.bf16.gmra.mxu0 %v2488
      %v2575 = vpop.f32.mrf.mxu0
      %v2576 = vadd.f32 0.0, %v2575
      %v2577 = vpop.f32.mrf.mxu0
      %v2578 = vadd.f32 0.0, %v2577
      %2579 = vmatmul.bf16.gmra.mxu0 %v2491
      %v2580 = vpop.f32.mrf.mxu0
      %v2581 = vadd.f32 0.0, %v2580
      %v2582 = vpop.f32.mrf.mxu0
      %v2583 = vadd.f32 0.0, %v2582
      %2584 = vdwg.mxu0
      %v2585 = vadd.f32 %v2240, %v2506
      %v2586 = vadd.f32 %v2241, %v2508
      %v2587 = vadd.f32 %v2242, %v2511
      %v2588 = vadd.f32 %v2243, %v2513
      %v2589 = vadd.f32 %v2244, %v2516
      %v2590 = vadd.f32 %v2245, %v2518
      %v2591 = vadd.f32 %v2246, %v2521
      %v2592 = vadd.f32 %v2247, %v2523
      %v2593 = vadd.f32 %v2248, %v2526
      %v2594 = vadd.f32 %v2249, %v2528
      %v2595 = vadd.f32 %v2250, %v2531
      %v2596 = vadd.f32 %v2251, %v2533
      %v2597 = vadd.f32 %v2252, %v2536
      %v2598 = vadd.f32 %v2253, %v2538
      %v2599 = vadd.f32 %v2254, %v2541
      %v2600 = vadd.f32 %v2255, %v2543
      %v2601 = vadd.f32 %v2256, %v2546
      %v2602 = vadd.f32 %v2257, %v2548
      %v2603 = vadd.f32 %v2258, %v2551
      %v2604 = vadd.f32 %v2259, %v2553
      %v2605 = vadd.f32 %v2260, %v2556
      %v2606 = vadd.f32 %v2261, %v2558
      %v2607 = vadd.f32 %v2262, %v2561
      %v2608 = vadd.f32 %v2263, %v2563
      %v2609 = vadd.f32 %v2264, %v2566
      %v2610 = vadd.f32 %v2265, %v2568
      %v2611 = vadd.f32 %v2266, %v2571
      %v2612 = vadd.f32 %v2267, %v2573
      %v2613 = vadd.f32 %v2268, %v2576
      %v2614 = vadd.f32 %v2269, %v2578
      %v2615 = vadd.f32 %v2270, %v2581
      %v2616 = vadd.f32 %v2271, %v2583
      %v2617 = vld [vmem:[%s206 + $0x8] sm:$0xf]
      %v2618 = vld [vmem:[%s206 + $0xc] sm:$0xf]
      %v2619 = vld [vmem:[%s206 + $0x10] sm:$0xf]
      %v2620 = vld [vmem:[%s206 + $0x14] sm:$0xf]
      %v2621 = vld [vmem:[%s206 + $0x18] sm:$0xf]
      %v2622 = vld [vmem:[%s206 + $0x1c] sm:$0xf]
      %v2623 = vld [vmem:[%s206 + $0x20] sm:$0xf]
      %v2624 = vld [vmem:[%s206 + $0x24] sm:$0xf]
      %v2625 = vld [vmem:[%s206 + $0x28] sm:$0xf]
      %v2626 = vld [vmem:[%s206 + $0x2c] sm:$0xf]
      %v2627 = vld [vmem:[%s206 + $0x30] sm:$0xf]
      %v2628 = vld [vmem:[%s206 + $0x34] sm:$0xf]
      %v2629 = vld [vmem:[%s206 + $0x38] sm:$0xf]
      %v2630 = vld [vmem:[%s206 + $0x3c] sm:$0xf]
      %v2631 = vld [vmem:[%s206 + $0x40] sm:$0xf]
      %v2632 = vld [vmem:[%s206 + $0x44] sm:$0xf]
      %v2633 = vld [vmem:[%s206 + $0x48] sm:$0xf]
      %v2634 = vld [vmem:[%s206 + $0x4c] sm:$0xf]
      %v2635 = vld [vmem:[%s206 + $0x50] sm:$0xf]
      %v2636 = vld [vmem:[%s206 + $0x54] sm:$0xf]
      %v2637 = vld [vmem:[%s206 + $0x58] sm:$0xf]
      %v2638 = vld [vmem:[%s206 + $0x5c] sm:$0xf]
      %v2639 = vld [vmem:[%s206 + $0x60] sm:$0xf]
      %v2640 = vld [vmem:[%s206 + $0x64] sm:$0xf]
      %v2641 = vld [vmem:[%s206 + $0x68] sm:$0xf]
      %v2642 = vld [vmem:[%s206 + $0x6c] sm:$0xf]
      %v2643 = vld [vmem:[%s206 + $0x70] sm:$0xf]
      %v2644 = vld [vmem:[%s206 + $0x74] sm:$0xf]
      %v2645 = vld [vmem:[%s206 + $0x78] sm:$0xf]
      %v2646 = vld [vmem:[%s206 + $0x7c] sm:$0xf]
      %v2647 = vld [vmem:[%s206 + $0x80] sm:$0xf]
      %v2648 = vld [vmem:[%s206 + $0x84] sm:$0xf]
      %v2649 = vld [vmem:[%s206 + $0x88] sm:$0x1]
      %v2650 = vld [vmem:[%s210 + $0x18] sm:$0xc]
      %v2651 = vld [vmem:[%s210 + $0x1c] sm:$0xf]
      %v2652 = vld [vmem:[%s210 + $0x20] sm:$0x1]
      %v2686 = vunpack.c.l.b16 %v2617
      %v2687 = vunpack.c.l.b16 %v2618
      %v2688 = vunpack.c.l.b16 %v2619
      %v2689 = vunpack.c.l.b16 %v2620
      %v2690 = vunpack.c.l.b16 %v2621
      %v2691 = vunpack.c.l.b16 %v2622
      %v2692 = vunpack.c.l.b16 %v2623
      %v2693 = vunpack.c.l.b16 %v2624
      %v2694 = vunpack.c.l.b16 %v2625
      %v2695 = vunpack.c.l.b16 %v2626
      %v2696 = vunpack.c.l.b16 %v2627
      %v2697 = vunpack.c.l.b16 %v2628
      %v2698 = vunpack.c.l.b16 %v2629
      %v2699 = vunpack.c.l.b16 %v2630
      %v2700 = vunpack.c.l.b16 %v2631
      %v2701 = vunpack.c.l.b16 %v2632
      %v2702 = vunpack.c.l.b16 %v2633
      %v2703 = vunpack.c.l.b16 %v2634
      %v2704 = vunpack.c.l.b16 %v2635
      %v2705 = vunpack.c.l.b16 %v2636
      %v2706 = vunpack.c.l.b16 %v2637
      %v2707 = vunpack.c.l.b16 %v2638
      %v2708 = vunpack.c.l.b16 %v2639
      %v2709 = vunpack.c.l.b16 %v2640
      %v2710 = vunpack.c.l.b16 %v2641
      %v2711 = vunpack.c.l.b16 %v2642
      %v2712 = vunpack.c.l.b16 %v2643
      %v2713 = vunpack.c.l.b16 %v2644
      %v2714 = vunpack.c.l.b16 %v2645
      %v2715 = vunpack.c.l.b16 %v2646
      %v2716 = vunpack.c.l.b16 %v2647
      %v2717 = vunpack.c.l.b16 %v2648
      %v2718 = vunpack.c.l.b16 %v2649
      %v2719 = vpack.c.b16 %v2687, %v2686
      %v2720 = vpack.c.b16 %v2689, %v2688
      %v2721 = vpack.c.b16 %v2691, %v2690
      %v2722 = vpack.c.b16 %v2693, %v2692
      %v2723 = vpack.c.b16 %v2695, %v2694
      %v2724 = vpack.c.b16 %v2697, %v2696
      %v2725 = vpack.c.b16 %v2699, %v2698
      %v2726 = vpack.c.b16 %v2701, %v2700
      %v2727 = vpack.c.b16 %v2703, %v2702
      %v2728 = vpack.c.b16 %v2705, %v2704
      %v2729 = vpack.c.b16 %v2707, %v2706
      %v2730 = vpack.c.b16 %v2709, %v2708
      %v2731 = vpack.c.b16 %v2711, %v2710
      %v2732 = vpack.c.b16 %v2713, %v2712
      %v2733 = vpack.c.b16 %v2715, %v2714
      %v2734 = vpack.c.b16 %v2717, %v2716
      %v2735 = vpack.c.b16 %v2718, %v2718
      %v2737 = vshrl.u32 %v2719, 16
      %v2739 = vshll.u32 %v2719, 16
      %v2741 = vrot.slane %v2739, 1
      %v2742 = vor.u32 %v2737, %v2741
      %v2744 = vshll.u32 %v2720, 16
      %v2746 = vrot.slane %v2744, 1
      %v2747 = vsel %vm955, %v2742, %v2746
      %v2748 = vshrl.u32 %v2720, 16
      %v2750 = vor.u32 %v2748, %v2746
      %v2752 = vshll.u32 %v2721, 16
      %v2754 = vrot.slane %v2752, 1
      %v2755 = vsel %vm955, %v2750, %v2754
      %v2756 = vshrl.u32 %v2721, 16
      %v2758 = vor.u32 %v2756, %v2754
      %v2760 = vshll.u32 %v2722, 16
      %v2762 = vrot.slane %v2760, 1
      %v2763 = vsel %vm955, %v2758, %v2762
      %v2764 = vshrl.u32 %v2722, 16
      %v2766 = vor.u32 %v2764, %v2762
      %v2768 = vshll.u32 %v2723, 16
      %v2770 = vrot.slane %v2768, 1
      %v2771 = vsel %vm955, %v2766, %v2770
      %v2772 = vshrl.u32 %v2723, 16
      %v2774 = vor.u32 %v2772, %v2770
      %v2776 = vshll.u32 %v2724, 16
      %v2778 = vrot.slane %v2776, 1
      %v2779 = vsel %vm955, %v2774, %v2778
      %v2780 = vshrl.u32 %v2724, 16
      %v2782 = vor.u32 %v2780, %v2778
      %v2784 = vshll.u32 %v2725, 16
      %v2786 = vrot.slane %v2784, 1
      %v2787 = vsel %vm955, %v2782, %v2786
      %v2788 = vshrl.u32 %v2725, 16
      %v2790 = vor.u32 %v2788, %v2786
      %v2792 = vshll.u32 %v2726, 16
      %v2794 = vrot.slane %v2792, 1
      %v2795 = vsel %vm955, %v2790, %v2794
      %v2796 = vshrl.u32 %v2726, 16
      %v2798 = vor.u32 %v2796, %v2794
      %v2800 = vshll.u32 %v2727, 16
      %v2802 = vrot.slane %v2800, 1
      %v2803 = vsel %vm955, %v2798, %v2802
      %v2804 = vshrl.u32 %v2727, 16
      %v2806 = vor.u32 %v2804, %v2802
      %v2808 = vshll.u32 %v2728, 16
      %v2810 = vrot.slane %v2808, 1
      %v2811 = vsel %vm955, %v2806, %v2810
      %v2812 = vshrl.u32 %v2728, 16
      %v2814 = vor.u32 %v2812, %v2810
      %v2816 = vshll.u32 %v2729, 16
      %v2818 = vrot.slane %v2816, 1
      %v2819 = vsel %vm955, %v2814, %v2818
      %v2820 = vshrl.u32 %v2729, 16
      %v2822 = vor.u32 %v2820, %v2818
      %v2824 = vshll.u32 %v2730, 16
      %v2826 = vrot.slane %v2824, 1
      %v2827 = vsel %vm955, %v2822, %v2826
      %v2828 = vshrl.u32 %v2730, 16
      %v2830 = vor.u32 %v2828, %v2826
      %v2832 = vshll.u32 %v2731, 16
      %v2834 = vrot.slane %v2832, 1
      %v2835 = vsel %vm955, %v2830, %v2834
      %v2836 = vshrl.u32 %v2731, 16
      %v2838 = vor.u32 %v2836, %v2834
      %v2840 = vshll.u32 %v2732, 16
      %v2842 = vrot.slane %v2840, 1
      %v2843 = vsel %vm955, %v2838, %v2842
      %v2844 = vshrl.u32 %v2732, 16
      %v2846 = vor.u32 %v2844, %v2842
      %v2848 = vshll.u32 %v2733, 16
      %v2850 = vrot.slane %v2848, 1
      %v2851 = vsel %vm955, %v2846, %v2850
      %v2852 = vshrl.u32 %v2733, 16
      %v2854 = vor.u32 %v2852, %v2850
      %v2856 = vshll.u32 %v2734, 16
      %v2858 = vrot.slane %v2856, 1
      %v2859 = vsel %vm955, %v2854, %v2858
      %v2860 = vshrl.u32 %v2734, 16
      %v2862 = vor.u32 %v2860, %v2858
      %v2864 = vshll.u32 %v2735, 16
      %v2866 = vrot.slane %v2864, 1
      %v2867 = vsel %vm955, %v2862, %v2866
      %v2871 = vunpack.c.l.b16 %v2650
      %v2872 = vunpack.c.l.b16 %v2651
      %v2873 = vunpack.c.l.b16 %v2652
      %v2874 = vpack.c.b16 %v2872, %v2871
      %v2875 = vpack.c.b16 %v2873, %v2873
      %vm2876 = vcmask 1045504
      %v2877 = vrot.slane %v2874, 2
      %v2878 = vrot.slane %v2875, 2
      %v2879 = vsel %vm2876, %v2877, %v2878
      %v2881 = vsel %vm1114, %v2747, 0
      %v2884 = vsel %vm1114, %v2755, 0
      %v2887 = vsel %vm1114, %v2763, 0
      %v2890 = vsel %vm1114, %v2771, 0
      %v2893 = vsel %vm1114, %v2779, 0
      %v2896 = vsel %vm1114, %v2787, 0
      %v2899 = vsel %vm1114, %v2795, 0
      %v2902 = vsel %vm1114, %v2803, 0
      %v2905 = vsel %vm1114, %v2811, 0
      %v2908 = vsel %vm1114, %v2819, 0
      %v2911 = vsel %vm1114, %v2827, 0
      %v2914 = vsel %vm1114, %v2835, 0
      %v2917 = vsel %vm1114, %v2843, 0
      %v2920 = vsel %vm1114, %v2851, 0
      %v2923 = vsel %vm1114, %v2859, 0
      %v2926 = vsel %vm1114, %v2867, 0
      %v2929 = vand.u32 %v2879, %v1166
      %2931 = vmatpush.bf16.msra.mxu0 0
      %2932 = vmatpush.bf16.msra.mxu0 0
      %2933 = vmatpush.bf16.msra.mxu0 0
      %2934 = vmatpush.bf16.msra.mxu0 0
      %2935 = vmatpush.bf16.msra.mxu0 0
      %2936 = vmatpush.bf16.msra.mxu0 0
      %2937 = vmatpush.bf16.msra.mxu0 0
      %2938 = vmatpush.bf16.msra.mxu0 %v2929
      %2939 = vmatmul.bf16.gmra.mxu0 %v2881
      %v2940 = vpop.f32.mrf.mxu0
      %v2941 = vadd.f32 0.0, %v2940
      %v2942 = vpop.f32.mrf.mxu0
      %v2943 = vadd.f32 0.0, %v2942
      %2944 = vmatmul.bf16.gmra.mxu0 %v2884
      %v2945 = vpop.f32.mrf.mxu0
      %v2946 = vadd.f32 0.0, %v2945
      %v2947 = vpop.f32.mrf.mxu0
      %v2948 = vadd.f32 0.0, %v2947
      %2949 = vmatmul.bf16.gmra.mxu0 %v2887
      %v2950 = vpop.f32.mrf.mxu0
      %v2951 = vadd.f32 0.0, %v2950
      %v2952 = vpop.f32.mrf.mxu0
      %v2953 = vadd.f32 0.0, %v2952
      %2954 = vmatmul.bf16.gmra.mxu0 %v2890
      %v2955 = vpop.f32.mrf.mxu0
      %v2956 = vadd.f32 0.0, %v2955
      %v2957 = vpop.f32.mrf.mxu0
      %v2958 = vadd.f32 0.0, %v2957
      %2959 = vmatmul.bf16.gmra.mxu0 %v2893
      %v2960 = vpop.f32.mrf.mxu0
      %v2961 = vadd.f32 0.0, %v2960
      %v2962 = vpop.f32.mrf.mxu0
      %v2963 = vadd.f32 0.0, %v2962
      %2964 = vmatmul.bf16.gmra.mxu0 %v2896
      %v2965 = vpop.f32.mrf.mxu0
      %v2966 = vadd.f32 0.0, %v2965
      %v2967 = vpop.f32.mrf.mxu0
      %v2968 = vadd.f32 0.0, %v2967
      %2969 = vmatmul.bf16.gmra.mxu0 %v2899
      %v2970 = vpop.f32.mrf.mxu0
      %v2971 = vadd.f32 0.0, %v2970
      %v2972 = vpop.f32.mrf.mxu0
      %v2973 = vadd.f32 0.0, %v2972
      %2974 = vmatmul.bf16.gmra.mxu0 %v2902
      %v2975 = vpop.f32.mrf.mxu0
      %v2976 = vadd.f32 0.0, %v2975
      %v2977 = vpop.f32.mrf.mxu0
      %v2978 = vadd.f32 0.0, %v2977
      %2979 = vmatmul.bf16.gmra.mxu0 %v2905
      %v2980 = vpop.f32.mrf.mxu0
      %v2981 = vadd.f32 0.0, %v2980
      %v2982 = vpop.f32.mrf.mxu0
      %v2983 = vadd.f32 0.0, %v2982
      %2984 = vmatmul.bf16.gmra.mxu0 %v2908
      %v2985 = vpop.f32.mrf.mxu0
      %v2986 = vadd.f32 0.0, %v2985
      %v2987 = vpop.f32.mrf.mxu0
      %v2988 = vadd.f32 0.0, %v2987
      %2989 = vmatmul.bf16.gmra.mxu0 %v2911
      %v2990 = vpop.f32.mrf.mxu0
      %v2991 = vadd.f32 0.0, %v2990
      %v2992 = vpop.f32.mrf.mxu0
      %v2993 = vadd.f32 0.0, %v2992
      %2994 = vmatmul.bf16.gmra.mxu0 %v2914
      %v2995 = vpop.f32.mrf.mxu0
      %v2996 = vadd.f32 0.0, %v2995
      %v2997 = vpop.f32.mrf.mxu0
      %v2998 = vadd.f32 0.0, %v2997
      %2999 = vmatmul.bf16.gmra.mxu0 %v2917
      %v3000 = vpop.f32.mrf.mxu0
      %v3001 = vadd.f32 0.0, %v3000
      %v3002 = vpop.f32.mrf.mxu0
      %v3003 = vadd.f32 0.0, %v3002
      %3004 = vmatmul.bf16.gmra.mxu0 %v2920
      %v3005 = vpop.f32.mrf.mxu0
      %v3006 = vadd.f32 0.0, %v3005
      %v3007 = vpop.f32.mrf.mxu0
      %v3008 = vadd.f32 0.0, %v3007
      %3009 = vmatmul.bf16.gmra.mxu0 %v2923
      %v3010 = vpop.f32.mrf.mxu0
      %v3011 = vadd.f32 0.0, %v3010
      %v3012 = vpop.f32.mrf.mxu0
      %v3013 = vadd.f32 0.0, %v3012
      %3014 = vmatmul.bf16.gmra.mxu0 %v2926
      %v3015 = vpop.f32.mrf.mxu0
      %v3016 = vadd.f32 0.0, %v3015
      %v3017 = vpop.f32.mrf.mxu0
      %v3018 = vadd.f32 0.0, %v3017
      %3019 = vdwg.mxu0
      %v3020 = vadd.f32 %v2585, %v2941
      %v3021 = vadd.f32 %v2586, %v2943
      %v3022 = vadd.f32 %v2587, %v2946
      %v3023 = vadd.f32 %v2588, %v2948
      %v3024 = vadd.f32 %v2589, %v2951
      %v3025 = vadd.f32 %v2590, %v2953
      %v3026 = vadd.f32 %v2591, %v2956
      %v3027 = vadd.f32 %v2592, %v2958
      %v3028 = vadd.f32 %v2593, %v2961
      %v3029 = vadd.f32 %v2594, %v2963
      %v3030 = vadd.f32 %v2595, %v2966
      %v3031 = vadd.f32 %v2596, %v2968
      %v3032 = vadd.f32 %v2597, %v2971
      %v3033 = vadd.f32 %v2598, %v2973
      %v3034 = vadd.f32 %v2599, %v2976
      %v3035 = vadd.f32 %v2600, %v2978
      %v3036 = vadd.f32 %v2601, %v2981
      %v3037 = vadd.f32 %v2602, %v2983
      %v3038 = vadd.f32 %v2603, %v2986
      %v3039 = vadd.f32 %v2604, %v2988
      %v3040 = vadd.f32 %v2605, %v2991
      %v3041 = vadd.f32 %v2606, %v2993
      %v3042 = vadd.f32 %v2607, %v2996
      %v3043 = vadd.f32 %v2608, %v2998
      %v3044 = vadd.f32 %v2609, %v3001
      %v3045 = vadd.f32 %v2610, %v3003
      %v3046 = vadd.f32 %v2611, %v3006
      %v3047 = vadd.f32 %v2612, %v3008
      %v3048 = vadd.f32 %v2613, %v3011
      %v3049 = vadd.f32 %v2614, %v3013
      %v3050 = vadd.f32 %v2615, %v3016
      %v3051 = vadd.f32 %v2616, %v3018
      %v3052 = vld [vmem:[%s206 + $0x8] sm:$0xe]
      %v3053 = vsel %vm1717, %v3052, 0
      %v3054 = vsel %vm1724, %v2618, 0
      %v3055 = vsel %vm1731, %v2619, 0
      %v3056 = vsel %vm1738, %v2620, 0
      %v3057 = vsel %vm1745, %v2621, 0
      %v3058 = vsel %vm1752, %v2622, 0
      %v3059 = vsel %vm1759, %v2623, 0
      %v3060 = vsel %vm1766, %v2624, 0
      %v3061 = vsel %vm1773, %v2625, 0
      %v3062 = vsel %vm1780, %v2626, 0
      %v3063 = vsel %vm1787, %v2627, 0
      %v3064 = vsel %vm1794, %v2628, 0
      %v3065 = vsel %vm1801, %v2629, 0
      %v3066 = vsel %vm1808, %v2630, 0
      %v3067 = vsel %vm1815, %v2631, 0
      %v3068 = vsel %vm1822, %v2632, 0
      %v3069 = vsel %vm1829, %v2633, 0
      %v3070 = vsel %vm1836, %v2634, 0
      %v3071 = vsel %vm1843, %v2635, 0
      %v3072 = vsel %vm1850, %v2636, 0
      %v3073 = vsel %vm1857, %v2637, 0
      %v3074 = vsel %vm1864, %v2638, 0
      %v3075 = vsel %vm1871, %v2639, 0
      %v3076 = vsel %vm1878, %v2640, 0
      %v3077 = vsel %vm1885, %v2641, 0
      %v3078 = vsel %vm1892, %v2642, 0
      %v3079 = vsel %vm1899, %v2643, 0
      %v3080 = vsel %vm1906, %v2644, 0
      %v3081 = vsel %vm1913, %v2645, 0
      %v3082 = vsel %vm1920, %v2646, 0
      %v3083 = vsel %vm1927, %v2647, 0
      %v3084 = vsel %vm1934, %v2648, 0
      %v3085 = vsel %vm1941, %v2649, 0
      %v3086 = vld [vmem:[%s210 + $0x20] sm:$0xf]
      %v3087 = vld [vmem:[%s210 + $0x24] sm:$0x7]
      %v3121 = vunpack.c.l.b16 %v3053
      %v3122 = vunpack.c.l.b16 %v3054
      %v3123 = vunpack.c.l.b16 %v3055
      %v3124 = vunpack.c.l.b16 %v3056
      %v3125 = vunpack.c.l.b16 %v3057
      %v3126 = vunpack.c.l.b16 %v3058
      %v3127 = vunpack.c.l.b16 %v3059
      %v3128 = vunpack.c.l.b16 %v3060
      %v3129 = vunpack.c.l.b16 %v3061
      %v3130 = vunpack.c.l.b16 %v3062
      %v3131 = vunpack.c.l.b16 %v3063
      %v3132 = vunpack.c.l.b16 %v3064
      %v3133 = vunpack.c.l.b16 %v3065
      %v3134 = vunpack.c.l.b16 %v3066
      %v3135 = vunpack.c.l.b16 %v3067
      %v3136 = vunpack.c.l.b16 %v3068
      %v3137 = vunpack.c.l.b16 %v3069
      %v3138 = vunpack.c.l.b16 %v3070
      %v3139 = vunpack.c.l.b16 %v3071
      %v3140 = vunpack.c.l.b16 %v3072
      %v3141 = vunpack.c.l.b16 %v3073
      %v3142 = vunpack.c.l.b16 %v3074
      %v3143 = vunpack.c.l.b16 %v3075
      %v3144 = vunpack.c.l.b16 %v3076
      %v3145 = vunpack.c.l.b16 %v3077
      %v3146 = vunpack.c.l.b16 %v3078
      %v3147 = vunpack.c.l.b16 %v3079
      %v3148 = vunpack.c.l.b16 %v3080
      %v3149 = vunpack.c.l.b16 %v3081
      %v3150 = vunpack.c.l.b16 %v3082
      %v3151 = vunpack.c.l.b16 %v3083
      %v3152 = vunpack.c.l.b16 %v3084
      %v3153 = vunpack.c.l.b16 %v3085
      %v3154 = vpack.c.b16 %v3122, %v3121
      %v3155 = vpack.c.b16 %v3124, %v3123
      %v3156 = vpack.c.b16 %v3126, %v3125
      %v3157 = vpack.c.b16 %v3128, %v3127
      %v3158 = vpack.c.b16 %v3130, %v3129
      %v3159 = vpack.c.b16 %v3132, %v3131
      %v3160 = vpack.c.b16 %v3134, %v3133
      %v3161 = vpack.c.b16 %v3136, %v3135
      %v3162 = vpack.c.b16 %v3138, %v3137
      %v3163 = vpack.c.b16 %v3140, %v3139
      %v3164 = vpack.c.b16 %v3142, %v3141
      %v3165 = vpack.c.b16 %v3144, %v3143
      %v3166 = vpack.c.b16 %v3146, %v3145
      %v3167 = vpack.c.b16 %v3148, %v3147
      %v3168 = vpack.c.b16 %v3150, %v3149
      %v3169 = vpack.c.b16 %v3152, %v3151
      %v3170 = vpack.c.b16 %v3153, %v3153
      %v3171 = vrot.slane %v3154, 1
      %v3172 = vrot.slane %v3155, 1
      %v3173 = vsel %vm2060, %v3171, %v3172
      %v3174 = vrot.slane %v3156, 1
      %v3175 = vsel %vm2060, %v3172, %v3174
      %v3176 = vrot.slane %v3157, 1
      %v3177 = vsel %vm2060, %v3174, %v3176
      %v3178 = vrot.slane %v3158, 1
      %v3179 = vsel %vm2060, %v3176, %v3178
      %v3180 = vrot.slane %v3159, 1
      %v3181 = vsel %vm2060, %v3178, %v3180
      %v3182 = vrot.slane %v3160, 1
      %v3183 = vsel %vm2060, %v3180, %v3182
      %v3184 = vrot.slane %v3161, 1
      %v3185 = vsel %vm2060, %v3182, %v3184
      %v3186 = vrot.slane %v3162, 1
      %v3187 = vsel %vm2060, %v3184, %v3186
      %v3188 = vrot.slane %v3163, 1
      %v3189 = vsel %vm2060, %v3186, %v3188
      %v3190 = vrot.slane %v3164, 1
      %v3191 = vsel %vm2060, %v3188, %v3190
      %v3192 = vrot.slane %v3165, 1
      %v3193 = vsel %vm2060, %v3190, %v3192
      %v3194 = vrot.slane %v3166, 1
      %v3195 = vsel %vm2060, %v3192, %v3194
      %v3196 = vrot.slane %v3167, 1
      %v3197 = vsel %vm2060, %v3194, %v3196
      %v3198 = vrot.slane %v3168, 1
      %v3199 = vsel %vm2060, %v3196, %v3198
      %v3200 = vrot.slane %v3169, 1
      %v3201 = vsel %vm2060, %v3198, %v3200
      %v3202 = vrot.slane %v3170, 1
      %v3203 = vsel %vm2060, %v3200, %v3202
      %v3206 = vunpack.c.l.b16 %v3086
      %v3207 = vunpack.c.l.b16 %v3087
      %v3208 = vpack.c.b16 %v3207, %v3206
      %v3210 = vshrl.u32 %v3208, 16
      %v3212 = vshll.u32 %v3208, 16
      %v3214 = vrot.slane %v3212, 1
      %v3215 = vor.u32 %v3210, %v3214
      %v3217 = vsel %vm1114, %v3173, 0
      %v3220 = vsel %vm1114, %v3175, 0
      %v3223 = vsel %vm1114, %v3177, 0
      %v3226 = vsel %vm1114, %v3179, 0
      %v3229 = vsel %vm1114, %v3181, 0
      %v3232 = vsel %vm1114, %v3183, 0
      %v3235 = vsel %vm1114, %v3185, 0
      %v3238 = vsel %vm1114, %v3187, 0
      %v3241 = vsel %vm1114, %v3189, 0
      %v3244 = vsel %vm1114, %v3191, 0
      %v3247 = vsel %vm1114, %v3193, 0
      %v3250 = vsel %vm1114, %v3195, 0
      %v3253 = vsel %vm1114, %v3197, 0
      %v3256 = vsel %vm1114, %v3199, 0
      %v3259 = vsel %vm1114, %v3201, 0
      %v3262 = vsel %vm1114, %v3203, 0
      %v3265 = vand.u32 %v3215, %v1166
      %3267 = vmatpush.bf16.msra.mxu0 0
      %3268 = vmatpush.bf16.msra.mxu0 0
      %3269 = vmatpush.bf16.msra.mxu0 0
      %3270 = vmatpush.bf16.msra.mxu0 0
      %3271 = vmatpush.bf16.msra.mxu0 0
      %3272 = vmatpush.bf16.msra.mxu0 0
      %3273 = vmatpush.bf16.msra.mxu0 0
      %3274 = vmatpush.bf16.msra.mxu0 %v3265
      %3275 = vmatmul.bf16.gmra.mxu0 %v3217
      %v3276 = vpop.f32.mrf.mxu0
      %v3277 = vadd.f32 0.0, %v3276
      %v3278 = vpop.f32.mrf.mxu0
      %v3279 = vadd.f32 0.0, %v3278
      %3280 = vmatmul.bf16.gmra.mxu0 %v3220
      %v3281 = vpop.f32.mrf.mxu0
      %v3282 = vadd.f32 0.0, %v3281
      %v3283 = vpop.f32.mrf.mxu0
      %v3284 = vadd.f32 0.0, %v3283
      %3285 = vmatmul.bf16.gmra.mxu0 %v3223
      %v3286 = vpop.f32.mrf.mxu0
      %v3287 = vadd.f32 0.0, %v3286
      %v3288 = vpop.f32.mrf.mxu0
      %v3289 = vadd.f32 0.0, %v3288
      %3290 = vmatmul.bf16.gmra.mxu0 %v3226
      %v3291 = vpop.f32.mrf.mxu0
      %v3292 = vadd.f32 0.0, %v3291
      %v3293 = vpop.f32.mrf.mxu0
      %v3294 = vadd.f32 0.0, %v3293
      %3295 = vmatmul.bf16.gmra.mxu0 %v3229
      %v3296 = vpop.f32.mrf.mxu0
      %v3297 = vadd.f32 0.0, %v3296
      %v3298 = vpop.f32.mrf.mxu0
      %v3299 = vadd.f32 0.0, %v3298
      %3300 = vmatmul.bf16.gmra.mxu0 %v3232
      %v3301 = vpop.f32.mrf.mxu0
      %v3302 = vadd.f32 0.0, %v3301
      %v3303 = vpop.f32.mrf.mxu0
      %v3304 = vadd.f32 0.0, %v3303
      %3305 = vmatmul.bf16.gmra.mxu0 %v3235
      %v3306 = vpop.f32.mrf.mxu0
      %v3307 = vadd.f32 0.0, %v3306
      %v3308 = vpop.f32.mrf.mxu0
      %v3309 = vadd.f32 0.0, %v3308
      %3310 = vmatmul.bf16.gmra.mxu0 %v3238
      %v3311 = vpop.f32.mrf.mxu0
      %v3312 = vadd.f32 0.0, %v3311
      %v3313 = vpop.f32.mrf.mxu0
      %v3314 = vadd.f32 0.0, %v3313
      %3315 = vmatmul.bf16.gmra.mxu0 %v3241
      %v3316 = vpop.f32.mrf.mxu0
      %v3317 = vadd.f32 0.0, %v3316
      %v3318 = vpop.f32.mrf.mxu0
      %v3319 = vadd.f32 0.0, %v3318
      %3320 = vmatmul.bf16.gmra.mxu0 %v3244
      %v3321 = vpop.f32.mrf.mxu0
      %v3322 = vadd.f32 0.0, %v3321
      %v3323 = vpop.f32.mrf.mxu0
      %v3324 = vadd.f32 0.0, %v3323
      %3325 = vmatmul.bf16.gmra.mxu0 %v3247
      %v3326 = vpop.f32.mrf.mxu0
      %v3327 = vadd.f32 0.0, %v3326
      %v3328 = vpop.f32.mrf.mxu0
      %v3329 = vadd.f32 0.0, %v3328
      %3330 = vmatmul.bf16.gmra.mxu0 %v3250
      %v3331 = vpop.f32.mrf.mxu0
      %v3332 = vadd.f32 0.0, %v3331
      %v3333 = vpop.f32.mrf.mxu0
      %v3334 = vadd.f32 0.0, %v3333
      %3335 = vmatmul.bf16.gmra.mxu0 %v3253
      %v3336 = vpop.f32.mrf.mxu0
      %v3337 = vadd.f32 0.0, %v3336
      %v3338 = vpop.f32.mrf.mxu0
      %v3339 = vadd.f32 0.0, %v3338
      %3340 = vmatmul.bf16.gmra.mxu0 %v3256
      %v3341 = vpop.f32.mrf.mxu0
      %v3342 = vadd.f32 0.0, %v3341
      %v3343 = vpop.f32.mrf.mxu0
      %v3344 = vadd.f32 0.0, %v3343
      %3345 = vmatmul.bf16.gmra.mxu0 %v3259
      %v3346 = vpop.f32.mrf.mxu0
      %v3347 = vadd.f32 0.0, %v3346
      %v3348 = vpop.f32.mrf.mxu0
      %v3349 = vadd.f32 0.0, %v3348
      %3350 = vmatmul.bf16.gmra.mxu0 %v3262
      %v3351 = vpop.f32.mrf.mxu0
      %v3352 = vadd.f32 0.0, %v3351
      %v3353 = vpop.f32.mrf.mxu0
      %v3354 = vadd.f32 0.0, %v3353
      %3355 = vdwg.mxu0
      %v3356 = vadd.f32 %v3020, %v3277
      %v3357 = vadd.f32 %v3021, %v3279
      %v3358 = vadd.f32 %v3022, %v3282
      %v3359 = vadd.f32 %v3023, %v3284
      %v3360 = vadd.f32 %v3024, %v3287
      %v3361 = vadd.f32 %v3025, %v3289
      %v3362 = vadd.f32 %v3026, %v3292
      %v3363 = vadd.f32 %v3027, %v3294
      %v3364 = vadd.f32 %v3028, %v3297
      %v3365 = vadd.f32 %v3029, %v3299
      %v3366 = vadd.f32 %v3030, %v3302
      %v3367 = vadd.f32 %v3031, %v3304
      %v3368 = vadd.f32 %v3032, %v3307
      %v3369 = vadd.f32 %v3033, %v3309
      %v3370 = vadd.f32 %v3034, %v3312
      %v3371 = vadd.f32 %v3035, %v3314
      %v3372 = vadd.f32 %v3036, %v3317
      %v3373 = vadd.f32 %v3037, %v3319
      %v3374 = vadd.f32 %v3038, %v3322
      %v3375 = vadd.f32 %v3039, %v3324
      %v3376 = vadd.f32 %v3040, %v3327
      %v3377 = vadd.f32 %v3041, %v3329
      %v3378 = vadd.f32 %v3042, %v3332
      %v3379 = vadd.f32 %v3043, %v3334
      %v3380 = vadd.f32 %v3044, %v3337
      %v3381 = vadd.f32 %v3045, %v3339
      %v3382 = vadd.f32 %v3046, %v3342
      %v3383 = vadd.f32 %v3047, %v3344
      %v3384 = vadd.f32 %v3048, %v3347
      %v3385 = vadd.f32 %v3049, %v3349
      %v3386 = vadd.f32 %v3050, %v3352
      %v3387 = vadd.f32 %v3051, %v3354
      %v3388 = vld [vmem:[%s206 + $0x10] sm:$0xf]
      %v3389 = vld [vmem:[%s206 + $0x14] sm:$0xf]
      %v3390 = vld [vmem:[%s206 + $0x18] sm:$0xf]
      %v3391 = vld [vmem:[%s206 + $0x1c] sm:$0xf]
      %v3392 = vld [vmem:[%s206 + $0x20] sm:$0xf]
      %v3393 = vld [vmem:[%s206 + $0x24] sm:$0xf]
      %v3394 = vld [vmem:[%s206 + $0x28] sm:$0xf]
      %v3395 = vld [vmem:[%s206 + $0x2c] sm:$0xf]
      %v3396 = vld [vmem:[%s206 + $0x30] sm:$0xf]
      %v3397 = vld [vmem:[%s206 + $0x34] sm:$0xf]
      %v3398 = vld [vmem:[%s206 + $0x38] sm:$0xf]
      %v3399 = vld [vmem:[%s206 + $0x3c] sm:$0xf]
      %v3400 = vld [vmem:[%s206 + $0x40] sm:$0xf]
      %v3401 = vld [vmem:[%s206 + $0x44] sm:$0xf]
      %v3402 = vld [vmem:[%s206 + $0x48] sm:$0xf]
      %v3403 = vld [vmem:[%s206 + $0x4c] sm:$0xf]
      %v3404 = vld [vmem:[%s206 + $0x50] sm:$0xf]
      %v3405 = vld [vmem:[%s206 + $0x54] sm:$0xf]
      %v3406 = vld [vmem:[%s206 + $0x58] sm:$0xf]
      %v3407 = vld [vmem:[%s206 + $0x5c] sm:$0xf]
      %v3408 = vld [vmem:[%s206 + $0x60] sm:$0xf]
      %v3409 = vld [vmem:[%s206 + $0x64] sm:$0xf]
      %v3410 = vld [vmem:[%s206 + $0x68] sm:$0xf]
      %v3411 = vld [vmem:[%s206 + $0x6c] sm:$0xf]
      %v3412 = vld [vmem:[%s206 + $0x70] sm:$0xf]
      %v3413 = vld [vmem:[%s206 + $0x74] sm:$0xf]
      %v3414 = vld [vmem:[%s206 + $0x78] sm:$0xf]
      %v3415 = vld [vmem:[%s206 + $0x7c] sm:$0xf]
      %v3416 = vld [vmem:[%s206 + $0x80] sm:$0xf]
      %v3417 = vld [vmem:[%s206 + $0x84] sm:$0xf]
      %v3418 = vld [vmem:[%s206 + $0x88] sm:$0xf]
      %v3419 = vld [vmem:[%s206 + $0x8c] sm:$0xf]
      %v3420 = vsel %vm802, %v3388, 0
      %v3421 = vsel %vm803, %v3389, 0
      %v3422 = vsel %vm804, %v3390, 0
      %v3423 = vsel %vm805, %v3391, 0
      %v3424 = vsel %vm806, %v3392, 0
      %v3425 = vsel %vm807, %v3393, 0
      %v3426 = vsel %vm808, %v3394, 0
      %v3427 = vsel %vm809, %v3395, 0
      %v3428 = vsel %vm810, %v3396, 0
      %v3429 = vsel %vm811, %v3397, 0
      %v3430 = vsel %vm812, %v3398, 0
      %v3431 = vsel %vm813, %v3399, 0
      %v3432 = vsel %vm814, %v3400, 0
      %v3433 = vsel %vm815, %v3401, 0
      %v3434 = vsel %vm816, %v3402, 0
      %v3435 = vsel %vm817, %v3403, 0
      %v3436 = vsel %vm818, %v3404, 0
      %v3437 = vsel %vm819, %v3405, 0
      %v3438 = vsel %vm820, %v3406, 0
      %v3439 = vsel %vm821, %v3407, 0
      %v3440 = vsel %vm822, %v3408, 0
      %v3441 = vsel %vm823, %v3409, 0
      %v3442 = vsel %vm824, %v3410, 0
      %v3443 = vsel %vm825, %v3411, 0
      %v3444 = vsel %vm826, %v3412, 0
      %v3445 = vsel %vm827, %v3413, 0
      %v3446 = vsel %vm828, %v3414, 0
      %v3447 = vsel %vm829, %v3415, 0
      %v3448 = vsel %vm830, %v3416, 0
      %v3449 = vsel %vm831, %v3417, 0
      %v3450 = vsel %vm832, %v3418, 0
      %v3451 = vsel %vm833, %v3419, 0
      %v3452 = vld [vmem:[%s210 + $0x24] sm:$0x8]
      %v3453 = vld [vmem:[%s210 + $0x28] sm:$0xf]
      %v3454 = vld [vmem:[%s210 + $0x2c] sm:$0x3]
      %v3487 = vunpack.c.l.b16 %v3420
      %v3488 = vunpack.c.l.b16 %v3421
      %v3489 = vunpack.c.l.b16 %v3422
      %v3490 = vunpack.c.l.b16 %v3423
      %v3491 = vunpack.c.l.b16 %v3424
      %v3492 = vunpack.c.l.b16 %v3425
      %v3493 = vunpack.c.l.b16 %v3426
      %v3494 = vunpack.c.l.b16 %v3427
      %v3495 = vunpack.c.l.b16 %v3428
      %v3496 = vunpack.c.l.b16 %v3429
      %v3497 = vunpack.c.l.b16 %v3430
      %v3498 = vunpack.c.l.b16 %v3431
      %v3499 = vunpack.c.l.b16 %v3432
      %v3500 = vunpack.c.l.b16 %v3433
      %v3501 = vunpack.c.l.b16 %v3434
      %v3502 = vunpack.c.l.b16 %v3435
      %v3503 = vunpack.c.l.b16 %v3436
      %v3504 = vunpack.c.l.b16 %v3437
      %v3505 = vunpack.c.l.b16 %v3438
      %v3506 = vunpack.c.l.b16 %v3439
      %v3507 = vunpack.c.l.b16 %v3440
      %v3508 = vunpack.c.l.b16 %v3441
      %v3509 = vunpack.c.l.b16 %v3442
      %v3510 = vunpack.c.l.b16 %v3443
      %v3511 = vunpack.c.l.b16 %v3444
      %v3512 = vunpack.c.l.b16 %v3445
      %v3513 = vunpack.c.l.b16 %v3446
      %v3514 = vunpack.c.l.b16 %v3447
      %v3515 = vunpack.c.l.b16 %v3448
      %v3516 = vunpack.c.l.b16 %v3449
      %v3517 = vunpack.c.l.b16 %v3450
      %v3518 = vunpack.c.l.b16 %v3451
      %v3519 = vpack.c.b16 %v3488, %v3487
      %v3520 = vpack.c.b16 %v3490, %v3489
      %v3521 = vpack.c.b16 %v3492, %v3491
      %v3522 = vpack.c.b16 %v3494, %v3493
      %v3523 = vpack.c.b16 %v3496, %v3495
      %v3524 = vpack.c.b16 %v3498, %v3497
      %v3525 = vpack.c.b16 %v3500, %v3499
      %v3526 = vpack.c.b16 %v3502, %v3501
      %v3527 = vpack.c.b16 %v3504, %v3503
      %v3528 = vpack.c.b16 %v3506, %v3505
      %v3529 = vpack.c.b16 %v3508, %v3507
      %v3530 = vpack.c.b16 %v3510, %v3509
      %v3531 = vpack.c.b16 %v3512, %v3511
      %v3532 = vpack.c.b16 %v3514, %v3513
      %v3533 = vpack.c.b16 %v3516, %v3515
      %v3534 = vpack.c.b16 %v3518, %v3517
      %v3538 = vunpack.c.l.b16 %v3452
      %v3539 = vunpack.c.l.b16 %v3453
      %v3540 = vunpack.c.l.b16 %v3454
      %v3541 = vpack.c.b16 %v3539, %v3538
      %v3542 = vpack.c.b16 %v3540, %v3540
      %vm3543 = vcmask 1044480
      %v3544 = vrot.slane %v3541, 3
      %v3545 = vrot.slane %v3542, 3
      %v3546 = vsel %vm3543, %v3544, %v3545
      %v3548 = vsel %vm1114, %v3519, 0
      %v3551 = vsel %vm1114, %v3520, 0
      %v3554 = vsel %vm1114, %v3521, 0
      %v3557 = vsel %vm1114, %v3522, 0
      %v3560 = vsel %vm1114, %v3523, 0
      %v3563 = vsel %vm1114, %v3524, 0
      %v3566 = vsel %vm1114, %v3525, 0
      %v3569 = vsel %vm1114, %v3526, 0
      %v3572 = vsel %vm1114, %v3527, 0
      %v3575 = vsel %vm1114, %v3528, 0
      %v3578 = vsel %vm1114, %v3529, 0
      %v3581 = vsel %vm1114, %v3530, 0
      %v3584 = vsel %vm1114, %v3531, 0
      %v3587 = vsel %vm1114, %v3532, 0
      %v3590 = vsel %vm1114, %v3533, 0
      %v3593 = vsel %vm1114, %v3534, 0
      %v3596 = vand.u32 %v3546, %v1166
      %3598 = vmatpush.bf16.msra.mxu0 0
      %3599 = vmatpush.bf16.msra.mxu0 0
      %3600 = vmatpush.bf16.msra.mxu0 0
      %3601 = vmatpush.bf16.msra.mxu0 0
      %3602 = vmatpush.bf16.msra.mxu0 0
      %3603 = vmatpush.bf16.msra.mxu0 0
      %3604 = vmatpush.bf16.msra.mxu0 0
      %3605 = vmatpush.bf16.msra.mxu0 %v3596
      %3606 = vmatmul.bf16.gmra.mxu0 %v3548
      %v3607 = vpop.f32.mrf.mxu0
      %v3608 = vadd.f32 0.0, %v3607
      %v3609 = vpop.f32.mrf.mxu0
      %v3610 = vadd.f32 0.0, %v3609
      %3611 = vmatmul.bf16.gmra.mxu0 %v3551
      %v3612 = vpop.f32.mrf.mxu0
      %v3613 = vadd.f32 0.0, %v3612
      %v3614 = vpop.f32.mrf.mxu0
      %v3615 = vadd.f32 0.0, %v3614
      %3616 = vmatmul.bf16.gmra.mxu0 %v3554
      %v3617 = vpop.f32.mrf.mxu0
      %v3618 = vadd.f32 0.0, %v3617
      %v3619 = vpop.f32.mrf.mxu0
      %v3620 = vadd.f32 0.0, %v3619
      %3621 = vmatmul.bf16.gmra.mxu0 %v3557
      %v3622 = vpop.f32.mrf.mxu0
      %v3623 = vadd.f32 0.0, %v3622
      %v3624 = vpop.f32.mrf.mxu0
      %v3625 = vadd.f32 0.0, %v3624
      %3626 = vmatmul.bf16.gmra.mxu0 %v3560
      %v3627 = vpop.f32.mrf.mxu0
      %v3628 = vadd.f32 0.0, %v3627
      %v3629 = vpop.f32.mrf.mxu0
      %v3630 = vadd.f32 0.0, %v3629
      %3631 = vmatmul.bf16.gmra.mxu0 %v3563
      %v3632 = vpop.f32.mrf.mxu0
      %v3633 = vadd.f32 0.0, %v3632
      %v3634 = vpop.f32.mrf.mxu0
      %v3635 = vadd.f32 0.0, %v3634
      %3636 = vmatmul.bf16.gmra.mxu0 %v3566
      %v3637 = vpop.f32.mrf.mxu0
      %v3638 = vadd.f32 0.0, %v3637
      %v3639 = vpop.f32.mrf.mxu0
      %v3640 = vadd.f32 0.0, %v3639
      %3641 = vmatmul.bf16.gmra.mxu0 %v3569
      %v3642 = vpop.f32.mrf.mxu0
      %v3643 = vadd.f32 0.0, %v3642
      %v3644 = vpop.f32.mrf.mxu0
      %v3645 = vadd.f32 0.0, %v3644
      %3646 = vmatmul.bf16.gmra.mxu0 %v3572
      %v3647 = vpop.f32.mrf.mxu0
      %v3648 = vadd.f32 0.0, %v3647
      %v3649 = vpop.f32.mrf.mxu0
      %v3650 = vadd.f32 0.0, %v3649
      %3651 = vmatmul.bf16.gmra.mxu0 %v3575
      %v3652 = vpop.f32.mrf.mxu0
      %v3653 = vadd.f32 0.0, %v3652
      %v3654 = vpop.f32.mrf.mxu0
      %v3655 = vadd.f32 0.0, %v3654
      %3656 = vmatmul.bf16.gmra.mxu0 %v3578
      %v3657 = vpop.f32.mrf.mxu0
      %v3658 = vadd.f32 0.0, %v3657
      %v3659 = vpop.f32.mrf.mxu0
      %v3660 = vadd.f32 0.0, %v3659
      %3661 = vmatmul.bf16.gmra.mxu0 %v3581
      %v3662 = vpop.f32.mrf.mxu0
      %v3663 = vadd.f32 0.0, %v3662
      %v3664 = vpop.f32.mrf.mxu0
      %v3665 = vadd.f32 0.0, %v3664
      %3666 = vmatmul.bf16.gmra.mxu0 %v3584
      %v3667 = vpop.f32.mrf.mxu0
      %v3668 = vadd.f32 0.0, %v3667
      %v3669 = vpop.f32.mrf.mxu0
      %v3670 = vadd.f32 0.0, %v3669
      %3671 = vmatmul.bf16.gmra.mxu0 %v3587
      %v3672 = vpop.f32.mrf.mxu0
      %v3673 = vadd.f32 0.0, %v3672
      %v3674 = vpop.f32.mrf.mxu0
      %v3675 = vadd.f32 0.0, %v3674
      %3676 = vmatmul.bf16.gmra.mxu0 %v3590
      %v3677 = vpop.f32.mrf.mxu0
      %v3678 = vadd.f32 0.0, %v3677
      %v3679 = vpop.f32.mrf.mxu0
      %v3680 = vadd.f32 0.0, %v3679
      %3681 = vmatmul.bf16.gmra.mxu0 %v3593
      %v3682 = vpop.f32.mrf.mxu0
      %v3683 = vadd.f32 0.0, %v3682
      %v3684 = vpop.f32.mrf.mxu0
      %v3685 = vadd.f32 0.0, %v3684
      %3686 = vdwg.mxu0
      %v3687 = vadd.f32 %v3356, %v3608
      %v3688 = vadd.f32 %v3357, %v3610
      %v3689 = vadd.f32 %v3358, %v3613
      %v3690 = vadd.f32 %v3359, %v3615
      %v3691 = vadd.f32 %v3360, %v3618
      %v3692 = vadd.f32 %v3361, %v3620
      %v3693 = vadd.f32 %v3362, %v3623
      %v3694 = vadd.f32 %v3363, %v3625
      %v3695 = vadd.f32 %v3364, %v3628
      %v3696 = vadd.f32 %v3365, %v3630
      %v3697 = vadd.f32 %v3366, %v3633
      %v3698 = vadd.f32 %v3367, %v3635
      %v3699 = vadd.f32 %v3368, %v3638
      %v3700 = vadd.f32 %v3369, %v3640
      %v3701 = vadd.f32 %v3370, %v3643
      %v3702 = vadd.f32 %v3371, %v3645
      %v3703 = vadd.f32 %v3372, %v3648
      %v3704 = vadd.f32 %v3373, %v3650
      %v3705 = vadd.f32 %v3374, %v3653
      %v3706 = vadd.f32 %v3375, %v3655
      %v3707 = vadd.f32 %v3376, %v3658
      %v3708 = vadd.f32 %v3377, %v3660
      %v3709 = vadd.f32 %v3378, %v3663
      %v3710 = vadd.f32 %v3379, %v3665
      %v3711 = vadd.f32 %v3380, %v3668
      %v3712 = vadd.f32 %v3381, %v3670
      %v3713 = vadd.f32 %v3382, %v3673
      %v3714 = vadd.f32 %v3383, %v3675
      %v3715 = vadd.f32 %v3384, %v3678
      %v3716 = vadd.f32 %v3385, %v3680
      %v3717 = vadd.f32 %v3386, %v3683
      %v3718 = vadd.f32 %v3387, %v3685
      %v3719 = vld [vmem:[%s206 + $0x10] sm:$0xf]
      %v3720 = vld [vmem:[%s206 + $0x14] sm:$0xf]
      %v3721 = vld [vmem:[%s206 + $0x18] sm:$0xf]
      %v3722 = vld [vmem:[%s206 + $0x1c] sm:$0xf]
      %v3723 = vld [vmem:[%s206 + $0x20] sm:$0xf]
      %v3724 = vld [vmem:[%s206 + $0x24] sm:$0xf]
      %v3725 = vld [vmem:[%s206 + $0x28] sm:$0xf]
      %v3726 = vld [vmem:[%s206 + $0x2c] sm:$0xf]
      %v3727 = vld [vmem:[%s206 + $0x30] sm:$0xf]
      %v3728 = vld [vmem:[%s206 + $0x34] sm:$0xf]
      %v3729 = vld [vmem:[%s206 + $0x38] sm:$0xf]
      %v3730 = vld [vmem:[%s206 + $0x3c] sm:$0xf]
      %v3731 = vld [vmem:[%s206 + $0x40] sm:$0xf]
      %v3732 = vld [vmem:[%s206 + $0x44] sm:$0xf]
      %v3733 = vld [vmem:[%s206 + $0x48] sm:$0xf]
      %v3734 = vld [vmem:[%s206 + $0x4c] sm:$0xf]
      %v3735 = vld [vmem:[%s206 + $0x50] sm:$0xf]
      %v3736 = vld [vmem:[%s206 + $0x54] sm:$0xf]
      %v3737 = vld [vmem:[%s206 + $0x58] sm:$0xf]
      %v3738 = vld [vmem:[%s206 + $0x5c] sm:$0xf]
      %v3739 = vld [vmem:[%s206 + $0x60] sm:$0xf]
      %v3740 = vld [vmem:[%s206 + $0x64] sm:$0xf]
      %v3741 = vld [vmem:[%s206 + $0x68] sm:$0xf]
      %v3742 = vld [vmem:[%s206 + $0x6c] sm:$0xf]
      %v3743 = vld [vmem:[%s206 + $0x70] sm:$0xf]
      %v3744 = vld [vmem:[%s206 + $0x74] sm:$0xf]
      %v3745 = vld [vmem:[%s206 + $0x78] sm:$0xf]
      %v3746 = vld [vmem:[%s206 + $0x7c] sm:$0xf]
      %v3747 = vld [vmem:[%s206 + $0x80] sm:$0xf]
      %v3748 = vld [vmem:[%s206 + $0x84] sm:$0xf]
      %v3749 = vld [vmem:[%s206 + $0x88] sm:$0xf]
      %v3750 = vld [vmem:[%s206 + $0x8c] sm:$0xf]
      %v3751 = vld [vmem:[%s206 + $0x90] sm:$0x1]
      %v3752 = vld [vmem:[%s210 + $0x2c] sm:$0xe]
      %v3753 = vld [vmem:[%s210 + $0x30] sm:$0xf]
      %v3787 = vunpack.c.l.b16 %v3719
      %v3788 = vunpack.c.l.b16 %v3720
      %v3789 = vunpack.c.l.b16 %v3721
      %v3790 = vunpack.c.l.b16 %v3722
      %v3791 = vunpack.c.l.b16 %v3723
      %v3792 = vunpack.c.l.b16 %v3724
      %v3793 = vunpack.c.l.b16 %v3725
      %v3794 = vunpack.c.l.b16 %v3726
      %v3795 = vunpack.c.l.b16 %v3727
      %v3796 = vunpack.c.l.b16 %v3728
      %v3797 = vunpack.c.l.b16 %v3729
      %v3798 = vunpack.c.l.b16 %v3730
      %v3799 = vunpack.c.l.b16 %v3731
      %v3800 = vunpack.c.l.b16 %v3732
      %v3801 = vunpack.c.l.b16 %v3733
      %v3802 = vunpack.c.l.b16 %v3734
      %v3803 = vunpack.c.l.b16 %v3735
      %v3804 = vunpack.c.l.b16 %v3736
      %v3805 = vunpack.c.l.b16 %v3737
      %v3806 = vunpack.c.l.b16 %v3738
      %v3807 = vunpack.c.l.b16 %v3739
      %v3808 = vunpack.c.l.b16 %v3740
      %v3809 = vunpack.c.l.b16 %v3741
      %v3810 = vunpack.c.l.b16 %v3742
      %v3811 = vunpack.c.l.b16 %v3743
      %v3812 = vunpack.c.l.b16 %v3744
      %v3813 = vunpack.c.l.b16 %v3745
      %v3814 = vunpack.c.l.b16 %v3746
      %v3815 = vunpack.c.l.b16 %v3747
      %v3816 = vunpack.c.l.b16 %v3748
      %v3817 = vunpack.c.l.b16 %v3749
      %v3818 = vunpack.c.l.b16 %v3750
      %v3819 = vunpack.c.l.b16 %v3751
      %v3820 = vpack.c.b16 %v3788, %v3787
      %v3821 = vpack.c.b16 %v3790, %v3789
      %v3822 = vpack.c.b16 %v3792, %v3791
      %v3823 = vpack.c.b16 %v3794, %v3793
      %v3824 = vpack.c.b16 %v3796, %v3795
      %v3825 = vpack.c.b16 %v3798, %v3797
      %v3826 = vpack.c.b16 %v3800, %v3799
      %v3827 = vpack.c.b16 %v3802, %v3801
      %v3828 = vpack.c.b16 %v3804, %v3803
      %v3829 = vpack.c.b16 %v3806, %v3805
      %v3830 = vpack.c.b16 %v3808, %v3807
      %v3831 = vpack.c.b16 %v3810, %v3809
      %v3832 = vpack.c.b16 %v3812, %v3811
      %v3833 = vpack.c.b16 %v3814, %v3813
      %v3834 = vpack.c.b16 %v3816, %v3815
      %v3835 = vpack.c.b16 %v3818, %v3817
      %v3836 = vpack.c.b16 %v3819, %v3819
      %v3838 = vshrl.u32 %v3820, 16
      %v3840 = vshll.u32 %v3820, 16
      %v3842 = vrot.slane %v3840, 1
      %v3843 = vor.u32 %v3838, %v3842
      %v3845 = vshll.u32 %v3821, 16
      %v3847 = vrot.slane %v3845, 1
      %v3848 = vsel %vm955, %v3843, %v3847
      %v3849 = vshrl.u32 %v3821, 16
      %v3851 = vor.u32 %v3849, %v3847
      %v3853 = vshll.u32 %v3822, 16
      %v3855 = vrot.slane %v3853, 1
      %v3856 = vsel %vm955, %v3851, %v3855
      %v3857 = vshrl.u32 %v3822, 16
      %v3859 = vor.u32 %v3857, %v3855
      %v3861 = vshll.u32 %v3823, 16
      %v3863 = vrot.slane %v3861, 1
      %v3864 = vsel %vm955, %v3859, %v3863
      %v3865 = vshrl.u32 %v3823, 16
      %v3867 = vor.u32 %v3865, %v3863
      %v3869 = vshll.u32 %v3824, 16
      %v3871 = vrot.slane %v3869, 1
      %v3872 = vsel %vm955, %v3867, %v3871
      %v3873 = vshrl.u32 %v3824, 16
      %v3875 = vor.u32 %v3873, %v3871
      %v3877 = vshll.u32 %v3825, 16
      %v3879 = vrot.slane %v3877, 1
      %v3880 = vsel %vm955, %v3875, %v3879
      %v3881 = vshrl.u32 %v3825, 16
      %v3883 = vor.u32 %v3881, %v3879
      %v3885 = vshll.u32 %v3826, 16
      %v3887 = vrot.slane %v3885, 1
      %v3888 = vsel %vm955, %v3883, %v3887
      %v3889 = vshrl.u32 %v3826, 16
      %v3891 = vor.u32 %v3889, %v3887
      %v3893 = vshll.u32 %v3827, 16
      %v3895 = vrot.slane %v3893, 1
      %v3896 = vsel %vm955, %v3891, %v3895
      %v3897 = vshrl.u32 %v3827, 16
      %v3899 = vor.u32 %v3897, %v3895
      %v3901 = vshll.u32 %v3828, 16
      %v3903 = vrot.slane %v3901, 1
      %v3904 = vsel %vm955, %v3899, %v3903
      %v3905 = vshrl.u32 %v3828, 16
      %v3907 = vor.u32 %v3905, %v3903
      %v3909 = vshll.u32 %v3829, 16
      %v3911 = vrot.slane %v3909, 1
      %v3912 = vsel %vm955, %v3907, %v3911
      %v3913 = vshrl.u32 %v3829, 16
      %v3915 = vor.u32 %v3913, %v3911
      %v3917 = vshll.u32 %v3830, 16
      %v3919 = vrot.slane %v3917, 1
      %v3920 = vsel %vm955, %v3915, %v3919
      %v3921 = vshrl.u32 %v3830, 16
      %v3923 = vor.u32 %v3921, %v3919
      %v3925 = vshll.u32 %v3831, 16
      %v3927 = vrot.slane %v3925, 1
      %v3928 = vsel %vm955, %v3923, %v3927
      %v3929 = vshrl.u32 %v3831, 16
      %v3931 = vor.u32 %v3929, %v3927
      %v3933 = vshll.u32 %v3832, 16
      %v3935 = vrot.slane %v3933, 1
      %v3936 = vsel %vm955, %v3931, %v3935
      %v3937 = vshrl.u32 %v3832, 16
      %v3939 = vor.u32 %v3937, %v3935
      %v3941 = vshll.u32 %v3833, 16
      %v3943 = vrot.slane %v3941, 1
      %v3944 = vsel %vm955, %v3939, %v3943
      %v3945 = vshrl.u32 %v3833, 16
      %v3947 = vor.u32 %v3945, %v3943
      %v3949 = vshll.u32 %v3834, 16
      %v3951 = vrot.slane %v3949, 1
      %v3952 = vsel %vm955, %v3947, %v3951
      %v3953 = vshrl.u32 %v3834, 16
      %v3955 = vor.u32 %v3953, %v3951
      %v3957 = vshll.u32 %v3835, 16
      %v3959 = vrot.slane %v3957, 1
      %v3960 = vsel %vm955, %v3955, %v3959
      %v3961 = vshrl.u32 %v3835, 16
      %v3963 = vor.u32 %v3961, %v3959
      %v3965 = vshll.u32 %v3836, 16
      %v3967 = vrot.slane %v3965, 1
      %v3968 = vsel %vm955, %v3963, %v3967
      %v3971 = vunpack.c.l.b16 %v3752
      %v3972 = vunpack.c.l.b16 %v3753
      %v3973 = vpack.c.b16 %v3972, %v3971
      %v3975 = vshrl.u32 %v3973, 16
      %v3977 = vrot.slane %v3975, 1
      %v3978 = vshll.u32 %v3973, 16
      %v3980 = vrot.slane %v3978, 2
      %v3981 = vor.u32 %v3977, %v3980
      %v3983 = vsel %vm1114, %v3848, 0
      %v3986 = vsel %vm1114, %v3856, 0
      %v3989 = vsel %vm1114, %v3864, 0
      %v3992 = vsel %vm1114, %v3872, 0
      %v3995 = vsel %vm1114, %v3880, 0
      %v3998 = vsel %vm1114, %v3888, 0
      %v4001 = vsel %vm1114, %v3896, 0
      %v4004 = vsel %vm1114, %v3904, 0
      %v4007 = vsel %vm1114, %v3912, 0
      %v4010 = vsel %vm1114, %v3920, 0
      %v4013 = vsel %vm1114, %v3928, 0
      %v4016 = vsel %vm1114, %v3936, 0
      %v4019 = vsel %vm1114, %v3944, 0
      %v4022 = vsel %vm1114, %v3952, 0
      %v4025 = vsel %vm1114, %v3960, 0
      %v4028 = vsel %vm1114, %v3968, 0
      %v4031 = vand.u32 %v3981, %v1166
      %4033 = vmatpush.bf16.msra.mxu0 0
      %4034 = vmatpush.bf16.msra.mxu0 0
      %4035 = vmatpush.bf16.msra.mxu0 0
      %4036 = vmatpush.bf16.msra.mxu0 0
      %4037 = vmatpush.bf16.msra.mxu0 0
      %4038 = vmatpush.bf16.msra.mxu0 0
      %4039 = vmatpush.bf16.msra.mxu0 0
      %4040 = vmatpush.bf16.msra.mxu0 %v4031
      %4041 = vmatmul.bf16.gmra.mxu0 %v3983
      %v4042 = vpop.f32.mrf.mxu0
      %v4043 = vadd.f32 0.0, %v4042
      %v4044 = vpop.f32.mrf.mxu0
      %v4045 = vadd.f32 0.0, %v4044
      %4046 = vmatmul.bf16.gmra.mxu0 %v3986
      %v4047 = vpop.f32.mrf.mxu0
      %v4048 = vadd.f32 0.0, %v4047
      %v4049 = vpop.f32.mrf.mxu0
      %v4050 = vadd.f32 0.0, %v4049
      %4051 = vmatmul.bf16.gmra.mxu0 %v3989
      %v4052 = vpop.f32.mrf.mxu0
      %v4053 = vadd.f32 0.0, %v4052
      %v4054 = vpop.f32.mrf.mxu0
      %v4055 = vadd.f32 0.0, %v4054
      %4056 = vmatmul.bf16.gmra.mxu0 %v3992
      %v4057 = vpop.f32.mrf.mxu0
      %v4058 = vadd.f32 0.0, %v4057
      %v4059 = vpop.f32.mrf.mxu0
      %v4060 = vadd.f32 0.0, %v4059
      %4061 = vmatmul.bf16.gmra.mxu0 %v3995
      %v4062 = vpop.f32.mrf.mxu0
      %v4063 = vadd.f32 0.0, %v4062
      %v4064 = vpop.f32.mrf.mxu0
      %v4065 = vadd.f32 0.0, %v4064
      %4066 = vmatmul.bf16.gmra.mxu0 %v3998
      %v4067 = vpop.f32.mrf.mxu0
      %v4068 = vadd.f32 0.0, %v4067
      %v4069 = vpop.f32.mrf.mxu0
      %v4070 = vadd.f32 0.0, %v4069
      %4071 = vmatmul.bf16.gmra.mxu0 %v4001
      %v4072 = vpop.f32.mrf.mxu0
      %v4073 = vadd.f32 0.0, %v4072
      %v4074 = vpop.f32.mrf.mxu0
      %v4075 = vadd.f32 0.0, %v4074
      %4076 = vmatmul.bf16.gmra.mxu0 %v4004
      %v4077 = vpop.f32.mrf.mxu0
      %v4078 = vadd.f32 0.0, %v4077
      %v4079 = vpop.f32.mrf.mxu0
      %v4080 = vadd.f32 0.0, %v4079
      %4081 = vmatmul.bf16.gmra.mxu0 %v4007
      %v4082 = vpop.f32.mrf.mxu0
      %v4083 = vadd.f32 0.0, %v4082
      %v4084 = vpop.f32.mrf.mxu0
      %v4085 = vadd.f32 0.0, %v4084
      %4086 = vmatmul.bf16.gmra.mxu0 %v4010
      %v4087 = vpop.f32.mrf.mxu0
      %v4088 = vadd.f32 0.0, %v4087
      %v4089 = vpop.f32.mrf.mxu0
      %v4090 = vadd.f32 0.0, %v4089
      %4091 = vmatmul.bf16.gmra.mxu0 %v4013
      %v4092 = vpop.f32.mrf.mxu0
      %v4093 = vadd.f32 0.0, %v4092
      %v4094 = vpop.f32.mrf.mxu0
      %v4095 = vadd.f32 0.0, %v4094
      %4096 = vmatmul.bf16.gmra.mxu0 %v4016
      %v4097 = vpop.f32.mrf.mxu0
      %v4098 = vadd.f32 0.0, %v4097
      %v4099 = vpop.f32.mrf.mxu0
      %v4100 = vadd.f32 0.0, %v4099
      %4101 = vmatmul.bf16.gmra.mxu0 %v4019
      %v4102 = vpop.f32.mrf.mxu0
      %v4103 = vadd.f32 0.0, %v4102
      %v4104 = vpop.f32.mrf.mxu0
      %v4105 = vadd.f32 0.0, %v4104
      %4106 = vmatmul.bf16.gmra.mxu0 %v4022
      %v4107 = vpop.f32.mrf.mxu0
      %v4108 = vadd.f32 0.0, %v4107
      %v4109 = vpop.f32.mrf.mxu0
      %v4110 = vadd.f32 0.0, %v4109
      %4111 = vmatmul.bf16.gmra.mxu0 %v4025
      %v4112 = vpop.f32.mrf.mxu0
      %v4113 = vadd.f32 0.0, %v4112
      %v4114 = vpop.f32.mrf.mxu0
      %v4115 = vadd.f32 0.0, %v4114
      %4116 = vmatmul.bf16.gmra.mxu0 %v4028
      %v4117 = vpop.f32.mrf.mxu0
      %v4118 = vadd.f32 0.0, %v4117
      %v4119 = vpop.f32.mrf.mxu0
      %v4120 = vadd.f32 0.0, %v4119
      %4121 = vdwg.mxu0
      %v4122 = vadd.f32 %v3687, %v4043
      %v4123 = vadd.f32 %v3688, %v4045
      %v4124 = vadd.f32 %v3689, %v4048
      %v4125 = vadd.f32 %v3690, %v4050
      %v4126 = vadd.f32 %v3691, %v4053
      %v4127 = vadd.f32 %v3692, %v4055
      %v4128 = vadd.f32 %v3693, %v4058
      %v4129 = vadd.f32 %v3694, %v4060
      %v4130 = vadd.f32 %v3695, %v4063
      %v4131 = vadd.f32 %v3696, %v4065
      %v4132 = vadd.f32 %v3697, %v4068
      %v4133 = vadd.f32 %v3698, %v4070
      %v4134 = vadd.f32 %v3699, %v4073
      %v4135 = vadd.f32 %v3700, %v4075
      %v4136 = vadd.f32 %v3701, %v4078
      %v4137 = vadd.f32 %v3702, %v4080
      %v4138 = vadd.f32 %v3703, %v4083
      %v4139 = vadd.f32 %v3704, %v4085
      %v4140 = vadd.f32 %v3705, %v4088
      %v4141 = vadd.f32 %v3706, %v4090
      %v4142 = vadd.f32 %v3707, %v4093
      %v4143 = vadd.f32 %v3708, %v4095
      %v4144 = vadd.f32 %v3709, %v4098
      %v4145 = vadd.f32 %v3710, %v4100
      %v4146 = vadd.f32 %v3711, %v4103
      %v4147 = vadd.f32 %v3712, %v4105
      %v4148 = vadd.f32 %v3713, %v4108
      %v4149 = vadd.f32 %v3714, %v4110
      %v4150 = vadd.f32 %v3715, %v4113
      %v4151 = vadd.f32 %v3716, %v4115
      %v4152 = vadd.f32 %v3717, %v4118
      %v4153 = vadd.f32 %v3718, %v4120
      %v4154 = vld [vmem:[%s206 + $0x10] sm:$0xe]
      %v4155 = vsel %vm1717, %v4154, 0
      %v4156 = vsel %vm1724, %v3720, 0
      %v4157 = vsel %vm1731, %v3721, 0
      %v4158 = vsel %vm1738, %v3722, 0
      %v4159 = vsel %vm1745, %v3723, 0
      %v4160 = vsel %vm1752, %v3724, 0
      %v4161 = vsel %vm1759, %v3725, 0
      %v4162 = vsel %vm1766, %v3726, 0
      %v4163 = vsel %vm1773, %v3727, 0
      %v4164 = vsel %vm1780, %v3728, 0
      %v4165 = vsel %vm1787, %v3729, 0
      %v4166 = vsel %vm1794, %v3730, 0
      %v4167 = vsel %vm1801, %v3731, 0
      %v4168 = vsel %vm1808, %v3732, 0
      %v4169 = vsel %vm1815, %v3733, 0
      %v4170 = vsel %vm1822, %v3734, 0
      %v4171 = vsel %vm1829, %v3735, 0
      %v4172 = vsel %vm1836, %v3736, 0
      %v4173 = vsel %vm1843, %v3737, 0
      %v4174 = vsel %vm1850, %v3738, 0
      %v4175 = vsel %vm1857, %v3739, 0
      %v4176 = vsel %vm1864, %v3740, 0
      %v4177 = vsel %vm1871, %v3741, 0
      %v4178 = vsel %vm1878, %v3742, 0
      %v4179 = vsel %vm1885, %v3743, 0
      %v4180 = vsel %vm1892, %v3744, 0
      %v4181 = vsel %vm1899, %v3745, 0
      %v4182 = vsel %vm1906, %v3746, 0
      %v4183 = vsel %vm1913, %v3747, 0
      %v4184 = vsel %vm1920, %v3748, 0
      %v4185 = vsel %vm1927, %v3749, 0
      %v4186 = vsel %vm1934, %v3750, 0
      %v4187 = vsel %vm1941, %v3751, 0
      %v4188 = vld [vmem:[%s210 + $0x34] sm:$0xf]
      %v4189 = vld [vmem:[%s210 + $0x38] sm:$0x7]
      %v4223 = vunpack.c.l.b16 %v4155
      %v4224 = vunpack.c.l.b16 %v4156
      %v4225 = vunpack.c.l.b16 %v4157
      %v4226 = vunpack.c.l.b16 %v4158
      %v4227 = vunpack.c.l.b16 %v4159
      %v4228 = vunpack.c.l.b16 %v4160
      %v4229 = vunpack.c.l.b16 %v4161
      %v4230 = vunpack.c.l.b16 %v4162
      %v4231 = vunpack.c.l.b16 %v4163
      %v4232 = vunpack.c.l.b16 %v4164
      %v4233 = vunpack.c.l.b16 %v4165
      %v4234 = vunpack.c.l.b16 %v4166
      %v4235 = vunpack.c.l.b16 %v4167
      %v4236 = vunpack.c.l.b16 %v4168
      %v4237 = vunpack.c.l.b16 %v4169
      %v4238 = vunpack.c.l.b16 %v4170
      %v4239 = vunpack.c.l.b16 %v4171
      %v4240 = vunpack.c.l.b16 %v4172
      %v4241 = vunpack.c.l.b16 %v4173
      %v4242 = vunpack.c.l.b16 %v4174
      %v4243 = vunpack.c.l.b16 %v4175
      %v4244 = vunpack.c.l.b16 %v4176
      %v4245 = vunpack.c.l.b16 %v4177
      %v4246 = vunpack.c.l.b16 %v4178
      %v4247 = vunpack.c.l.b16 %v4179
      %v4248 = vunpack.c.l.b16 %v4180
      %v4249 = vunpack.c.l.b16 %v4181
      %v4250 = vunpack.c.l.b16 %v4182
      %v4251 = vunpack.c.l.b16 %v4183
      %v4252 = vunpack.c.l.b16 %v4184
      %v4253 = vunpack.c.l.b16 %v4185
      %v4254 = vunpack.c.l.b16 %v4186
      %v4255 = vunpack.c.l.b16 %v4187
      %v4256 = vpack.c.b16 %v4224, %v4223
      %v4257 = vpack.c.b16 %v4226, %v4225
      %v4258 = vpack.c.b16 %v4228, %v4227
      %v4259 = vpack.c.b16 %v4230, %v4229
      %v4260 = vpack.c.b16 %v4232, %v4231
      %v4261 = vpack.c.b16 %v4234, %v4233
      %v4262 = vpack.c.b16 %v4236, %v4235
      %v4263 = vpack.c.b16 %v4238, %v4237
      %v4264 = vpack.c.b16 %v4240, %v4239
      %v4265 = vpack.c.b16 %v4242, %v4241
      %v4266 = vpack.c.b16 %v4244, %v4243
      %v4267 = vpack.c.b16 %v4246, %v4245
      %v4268 = vpack.c.b16 %v4248, %v4247
      %v4269 = vpack.c.b16 %v4250, %v4249
      %v4270 = vpack.c.b16 %v4252, %v4251
      %v4271 = vpack.c.b16 %v4254, %v4253
      %v4272 = vpack.c.b16 %v4255, %v4255
      %v4273 = vrot.slane %v4256, 1
      %v4274 = vrot.slane %v4257, 1
      %v4275 = vsel %vm2060, %v4273, %v4274
      %v4276 = vrot.slane %v4258, 1
      %v4277 = vsel %vm2060, %v4274, %v4276
      %v4278 = vrot.slane %v4259, 1
      %v4279 = vsel %vm2060, %v4276, %v4278
      %v4280 = vrot.slane %v4260, 1
      %v4281 = vsel %vm2060, %v4278, %v4280
      %v4282 = vrot.slane %v4261, 1
      %v4283 = vsel %vm2060, %v4280, %v4282
      %v4284 = vrot.slane %v4262, 1
      %v4285 = vsel %vm2060, %v4282, %v4284
      %v4286 = vrot.slane %v4263, 1
      %v4287 = vsel %vm2060, %v4284, %v4286
      %v4288 = vrot.slane %v4264, 1
      %v4289 = vsel %vm2060, %v4286, %v4288
      %v4290 = vrot.slane %v4265, 1
      %v4291 = vsel %vm2060, %v4288, %v4290
      %v4292 = vrot.slane %v4266, 1
      %v4293 = vsel %vm2060, %v4290, %v4292
      %v4294 = vrot.slane %v4267, 1
      %v4295 = vsel %vm2060, %v4292, %v4294
      %v4296 = vrot.slane %v4268, 1
      %v4297 = vsel %vm2060, %v4294, %v4296
      %v4298 = vrot.slane %v4269, 1
      %v4299 = vsel %vm2060, %v4296, %v4298
      %v4300 = vrot.slane %v4270, 1
      %v4301 = vsel %vm2060, %v4298, %v4300
      %v4302 = vrot.slane %v4271, 1
      %v4303 = vsel %vm2060, %v4300, %v4302
      %v4304 = vrot.slane %v4272, 1
      %v4305 = vsel %vm2060, %v4302, %v4304
      %v4308 = vunpack.c.l.b16 %v4188
      %v4309 = vunpack.c.l.b16 %v4189
      %v4310 = vpack.c.b16 %v4309, %v4308
      %v4312 = vsel %vm1114, %v4275, 0
      %v4315 = vsel %vm1114, %v4277, 0
      %v4318 = vsel %vm1114, %v4279, 0
      %v4321 = vsel %vm1114, %v4281, 0
      %v4324 = vsel %vm1114, %v4283, 0
      %v4327 = vsel %vm1114, %v4285, 0
      %v4330 = vsel %vm1114, %v4287, 0
      %v4333 = vsel %vm1114, %v4289, 0
      %v4336 = vsel %vm1114, %v4291, 0
      %v4339 = vsel %vm1114, %v4293, 0
      %v4342 = vsel %vm1114, %v4295, 0
      %v4345 = vsel %vm1114, %v4297, 0
      %v4348 = vsel %vm1114, %v4299, 0
      %v4351 = vsel %vm1114, %v4301, 0
      %v4354 = vsel %vm1114, %v4303, 0
      %v4357 = vsel %vm1114, %v4305, 0
      %v4360 = vand.u32 %v4310, %v1166
      %4362 = vmatpush.bf16.msra.mxu0 0
      %4363 = vmatpush.bf16.msra.mxu0 0
      %4364 = vmatpush.bf16.msra.mxu0 0
      %4365 = vmatpush.bf16.msra.mxu0 0
      %4366 = vmatpush.bf16.msra.mxu0 0
      %4367 = vmatpush.bf16.msra.mxu0 0
      %4368 = vmatpush.bf16.msra.mxu0 0
      %4369 = vmatpush.bf16.msra.mxu0 %v4360
      %4370 = vmatmul.bf16.gmra.mxu0 %v4312
      %v4371 = vpop.f32.mrf.mxu0
      %v4372 = vadd.f32 0.0, %v4371
      %v4373 = vpop.f32.mrf.mxu0
      %v4374 = vadd.f32 0.0, %v4373
      %4375 = vmatmul.bf16.gmra.mxu0 %v4315
      %v4376 = vpop.f32.mrf.mxu0
      %v4377 = vadd.f32 0.0, %v4376
      %v4378 = vpop.f32.mrf.mxu0
      %v4379 = vadd.f32 0.0, %v4378
      %4380 = vmatmul.bf16.gmra.mxu0 %v4318
      %v4381 = vpop.f32.mrf.mxu0
      %v4382 = vadd.f32 0.0, %v4381
      %v4383 = vpop.f32.mrf.mxu0
      %v4384 = vadd.f32 0.0, %v4383
      %4385 = vmatmul.bf16.gmra.mxu0 %v4321
      %v4386 = vpop.f32.mrf.mxu0
      %v4387 = vadd.f32 0.0, %v4386
      %v4388 = vpop.f32.mrf.mxu0
      %v4389 = vadd.f32 0.0, %v4388
      %4390 = vmatmul.bf16.gmra.mxu0 %v4324
      %v4391 = vpop.f32.mrf.mxu0
      %v4392 = vadd.f32 0.0, %v4391
      %v4393 = vpop.f32.mrf.mxu0
      %v4394 = vadd.f32 0.0, %v4393
      %4395 = vmatmul.bf16.gmra.mxu0 %v4327
      %v4396 = vpop.f32.mrf.mxu0
      %v4397 = vadd.f32 0.0, %v4396
      %v4398 = vpop.f32.mrf.mxu0
      %v4399 = vadd.f32 0.0, %v4398
      %4400 = vmatmul.bf16.gmra.mxu0 %v4330
      %v4401 = vpop.f32.mrf.mxu0
      %v4402 = vadd.f32 0.0, %v4401
      %v4403 = vpop.f32.mrf.mxu0
      %v4404 = vadd.f32 0.0, %v4403
      %4405 = vmatmul.bf16.gmra.mxu0 %v4333
      %v4406 = vpop.f32.mrf.mxu0
      %v4407 = vadd.f32 0.0, %v4406
      %v4408 = vpop.f32.mrf.mxu0
      %v4409 = vadd.f32 0.0, %v4408
      %4410 = vmatmul.bf16.gmra.mxu0 %v4336
      %v4411 = vpop.f32.mrf.mxu0
      %v4412 = vadd.f32 0.0, %v4411
      %v4413 = vpop.f32.mrf.mxu0
      %v4414 = vadd.f32 0.0, %v4413
      %4415 = vmatmul.bf16.gmra.mxu0 %v4339
      %v4416 = vpop.f32.mrf.mxu0
      %v4417 = vadd.f32 0.0, %v4416
      %v4418 = vpop.f32.mrf.mxu0
      %v4419 = vadd.f32 0.0, %v4418
      %4420 = vmatmul.bf16.gmra.mxu0 %v4342
      %v4421 = vpop.f32.mrf.mxu0
      %v4422 = vadd.f32 0.0, %v4421
      %v4423 = vpop.f32.mrf.mxu0
      %v4424 = vadd.f32 0.0, %v4423
      %4425 = vmatmul.bf16.gmra.mxu0 %v4345
      %v4426 = vpop.f32.mrf.mxu0
      %v4427 = vadd.f32 0.0, %v4426
      %v4428 = vpop.f32.mrf.mxu0
      %v4429 = vadd.f32 0.0, %v4428
      %4430 = vmatmul.bf16.gmra.mxu0 %v4348
      %v4431 = vpop.f32.mrf.mxu0
      %v4432 = vadd.f32 0.0, %v4431
      %v4433 = vpop.f32.mrf.mxu0
      %v4434 = vadd.f32 0.0, %v4433
      %4435 = vmatmul.bf16.gmra.mxu0 %v4351
      %v4436 = vpop.f32.mrf.mxu0
      %v4437 = vadd.f32 0.0, %v4436
      %v4438 = vpop.f32.mrf.mxu0
      %v4439 = vadd.f32 0.0, %v4438
      %4440 = vmatmul.bf16.gmra.mxu0 %v4354
      %v4441 = vpop.f32.mrf.mxu0
      %v4442 = vadd.f32 0.0, %v4441
      %v4443 = vpop.f32.mrf.mxu0
      %v4444 = vadd.f32 0.0, %v4443
      %4445 = vmatmul.bf16.gmra.mxu0 %v4357
      %v4446 = vpop.f32.mrf.mxu0
      %v4447 = vadd.f32 0.0, %v4446
      %v4448 = vpop.f32.mrf.mxu0
      %v4449 = vadd.f32 0.0, %v4448
      %4450 = vdwg.mxu0
      %v4451 = vadd.f32 %v4122, %v4372
      %v4452 = vadd.f32 %v4123, %v4374
      %v4453 = vadd.f32 %v4124, %v4377
      %v4454 = vadd.f32 %v4125, %v4379
      %v4455 = vadd.f32 %v4126, %v4382
      %v4456 = vadd.f32 %v4127, %v4384
      %v4457 = vadd.f32 %v4128, %v4387
      %v4458 = vadd.f32 %v4129, %v4389
      %v4459 = vadd.f32 %v4130, %v4392
      %v4460 = vadd.f32 %v4131, %v4394
      %v4461 = vadd.f32 %v4132, %v4397
      %v4462 = vadd.f32 %v4133, %v4399
      %v4463 = vadd.f32 %v4134, %v4402
      %v4464 = vadd.f32 %v4135, %v4404
      %v4465 = vadd.f32 %v4136, %v4407
      %v4466 = vadd.f32 %v4137, %v4409
      %v4467 = vadd.f32 %v4138, %v4412
      %v4468 = vadd.f32 %v4139, %v4414
      %v4469 = vadd.f32 %v4140, %v4417
      %v4470 = vadd.f32 %v4141, %v4419
      %v4471 = vadd.f32 %v4142, %v4422
      %v4472 = vadd.f32 %v4143, %v4424
      %v4473 = vadd.f32 %v4144, %v4427
      %v4474 = vadd.f32 %v4145, %v4429
      %v4475 = vadd.f32 %v4146, %v4432
      %v4476 = vadd.f32 %v4147, %v4434
      %v4477 = vadd.f32 %v4148, %v4437
      %v4478 = vadd.f32 %v4149, %v4439
      %v4479 = vadd.f32 %v4150, %v4442
      %v4480 = vadd.f32 %v4151, %v4444
      %v4481 = vadd.f32 %v4152, %v4447
      %v4482 = vadd.f32 %v4153, %v4449
      %v4483 = vld [vmem:[%s213] sm:$0x1]
      %v4485 = vperm.slane %v4483, 0
      %v4487 = vadd.f32 %v4451, %v4485
      %v4488 = vadd.f32 %v4452, %v4485
      %v4489 = vadd.f32 %v4453, %v4485
      %v4490 = vadd.f32 %v4454, %v4485
      %v4491 = vadd.f32 %v4455, %v4485
      %v4492 = vadd.f32 %v4456, %v4485
      %v4493 = vadd.f32 %v4457, %v4485
      %v4494 = vadd.f32 %v4458, %v4485
      %v4495 = vadd.f32 %v4459, %v4485
      %v4496 = vadd.f32 %v4460, %v4485
      %v4497 = vadd.f32 %v4461, %v4485
      %v4498 = vadd.f32 %v4462, %v4485
      %v4499 = vadd.f32 %v4463, %v4485
      %v4500 = vadd.f32 %v4464, %v4485
      %v4501 = vadd.f32 %v4465, %v4485
      %v4502 = vadd.f32 %v4466, %v4485
      %v4503 = vadd.f32 %v4467, %v4485
      %v4504 = vadd.f32 %v4468, %v4485
      %v4505 = vadd.f32 %v4469, %v4485
      %v4506 = vadd.f32 %v4470, %v4485
      %v4507 = vadd.f32 %v4471, %v4485
      %v4508 = vadd.f32 %v4472, %v4485
      %v4509 = vadd.f32 %v4473, %v4485
      %v4510 = vadd.f32 %v4474, %v4485
      %v4511 = vadd.f32 %v4475, %v4485
      %v4512 = vadd.f32 %v4476, %v4485
      %v4513 = vadd.f32 %v4477, %v4485
      %v4514 = vadd.f32 %v4478, %v4485
      %v4515 = vadd.f32 %v4479, %v4485
      %v4516 = vadd.f32 %v4480, %v4485
      %v4517 = vadd.f32 %v4481, %v4485
      %v4518 = vadd.f32 %v4482, %v4485
      %v4519 = vmax.f32 %v4487, 0.0
      %v4520 = vmax.f32 %v4488, 0.0
      %v4521 = vmax.f32 %v4489, 0.0
      %v4522 = vmax.f32 %v4490, 0.0
      %v4523 = vmax.f32 %v4491, 0.0
      %v4524 = vmax.f32 %v4492, 0.0
      %v4525 = vmax.f32 %v4493, 0.0
      %v4526 = vmax.f32 %v4494, 0.0
      %v4527 = vmax.f32 %v4495, 0.0
      %v4528 = vmax.f32 %v4496, 0.0
      %v4529 = vmax.f32 %v4497, 0.0
      %v4530 = vmax.f32 %v4498, 0.0
      %v4531 = vmax.f32 %v4499, 0.0
      %v4532 = vmax.f32 %v4500, 0.0
      %v4533 = vmax.f32 %v4501, 0.0
      %v4534 = vmax.f32 %v4502, 0.0
      %v4535 = vmax.f32 %v4503, 0.0
      %v4536 = vmax.f32 %v4504, 0.0
      %v4537 = vmax.f32 %v4505, 0.0
      %v4538 = vmax.f32 %v4506, 0.0
      %v4539 = vmax.f32 %v4507, 0.0
      %v4540 = vmax.f32 %v4508, 0.0
      %v4541 = vmax.f32 %v4509, 0.0
      %v4542 = vmax.f32 %v4510, 0.0
      %v4543 = vmax.f32 %v4511, 0.0
      %v4544 = vmax.f32 %v4512, 0.0
      %v4545 = vmax.f32 %v4513, 0.0
      %v4546 = vmax.f32 %v4514, 0.0
      %v4547 = vmax.f32 %v4515, 0.0
      %v4548 = vmax.f32 %v4516, 0.0
      %v4549 = vmax.f32 %v4517, 0.0
      %v4550 = vmax.f32 %v4518, 0.0
      %v4551 = vpack.c.bf16 %v4519, %v4519
      %v4552 = vpack.c.bf16 %v4520, %v4520
      %v4553 = vpack.c.bf16 %v4521, %v4521
      %v4554 = vpack.c.bf16 %v4522, %v4522
      %v4555 = vpack.c.bf16 %v4523, %v4523
      %v4556 = vpack.c.bf16 %v4524, %v4524
      %v4557 = vpack.c.bf16 %v4525, %v4525
      %v4558 = vpack.c.bf16 %v4526, %v4526
      %v4559 = vpack.c.bf16 %v4527, %v4527
      %v4560 = vpack.c.bf16 %v4528, %v4528
      %v4561 = vpack.c.bf16 %v4529, %v4529
      %v4562 = vpack.c.bf16 %v4530, %v4530
      %v4563 = vpack.c.bf16 %v4531, %v4531
      %v4564 = vpack.c.bf16 %v4532, %v4532
      %v4565 = vpack.c.bf16 %v4533, %v4533
      %v4566 = vpack.c.bf16 %v4534, %v4534
      %v4567 = vpack.c.bf16 %v4535, %v4535
      %v4568 = vpack.c.bf16 %v4536, %v4536
      %v4569 = vpack.c.bf16 %v4537, %v4537
      %v4570 = vpack.c.bf16 %v4538, %v4538
      %v4571 = vpack.c.bf16 %v4539, %v4539
      %v4572 = vpack.c.bf16 %v4540, %v4540
      %v4573 = vpack.c.bf16 %v4541, %v4541
      %v4574 = vpack.c.bf16 %v4542, %v4542
      %v4575 = vpack.c.bf16 %v4543, %v4543
      %v4576 = vpack.c.bf16 %v4544, %v4544
      %v4577 = vpack.c.bf16 %v4545, %v4545
      %v4578 = vpack.c.bf16 %v4546, %v4546
      %v4579 = vpack.c.bf16 %v4547, %v4547
      %v4580 = vpack.c.bf16 %v4548, %v4548
      %v4581 = vpack.c.bf16 %v4549, %v4549
      %v4582 = vpack.c.bf16 %v4550, %v4550
      %vm4583 = vcmask 257024
      %4584 = vst.msk [vmem:[%s221] sm:$0xf] %vm4583, %v4551
      %4585 = vst.msk [vmem:[%s221 + $0x4] sm:$0xf] %vm4583, %v4552
      %4586 = vst.msk [vmem:[%s221 + $0x8] sm:$0xf] %vm4583, %v4553
      %4587 = vst.msk [vmem:[%s221 + $0xc] sm:$0xf] %vm4583, %v4554
      %4588 = vst.msk [vmem:[%s221 + $0x10] sm:$0xf] %vm4583, %v4555
      %4589 = vst.msk [vmem:[%s221 + $0x14] sm:$0xf] %vm4583, %v4556
      %4590 = vst.msk [vmem:[%s221 + $0x18] sm:$0xf] %vm4583, %v4557
      %4591 = vst.msk [vmem:[%s221 + $0x1c] sm:$0xf] %vm4583, %v4558
      %4592 = vst.msk [vmem:[%s221 + $0x20] sm:$0xf] %vm4583, %v4559
      %4593 = vst.msk [vmem:[%s221 + $0x24] sm:$0xf] %vm4583, %v4560
      %4594 = vst.msk [vmem:[%s221 + $0x28] sm:$0xf] %vm4583, %v4561
      %4595 = vst.msk [vmem:[%s221 + $0x2c] sm:$0xf] %vm4583, %v4562
      %4596 = vst.msk [vmem:[%s221 + $0x30] sm:$0xf] %vm4583, %v4563
      %4597 = vst.msk [vmem:[%s221 + $0x34] sm:$0xf] %vm4583, %v4564
      %4598 = vst.msk [vmem:[%s221 + $0x38] sm:$0xf] %vm4583, %v4565
      %4599 = vst.msk [vmem:[%s221 + $0x3c] sm:$0xf] %vm4583, %v4566
      %4600 = vst.msk [vmem:[%s221 + $0x40] sm:$0xf] %vm4583, %v4567
      %4601 = vst.msk [vmem:[%s221 + $0x44] sm:$0xf] %vm4583, %v4568
      %4602 = vst.msk [vmem:[%s221 + $0x48] sm:$0xf] %vm4583, %v4569
      %4603 = vst.msk [vmem:[%s221 + $0x4c] sm:$0xf] %vm4583, %v4570
      %4604 = vst.msk [vmem:[%s221 + $0x50] sm:$0xf] %vm4583, %v4571
      %4605 = vst.msk [vmem:[%s221 + $0x54] sm:$0xf] %vm4583, %v4572
      %4606 = vst.msk [vmem:[%s221 + $0x58] sm:$0xf] %vm4583, %v4573
      %4607 = vst.msk [vmem:[%s221 + $0x5c] sm:$0xf] %vm4583, %v4574
      %4608 = vst.msk [vmem:[%s221 + $0x60] sm:$0xf] %vm4583, %v4575
      %4609 = vst.msk [vmem:[%s221 + $0x64] sm:$0xf] %vm4583, %v4576
      %4610 = vst.msk [vmem:[%s221 + $0x68] sm:$0xf] %vm4583, %v4577
      %4611 = vst.msk [vmem:[%s221 + $0x6c] sm:$0xf] %vm4583, %v4578
      %4612 = vst.msk [vmem:[%s221 + $0x70] sm:$0xf] %vm4583, %v4579
      %4613 = vst.msk [vmem:[%s221 + $0x74] sm:$0xf] %vm4583, %v4580
      %4614 = vst.msk [vmem:[%s221 + $0x78] sm:$0xf] %vm4583, %v4581
      %4615 = vst.msk [vmem:[%s221 + $0x7c] sm:$0xf] %vm4583, %v4582
      %p4616 = scmp.lt.s32.totalorder %s19, 3
      %s4617 = scalar_select %p4616, %s19, 3
      %p4618 = scmp.lt.s32.totalorder %s18, 0
      %s4619 = scalar_select %p4618, %s18, 0
      %s4620 = smul.addr %s4617, 32
      %s4621 = sadd.s32 %s4619, %s4620
      %s4622 = smul.addr %s4621, 4
      %s4623 = scalar_lea.vmem %s3, %s4622
      // Predicated region
      $region33: #{tpu_custom_call.1} parent=31 // pred_check
        %p4624 = pneg %p124
      $region34: #{tpu_custom_call.1} parent=31 // pred_check_branch
        %4626 = sbr.rel (%p4624) target = $region36
      $region35: #{tpu_custom_call.1} parent=31 // pred_region
        _
      $region36: #{tpu_custom_call.1} parent=31 // pred_fallthru
        _
    $region32: #{tpu_custom_call.1} parent=5 // pred_fallthru
      _
    %p4627 = scmp.le.s32.totalorder 2, %s9
    // Predicated region
    $region37: #{tpu_custom_call.1} parent=5 // pred_check
      %p4628 = pneg %p4627
    $region38: #{tpu_custom_call.1} parent=5 // pred_check_branch
      %4630 = sbr.rel (%p4628) target = $region40
    $region39: #{tpu_custom_call.1} parent=5 // pred_region
      %s4631 = ssub.s32 %s9, 2
      // Predicated region
      $region41: #{tpu_custom_call.1} parent=39 // pred_check
        %p4632 = pneg %p130
      $region42: #{tpu_custom_call.1} parent=39 // pred_check_branch
        %4634 = sbr.rel (%p4632) target = $region44
      $region43: #{tpu_custom_call.1} parent=39 // pred_region
        %p4635 = scmp.lt.s32.totalorder %s21, 3
        %s4636 = scalar_select %p4635, %s21, 3
        %p4637 = scmp.lt.s32.totalorder %s20, 0
        %s4638 = scalar_select %p4637, %s20, 0
        %s4639 = smul.addr %s4636, 32
        %s4640 = sadd.s32 %s4638, %s4639
        %s4641 = smul.addr %s4640, 4
        %s4642 = scalar_lea.vmem %s3, %s4641
      $region44: #{tpu_custom_call.1} parent=39 // pred_fallthru
        _
    $region40: #{tpu_custom_call.1} parent=5 // pred_fallthru
      _
  $region6: #{tpu_custom_call.1} parent=0 // loop_footer
    %s13 = sadd.s32 1, %s9
  $region7: #{tpu_custom_call.1} parent=0 // loop_footer_branch
    %8 = sbr.rel target = $region3
  $region8: #{tpu_custom_call.1} parent=0 // loop_exit
    _

</llo_original>
